<compile_context>
chip_gen: v6e
topology: v6e:2x2x1
jax: 0.10.0
libtpu: 0.0.40
codegen_flags: <defaults>
</compile_context>

<pallas_src>
import math
import numpy as np
import jax
import jax.numpy as jnp
from jax import lax
from jax.experimental import pallas as pl
from jax.experimental.pallas import tpu as pltpu

# ----------------------------- small config ---------------------------------
B = 2                 # batch
S = 16                # seqlen
DIM = 64              # model dim
N_HEADS = 4
N_KV_HEADS = 4        # == N_HEADS  -> n_rep = 1
HEAD_DIM = DIM // N_HEADS
VOCAB = 21
N_LAYERS = 2
MULTIPLE_OF = 32
EPS = 1e-5
MAX_SEQ_LEN = 64
NEG_INF = -1e9        # stand-in for torch.finfo(float32).min in the extended mask
BS = B * S            # folded batch*seq rows
LOGIT_PAD = 128       # lane-dense logits width (VOCAB padded up to 128 lanes)


def ffn_hidden_dim(dim, multiple_of):
    hidden = int(2 * (4 * dim) / 3)
    return multiple_of * ((hidden + multiple_of - 1) // multiple_of)


HIDDEN = ffn_hidden_dim(DIM, MULTIPLE_OF)   # = 192 for DIM=64


# ----------------------------- helpers (glue) --------------------------------
def precompute_freqs(head_dim, end, theta=10000.0):
    freqs = 1.0 / (theta ** (jnp.arange(0, head_dim, 2)[: head_dim // 2].astype(jnp.float32) / head_dim))
    t = jnp.arange(end, dtype=jnp.float32)
    freqs = jnp.outer(t, freqs)
    return jnp.cos(freqs), jnp.sin(freqs)        # (end, head_dim//2) each


def build_rope_constants(cos, sin):
    """Full-width (B*S, DIM) cos/sin tables + pair-rotation matrix.

    With cos/sin repeating each frequency twice (interleaved layout) and P the
    block-diagonal pair-rotation matrix, interleaved RoPE becomes
        x_rot = x * cos + (x @ P) * sin
    which is pure 2-D elementwise + MXU math (no in-kernel reshapes).
    """
    cos_full = jnp.tile(jnp.repeat(cos, 2, axis=-1), (1, N_HEADS))   # (S, DIM)
    sin_full = jnp.tile(jnp.repeat(sin, 2, axis=-1), (1, N_HEADS))   # (S, DIM)
    cos_f = jnp.tile(cos_full, (B, 1))                               # (BS, DIM)
    sin_f = jnp.tile(sin_full, (B, 1))                               # (BS, DIM)
    pm = np.zeros((HEAD_DIM, HEAD_DIM), np.float32)
    for i in range(HEAD_DIM // 2):
        pm[2 * i + 1, 2 * i] = -1.0     # out[2i]   -= x[2i+1] * sin
        pm[2 * i, 2 * i + 1] = 1.0      # out[2i+1] += x[2i]   * sin
    rope_p = jnp.asarray(np.kron(np.eye(N_HEADS, dtype=np.float32), pm))  # (DIM, DIM)
    return cos_f, sin_f, rope_p


def _silu(a):
    # exact sigmoid form (used by the pure-JAX reference, matches F.silu)
    return a * (1.0 / (1.0 + jnp.exp(-a)))


def _rmsnorm(x, w):
    ms = jnp.mean(x * x, axis=-1, keepdims=True)
    return x * lax.rsqrt(ms + EPS) * w


# ----------------------------- fused Pallas kernel ---------------------------
def _fused_transformer_kernel(x_ref, mask_ref, cos_ref, sin_ref, rp_ref,
                              anw_ref, wq_ref, wk_ref, wv_ref, wo_ref,
                              fnw_ref, w1_ref, w3_ref, w2_ref,
                              final_nw_ref, outw_ref,
                              hn_ref, logits_ref):
    """Whole forward pass: N_LAYERS blocks + final norm + tied output head.

    Activations are a (B*S, DIM) slab; weights carry a leading layer axis and
    are indexed statically inside the unrolled layer loop (all VMEM-resident).
    """
    h = x_ref[...]            # (BS, DIM)
    mask = mask_ref[...]      # (BS, BS) additive: 0 keep / -1e9 pad or cross-batch
    cos = cos_ref[...]
    sin = sin_ref[...]
    rp = rp_ref[...]

    for l in range(N_LAYERS):                          # static unroll (N_LAYERS=2)
        # ---- attention ----
        xn = _rmsnorm(h, anw_ref[l])                   # attention_norm, (BS, DIM)
        # 1/sqrt(head_dim) is pre-folded into wq host-side.
        q = jnp.dot(xn, wq_ref[l], preferred_element_type=jnp.float32)
        k = jnp.dot(xn, wk_ref[l], preferred_element_type=jnp.float32)
        v = jnp.dot(xn, wv_ref[l], preferred_element_type=jnp.float32)

        # interleaved RoPE via elementwise + pair-rotation matmul (MXU has slack)
        q = q * cos + jnp.dot(q, rp, preferred_element_type=jnp.float32) * sin
        k = k * cos + jnp.dot(k, rp, preferred_element_type=jnp.float32) * sin

        head_outs = []
        for hh in range(N_HEADS):                      # static unroll, all in regs
            sl = slice(hh * HEAD_DIM, (hh + 1) * HEAD_DIM)
            qh = q[:, sl]
            kh = k[:, sl]
            vh = v[:, sl]
            s = lax.dot_general(qh, kh, (((1,), (1,)), ((), ())),
                                preferred_element_type=jnp.float32)   # (BS, BS)
            s = s + mask
            s = s - jnp.max(s, axis=-1, keepdims=True)
            p = jnp.exp(s)
            # EUP reciprocal instead of an f32 divide
            p = p * pl.reciprocal(jnp.sum(p, axis=-1, keepdims=True), approx=True)
            head_outs.append(jnp.dot(p, vh, preferred_element_type=jnp.float32))
        # single lane-dense (BS, DIM) block feeding wo (no per-head masked stores)
        attn = jnp.concatenate(head_outs, axis=-1)
        h = h + jnp.dot(attn, wo_ref[l], preferred_element_type=jnp.float32)

        # ---- feed forward (SwiGLU) ----
        xn2 = _rmsnorm(h, fnw_ref[l])                  # ffn_norm
        a = jnp.dot(xn2, w1_ref[l], preferred_element_type=jnp.float32)
        b = jnp.dot(xn2, w3_ref[l], preferred_element_type=jnp.float32)
        # silu via tanh: a*sigmoid(a) = a*(0.5*tanh(a/2)+0.5)  (EUP, divide-free)
        ff_in = (a * (0.5 * jnp.tanh(0.5 * a) + 0.5)) * b
        h = h + jnp.dot(ff_in, w2_ref[l], preferred_element_type=jnp.float32)

    # ---- final norm + tied output projection of the last position per batch ----
    hn = _rmsnorm(h, final_nw_ref[...])
    hn_ref[...] = hn                                    # (BS, DIM)
    last = jnp.concatenate(
        [hn[(bb + 1) * S - 1:(bb + 1) * S, :] for bb in range(B)], axis=0)  # (B, DIM)
    # outw is zero-padded to 128 lanes -> fully dense store
    logits_ref[...] = jnp.dot(last, outw_ref[...], preferred_element_type=jnp.float32)


# ----------------------------- pallas_call wrapper ---------------------------
def transformer_forward(tokens, attn_mask, emb, layers, final_norm, cos, sin):
    # ---- host-side glue: embedding gather, mask, RoPE tables, weight stacking ----
    h0 = emb[tokens].astype(jnp.float32) * attn_mask[..., None]   # (B, S, DIM)
    x0 = h0.reshape(BS, DIM)
    # dropout(p=0.15) disabled (eval semantics)

    # folded extended mask: same-batch keys get the per-key additive mask,
    # cross-batch pairs get -1e9 (exp underflows to exactly 0 -> matches ref)
    key_add = ((1.0 - attn_mask) * NEG_INF).reshape(BS)           # (BS,)
    bid = jnp.repeat(jnp.arange(B), S)
    same_b = bid[:, None] == bid[None, :]
    mask_full = jnp.where(same_b, key_add[None, :], NEG_INF).astype(jnp.float32)

    cos_f, sin_f, rope_p = build_rope_constants(cos, sin)

    scale = 1.0 / math.sqrt(HEAD_DIM)
    anw = jnp.stack([p["attn_norm"] for p in layers])             # (L, 1, DIM)
    wq = jnp.stack([p["wq"] for p in layers]) * scale             # scale folded in
    wk = jnp.stack([p["wk"] for p in layers])
    wv = jnp.stack([p["wv"] for p in layers])
    wo = jnp.stack([p["wo"] for p in layers])
    fnw = jnp.stack([p["ffn_norm"] for p in layers])
    w1 = jnp.stack([p["w1"] for p in layers])
    w3 = jnp.stack([p["w3"] for p in layers])
    w2 = jnp.stack([p["w2"] for p in layers])

    # tied output weights, lane-padded to 128 so the logits store is unmasked
    out_w_pad = jnp.zeros((DIM, LOGIT_PAD), jnp.float32).at[:, :VOCAB].set(emb.T)

    kv_dim = N_KV_HEADS * HEAD_DIM

    def full(shape):
        return pl.BlockSpec(shape, lambda i, _s=shape: (0,) * len(_s))

    in_specs = [
        full((BS, DIM)),                     # x0
        full((BS, BS)),                      # mask_full
        full((BS, DIM)),                     # cos
        full((BS, DIM)),                     # sin
        full((DIM, DIM)),                    # rope pair-rotation matrix
        full((N_LAYERS, 1, DIM)),            # attention_norm weights
        full((N_LAYERS, DIM, DIM)),          # wq (scaled)
        full((N_LAYERS, DIM, kv_dim)),       # wk
        full((N_LAYERS, DIM, kv_dim)),       # wv
        full((N_LAYERS, DIM, DIM)),          # wo
        full((N_LAYERS, 1, DIM)),            # ffn_norm weights
        full((N_LAYERS, DIM, HIDDEN)),       # w1
        full((N_LAYERS, DIM, HIDDEN)),       # w3
        full((N_LAYERS, HIDDEN, DIM)),       # w2
        full((1, DIM)),                      # final norm weight
        full((DIM, LOGIT_PAD)),              # padded tied output weight
    ]
    out_specs = [full((BS, DIM)), full((B, LOGIT_PAD))]

    hn_flat, logits_pad = pl.pallas_call(
        _fused_transformer_kernel,
        out_shape=(jax.ShapeDtypeStruct((BS, DIM), jnp.float32),
                   jax.ShapeDtypeStruct((B, LOGIT_PAD), jnp.float32)),
        grid_spec=pltpu.PrefetchScalarGridSpec(
            num_scalar_prefetch=0,
            grid=(1,),
            in_specs=in_specs,
            out_specs=out_specs),
        compiler_params=pltpu.CompilerParams(
            dimension_semantics=("arbitrary",)),
    )(x0, mask_full, cos_f, sin_f, rope_p,
      anw, wq, wk, wv, wo, fnw, w1, w3, w2, final_norm, out_w_pad)

    h_norm = hn_flat.reshape(B, S, DIM)
    logits = logits_pad[:, None, :VOCAB]                # (B, 1, VOCAB)
    return logits, h_norm


# ----------------------------- pure-JAX reference -----------------------------
def _rope_ref(x, cos, sin):
    # x: (B, S, nh, hd); cos/sin: (S, hd//2)
    xr = x[..., 0::2]
    xi = x[..., 1::2]
    c = cos[None, :, None, :]
    s = sin[None, :, None, :]
    out_r = xr * c - xi * s
    out_i = xr * s + xi * c
    return jnp.stack([out_r, out_i], axis=-1).reshape(x.shape)


def reference_forward(tokens, attn_mask, emb, layers, final_norm, cos, sin):
    h = emb[tokens].astype(jnp.float32)
    h = h * attn_mask[..., None]
    mask_add = (1.0 - attn_mask)[:, None, :] * NEG_INF       # (B, 1, S)
    for p in layers:
        xn = _rmsnorm(h, p["attn_norm"][0])
        q = xn @ p["wq"]
        k = xn @ p["wk"]
        v = xn @ p["wv"]
        q = q.reshape(B, S, N_HEADS, HEAD_DIM)
        k = k.reshape(B, S, N_KV_HEADS, HEAD_DIM)
        v = v.reshape(B, S, N_KV_HEADS, HEAD_DIM)
        q = _rope_ref(q, cos, sin)
        k = _rope_ref(k, cos, sin)
        q = q.transpose(0, 2, 1, 3)
        k = k.transpose(0, 2, 1, 3)
        v = v.transpose(0, 2, 1, 3)
        s = jnp.einsum("bhqd,bhkd->bhqk", q, k) / math.sqrt(HEAD_DIM)
        s = s + mask_add[:, None, :, :]
        s = s - jnp.max(s, axis=-1, keepdims=True)
        p_attn = jnp.exp(s)
        p_attn = p_attn / jnp.sum(p_attn, axis=-1, keepdims=True)
        o = jnp.einsum("bhqk,bhkd->bhqd", p_attn, v)
        o = o.transpose(0, 2, 1, 3).reshape(B, S, DIM)
        h = h + o @ p["wo"]
        xn2 = _rmsnorm(h, p["ffn_norm"][0])
        a = xn2 @ p["w1"]
        b = xn2 @ p["w3"]
        h = h + (_silu(a) * b) @ p["w2"]
    h_norm = _rmsnorm(h, final_norm[0])
    logits = h_norm[:, -1:, :] @ emb.T
    return logits, h_norm


# ----------------------------- parameter init ---------------------------------
def init_params(key):
    std = 0.02
    std_o = 0.02 / math.sqrt(2 * N_LAYERS)   # special init for wo / w3 (as in __init__)
    kv_dim = N_KV_HEADS * HEAD_DIM
    keys = jax.random.split(key, 1 + N_LAYERS)
    emb = std * jax.random.normal(keys[0], (VOCAB, DIM), jnp.float32)
    layers = []
    for l in range(N_LAYERS):
        ks = jax.random.split(keys[1 + l], 7)
        layers.append(dict(
            attn_norm=jnp.ones((1, DIM), jnp.float32),
            wq=std * jax.random.normal(ks[0], (DIM, DIM), jnp.float32),
            wk=std * jax.random.normal(ks[1], (DIM, kv_dim), jnp.float32),
            wv=std * jax.random.normal(ks[2], (DIM, kv_dim), jnp.float32),
            wo=std_o * jax.random.normal(ks[3], (DIM, DIM), jnp.float32),
            ffn_norm=jnp.ones((1, DIM), jnp.float32),
            w1=std * jax.random.normal(ks[4], (DIM, HIDDEN), jnp.float32),
            w3=std_o * jax.random.normal(ks[5], (DIM, HIDDEN), jnp.float32),
            w2=std * jax.random.normal(ks[6], (HIDDEN, DIM), jnp.float32),
        ))
    final_norm = jnp.ones((1, DIM), jnp.float32)
    return emb, layers, final_norm


# ----------------------------- main --------------------------------------------
if __name__ == "__main__":
    key = jax.random.PRNGKey(0)
    k_tok, k_par = jax.random.split(key)

    tokens = jax.random.randint(k_tok, (B, S), 0, VOCAB, dtype=jnp.int32)
    # padding mask: batch 0 fully valid, batch 1 has last 4 positions padded
    attn_mask = jnp.ones((B, S), jnp.float32)
    attn_mask = attn_mask.at[1, S - 4:].set(0.0)

    emb, layers, final_norm = init_params(k_par)

    cos_all, sin_all = precompute_freqs(HEAD_DIM, MAX_SEQ_LEN)
    cos, sin = cos_all[:S], sin_all[:S]

    logits, h_out = transformer_forward(tokens, attn_mask, emb, layers,
                                        final_norm, cos, sin)
    jax.block_until_ready(logits)
    jax.block_until_ready(h_out)

    logits_ref, h_ref = reference_forward(tokens, attn_mask, emb, layers,
                                          final_norm, cos, sin)

    np.testing.assert_allclose(np.asarray(h_out), np.asarray(h_ref),
                               rtol=2e-2, atol=2e-2)
    np.testing.assert_allclose(np.asarray(logits), np.asarray(logits_ref),
                               rtol=2e-2, atol=2e-2)

    assert logits.shape == (B, 1, VOCAB) and h_out.shape == (B, S, DIM)
    print("KERNEL_OK")
</pallas_src>

<mosaic_0001>
module attributes {stable_mosaic.version = 11 : i64} {
  func.func @_fused_transformer_kernel(%arg0: i32, %arg1: memref<32x64xf32, #tpu.memory_space<vmem>>, %arg2: memref<32x32xf32, #tpu.memory_space<vmem>>, %arg3: memref<32x64xf32, #tpu.memory_space<vmem>>, %arg4: memref<32x64xf32, #tpu.memory_space<vmem>>, %arg5: memref<64x64xf32, #tpu.memory_space<vmem>>, %arg6: memref<2x1x64xf32, #tpu.memory_space<vmem>>, %arg7: memref<2x64x64xf32, #tpu.memory_space<vmem>>, %arg8: memref<2x64x64xf32, #tpu.memory_space<vmem>>, %arg9: memref<2x64x64xf32, #tpu.memory_space<vmem>>, %arg10: memref<2x64x64xf32, #tpu.memory_space<vmem>>, %arg11: memref<2x1x64xf32, #tpu.memory_space<vmem>>, %arg12: memref<2x64x192xf32, #tpu.memory_space<vmem>>, %arg13: memref<2x64x192xf32, #tpu.memory_space<vmem>>, %arg14: memref<2x192x64xf32, #tpu.memory_space<vmem>>, %arg15: memref<1x64xf32, #tpu.memory_space<vmem>>, %arg16: memref<64x128xf32, #tpu.memory_space<vmem>>, %arg17: memref<32x64xf32, #tpu.memory_space<vmem>>, %arg18: memref<2x128xf32, #tpu.memory_space<vmem>>) attributes {dimension_semantics = [#tpu.dimension_semantics<arbitrary>], iteration_bounds = array<i64: 1>, scalar_prefetch = 0 : i64, scratch_operands = 0 : i64, tpu.core_type = #tpu.core_type<tc>, window_params = [{pipeline_mode = #tpu.pipeline_mode<synchronous>, transform_indices = @transform_0, window_bounds = array<i64: 32, 64>}, {pipeline_mode = #tpu.pipeline_mode<synchronous>, transform_indices = @transform_1, window_bounds = array<i64: 32, 32>}, {pipeline_mode = #tpu.pipeline_mode<synchronous>, transform_indices = @transform_2, window_bounds = array<i64: 32, 64>}, {pipeline_mode = #tpu.pipeline_mode<synchronous>, transform_indices = @transform_3, window_bounds = array<i64: 32, 64>}, {pipeline_mode = #tpu.pipeline_mode<synchronous>, transform_indices = @transform_4, window_bounds = array<i64: 64, 64>}, {pipeline_mode = #tpu.pipeline_mode<synchronous>, transform_indices = @transform_5, window_bounds = array<i64: 2, 1, 64>}, {pipeline_mode = #tpu.pipeline_mode<synchronous>, transform_indices = @transform_6, window_bounds = array<i64: 2, 64, 64>}, {pipeline_mode = #tpu.pipeline_mode<synchronous>, transform_indices = @transform_7, window_bounds = array<i64: 2, 64, 64>}, {pipeline_mode = #tpu.pipeline_mode<synchronous>, transform_indices = @transform_8, window_bounds = array<i64: 2, 64, 64>}, {pipeline_mode = #tpu.pipeline_mode<synchronous>, transform_indices = @transform_9, window_bounds = array<i64: 2, 64, 64>}, {pipeline_mode = #tpu.pipeline_mode<synchronous>, transform_indices = @transform_10, window_bounds = array<i64: 2, 1, 64>}, {pipeline_mode = #tpu.pipeline_mode<synchronous>, transform_indices = @transform_11, window_bounds = array<i64: 2, 64, 192>}, {pipeline_mode = #tpu.pipeline_mode<synchronous>, transform_indices = @transform_12, window_bounds = array<i64: 2, 64, 192>}, {pipeline_mode = #tpu.pipeline_mode<synchronous>, transform_indices = @transform_13, window_bounds = array<i64: 2, 192, 64>}, {pipeline_mode = #tpu.pipeline_mode<synchronous>, transform_indices = @transform_14, window_bounds = array<i64: 1, 64>}, {pipeline_mode = #tpu.pipeline_mode<synchronous>, transform_indices = @transform_15, window_bounds = array<i64: 64, 128>}, {pipeline_mode = #tpu.pipeline_mode<synchronous>, transform_indices = @transform_16, window_bounds = array<i64: 32, 64>}, {pipeline_mode = #tpu.pipeline_mode<synchronous>, transform_indices = @transform_17, window_bounds = array<i64: 2, 128>}]} {
    %c0 = arith.constant 0 : index
    %c0_0 = arith.constant 0 : index
    %0 = vector.load %arg1[%c0, %c0_0] : memref<32x64xf32, #tpu.memory_space<vmem>>, vector<32x64xf32>
    %c0_1 = arith.constant 0 : index
    %c0_2 = arith.constant 0 : index
    %1 = vector.load %arg2[%c0_1, %c0_2] : memref<32x32xf32, #tpu.memory_space<vmem>>, vector<32x32xf32>
    %c0_3 = arith.constant 0 : index
    %c0_4 = arith.constant 0 : index
    %2 = vector.load %arg3[%c0_3, %c0_4] : memref<32x64xf32, #tpu.memory_space<vmem>>, vector<32x64xf32>
    %c0_5 = arith.constant 0 : index
    %c0_6 = arith.constant 0 : index
    %3 = vector.load %arg4[%c0_5, %c0_6] : memref<32x64xf32, #tpu.memory_space<vmem>>, vector<32x64xf32>
    %c0_7 = arith.constant 0 : index
    %c0_8 = arith.constant 0 : index
    %4 = vector.load %arg5[%c0_7, %c0_8] : memref<64x64xf32, #tpu.memory_space<vmem>>, vector<64x64xf32>
    %c0_9 = arith.constant 0 : index
    %c0_10 = arith.constant 0 : index
    %c0_11 = arith.constant 0 : index
    %5 = vector.load %arg6[%c0_9, %c0_10, %c0_11] : memref<2x1x64xf32, #tpu.memory_space<vmem>>, vector<1x1x64xf32>
    %6 = vector.shape_cast %5 : vector<1x1x64xf32> to vector<1x64xf32>
    %7 = arith.mulf %0, %0 : vector<32x64xf32>
    %cst = arith.constant dense<0.000000e+00> : vector<32xf32>
    %8 = vector.multi_reduction <add>, %7, %cst [1] : vector<32x64xf32> to vector<32xf32>
    %9 = vector.shape_cast %8 : vector<32xf32> to vector<32x1xf32>
    %cst_12 = arith.constant 6.400000e+01 : f32
    %10 = vector.broadcast %cst_12 : f32 to vector<32x1xf32>
    %11 = arith.divf %9, %10 : vector<32x1xf32>
    %cst_13 = arith.constant 9.99999974E-6 : f32
    %12 = vector.broadcast %cst_13 : f32 to vector<32x1xf32>
    %13 = arith.addf %11, %12 : vector<32x1xf32>
    %14 = math.rsqrt %13 : vector<32x1xf32>
    %15 = vector.broadcast %14 : vector<32x1xf32> to vector<32x64xf32>
    %16 = arith.mulf %0, %15 : vector<32x64xf32>
    %17 = vector.broadcast %6 : vector<1x64xf32> to vector<32x64xf32>
    %18 = arith.mulf %16, %17 : vector<32x64xf32>
    %c0_14 = arith.constant 0 : index
    %c0_15 = arith.constant 0 : index
    %c0_16 = arith.constant 0 : index
    %19 = vector.load %arg7[%c0_14, %c0_15, %c0_16] : memref<2x64x64xf32, #tpu.memory_space<vmem>>, vector<1x64x64xf32>
    %20 = vector.shape_cast %19 : vector<1x64x64xf32> to vector<64x64xf32>
    %cst_17 = arith.constant dense<0.000000e+00> : vector<32x64xf32>
    %21 = tpu.matmul %18, %20, %cst_17 {dimension_numbers = #tpu.dot_dimension_numbers<[1], [0], [0], [1], [0, 0, 1, 1], [], []>} : vector<32x64xf32>, vector<64x64xf32>, vector<32x64xf32> -> vector<32x64xf32>
    %c0_18 = arith.constant 0 : index
    %c0_19 = arith.constant 0 : index
    %c0_20 = arith.constant 0 : index
    %22 = vector.load %arg8[%c0_18, %c0_19, %c0_20] : memref<2x64x64xf32, #tpu.memory_space<vmem>>, vector<1x64x64xf32>
    %23 = vector.shape_cast %22 : vector<1x64x64xf32> to vector<64x64xf32>
    %cst_21 = arith.constant dense<0.000000e+00> : vector<32x64xf32>
    %24 = tpu.matmul %18, %23, %cst_21 {dimension_numbers = #tpu.dot_dimension_numbers<[1], [0], [0], [1], [0, 0, 1, 1], [], []>} : vector<32x64xf32>, vector<64x64xf32>, vector<32x64xf32> -> vector<32x64xf32>
    %c0_22 = arith.constant 0 : index
    %c0_23 = arith.constant 0 : index
    %c0_24 = arith.constant 0 : index
    %25 = vector.load %arg9[%c0_22, %c0_23, %c0_24] : memref<2x64x64xf32, #tpu.memory_space<vmem>>, vector<1x64x64xf32>
    %26 = vector.shape_cast %25 : vector<1x64x64xf32> to vector<64x64xf32>
    %cst_25 = arith.constant dense<0.000000e+00> : vector<32x64xf32>
    %27 = tpu.matmul %18, %26, %cst_25 {dimension_numbers = #tpu.dot_dimension_numbers<[1], [0], [0], [1], [0, 0, 1, 1], [], []>} : vector<32x64xf32>, vector<64x64xf32>, vector<32x64xf32> -> vector<32x64xf32>
    %28 = arith.mulf %21, %2 : vector<32x64xf32>
    %cst_26 = arith.constant dense<0.000000e+00> : vector<32x64xf32>
    %29 = tpu.matmul %21, %4, %cst_26 {dimension_numbers = #tpu.dot_dimension_numbers<[1], [0], [0], [1], [0, 0, 1, 1], [], []>} : vector<32x64xf32>, vector<64x64xf32>, vector<32x64xf32> -> vector<32x64xf32>
    %30 = arith.mulf %29, %3 : vector<32x64xf32>
    %31 = arith.addf %28, %30 : vector<32x64xf32>
    %32 = arith.mulf %24, %2 : vector<32x64xf32>
    %cst_27 = arith.constant dense<0.000000e+00> : vector<32x64xf32>
    %33 = tpu.matmul %24, %4, %cst_27 {dimension_numbers = #tpu.dot_dimension_numbers<[1], [0], [0], [1], [0, 0, 1, 1], [], []>} : vector<32x64xf32>, vector<64x64xf32>, vector<32x64xf32> -> vector<32x64xf32>
    %34 = arith.mulf %33, %3 : vector<32x64xf32>
    %35 = arith.addf %32, %34 : vector<32x64xf32>
    %36 = vector.extract_strided_slice %31 {offsets = [0, 0], sizes = [32, 16], strides = [1, 1]} : vector<32x64xf32> to vector<32x16xf32>
    %37 = vector.extract_strided_slice %35 {offsets = [0, 0], sizes = [32, 16], strides = [1, 1]} : vector<32x64xf32> to vector<32x16xf32>
    %38 = vector.extract_strided_slice %27 {offsets = [0, 0], sizes = [32, 16], strides = [1, 1]} : vector<32x64xf32> to vector<32x16xf32>
    %cst_28 = arith.constant dense<0.000000e+00> : vector<32x32xf32>
    %39 = tpu.matmul %36, %37, %cst_28 {dimension_numbers = #tpu.dot_dimension_numbers<[1], [1], [0], [0], [0, 0, 1, 0], [], []>} : vector<32x16xf32>, vector<32x16xf32>, vector<32x32xf32> -> vector<32x32xf32>
    %40 = arith.addf %39, %1 : vector<32x32xf32>
    %cst_29 = arith.constant dense<0xFF800000> : vector<32xf32>
    %41 = vector.multi_reduction <maximumf>, %40, %cst_29 [1] : vector<32x32xf32> to vector<32xf32>
    %42 = vector.shape_cast %41 : vector<32xf32> to vector<32x1xf32>
    %43 = vector.broadcast %42 : vector<32x1xf32> to vector<32x32xf32>
    %44 = arith.subf %40, %43 : vector<32x32xf32>
    %45 = math.exp %44 : vector<32x32xf32>
    %cst_30 = arith.constant dense<0.000000e+00> : vector<32xf32>
    %46 = vector.multi_reduction <add>, %45, %cst_30 [1] : vector<32x32xf32> to vector<32xf32>
    %47 = vector.shape_cast %46 : vector<32xf32> to vector<32x1xf32>
    %48 = tpu.reciprocal %47 {approx = true} : vector<32x1xf32> -> vector<32x1xf32>
    %49 = vector.broadcast %48 : vector<32x1xf32> to vector<32x32xf32>
    %50 = arith.mulf %45, %49 : vector<32x32xf32>
    %cst_31 = arith.constant dense<0.000000e+00> : vector<32x16xf32>
    %51 = tpu.matmul %50, %38, %cst_31 {dimension_numbers = #tpu.dot_dimension_numbers<[1], [0], [0], [1], [0, 0, 1, 1], [], []>} : vector<32x32xf32>, vector<32x16xf32>, vector<32x16xf32> -> vector<32x16xf32>
    %52 = vector.extract_strided_slice %31 {offsets = [0, 16], sizes = [32, 16], strides = [1, 1]} : vector<32x64xf32> to vector<32x16xf32>
    %53 = vector.extract_strided_slice %35 {offsets = [0, 16], sizes = [32, 16], strides = [1, 1]} : vector<32x64xf32> to vector<32x16xf32>
    %54 = vector.extract_strided_slice %27 {offsets = [0, 16], sizes = [32, 16], strides = [1, 1]} : vector<32x64xf32> to vector<32x16xf32>
    %cst_32 = arith.constant dense<0.000000e+00> : vector<32x32xf32>
    %55 = tpu.matmul %52, %53, %cst_32 {dimension_numbers = #tpu.dot_dimension_numbers<[1], [1], [0], [0], [0, 0, 1, 0], [], []>} : vector<32x16xf32>, vector<32x16xf32>, vector<32x32xf32> -> vector<32x32xf32>
    %56 = arith.addf %55, %1 : vector<32x32xf32>
    %cst_33 = arith.constant dense<0xFF800000> : vector<32xf32>
    %57 = vector.multi_reduction <maximumf>, %56, %cst_33 [1] : vector<32x32xf32> to vector<32xf32>
    %58 = vector.shape_cast %57 : vector<32xf32> to vector<32x1xf32>
    %59 = vector.broadcast %58 : vector<32x1xf32> to vector<32x32xf32>
    %60 = arith.subf %56, %59 : vector<32x32xf32>
    %61 = math.exp %60 : vector<32x32xf32>
    %cst_34 = arith.constant dense<0.000000e+00> : vector<32xf32>
    %62 = vector.multi_reduction <add>, %61, %cst_34 [1] : vector<32x32xf32> to vector<32xf32>
    %63 = vector.shape_cast %62 : vector<32xf32> to vector<32x1xf32>
    %64 = tpu.reciprocal %63 {approx = true} : vector<32x1xf32> -> vector<32x1xf32>
    %65 = vector.broadcast %64 : vector<32x1xf32> to vector<32x32xf32>
    %66 = arith.mulf %61, %65 : vector<32x32xf32>
    %cst_35 = arith.constant dense<0.000000e+00> : vector<32x16xf32>
    %67 = tpu.matmul %66, %54, %cst_35 {dimension_numbers = #tpu.dot_dimension_numbers<[1], [0], [0], [1], [0, 0, 1, 1], [], []>} : vector<32x32xf32>, vector<32x16xf32>, vector<32x16xf32> -> vector<32x16xf32>
    %68 = vector.extract_strided_slice %31 {offsets = [0, 32], sizes = [32, 16], strides = [1, 1]} : vector<32x64xf32> to vector<32x16xf32>
    %69 = vector.extract_strided_slice %35 {offsets = [0, 32], sizes = [32, 16], strides = [1, 1]} : vector<32x64xf32> to vector<32x16xf32>
    %70 = vector.extract_strided_slice %27 {offsets = [0, 32], sizes = [32, 16], strides = [1, 1]} : vector<32x64xf32> to vector<32x16xf32>
    %cst_36 = arith.constant dense<0.000000e+00> : vector<32x32xf32>
    %71 = tpu.matmul %68, %69, %cst_36 {dimension_numbers = #tpu.dot_dimension_numbers<[1], [1], [0], [0], [0, 0, 1, 0], [], []>} : vector<32x16xf32>, vector<32x16xf32>, vector<32x32xf32> -> vector<32x32xf32>
    %72 = arith.addf %71, %1 : vector<32x32xf32>
    %cst_37 = arith.constant dense<0xFF800000> : vector<32xf32>
    %73 = vector.multi_reduction <maximumf>, %72, %cst_37 [1] : vector<32x32xf32> to vector<32xf32>
    %74 = vector.shape_cast %73 : vector<32xf32> to vector<32x1xf32>
    %75 = vector.broadcast %74 : vector<32x1xf32> to vector<32x32xf32>
    %76 = arith.subf %72, %75 : vector<32x32xf32>
    %77 = math.exp %76 : vector<32x32xf32>
    %cst_38 = arith.constant dense<0.000000e+00> : vector<32xf32>
    %78 = vector.multi_reduction <add>, %77, %cst_38 [1] : vector<32x32xf32> to vector<32xf32>
    %79 = vector.shape_cast %78 : vector<32xf32> to vector<32x1xf32>
    %80 = tpu.reciprocal %79 {approx = true} : vector<32x1xf32> -> vector<32x1xf32>
    %81 = vector.broadcast %80 : vector<32x1xf32> to vector<32x32xf32>
    %82 = arith.mulf %77, %81 : vector<32x32xf32>
    %cst_39 = arith.constant dense<0.000000e+00> : vector<32x16xf32>
    %83 = tpu.matmul %82, %70, %cst_39 {dimension_numbers = #tpu.dot_dimension_numbers<[1], [0], [0], [1], [0, 0, 1, 1], [], []>} : vector<32x32xf32>, vector<32x16xf32>, vector<32x16xf32> -> vector<32x16xf32>
    %84 = vector.extract_strided_slice %31 {offsets = [0, 48], sizes = [32, 16], strides = [1, 1]} : vector<32x64xf32> to vector<32x16xf32>
    %85 = vector.extract_strided_slice %35 {offsets = [0, 48], sizes = [32, 16], strides = [1, 1]} : vector<32x64xf32> to vector<32x16xf32>
    %86 = vector.extract_strided_slice %27 {offsets = [0, 48], sizes = [32, 16], strides = [1, 1]} : vector<32x64xf32> to vector<32x16xf32>
    %cst_40 = arith.constant dense<0.000000e+00> : vector<32x32xf32>
    %87 = tpu.matmul %84, %85, %cst_40 {dimension_numbers = #tpu.dot_dimension_numbers<[1], [1], [0], [0], [0, 0, 1, 0], [], []>} : vector<32x16xf32>, vector<32x16xf32>, vector<32x32xf32> -> vector<32x32xf32>
    %88 = arith.addf %87, %1 : vector<32x32xf32>
    %cst_41 = arith.constant dense<0xFF800000> : vector<32xf32>
    %89 = vector.multi_reduction <maximumf>, %88, %cst_41 [1] : vector<32x32xf32> to vector<32xf32>
    %90 = vector.shape_cast %89 : vector<32xf32> to vector<32x1xf32>
    %91 = vector.broadcast %90 : vector<32x1xf32> to vector<32x32xf32>
    %92 = arith.subf %88, %91 : vector<32x32xf32>
    %93 = math.exp %92 : vector<32x32xf32>
    %cst_42 = arith.constant dense<0.000000e+00> : vector<32xf32>
    %94 = vector.multi_reduction <add>, %93, %cst_42 [1] : vector<32x32xf32> to vector<32xf32>
    %95 = vector.shape_cast %94 : vector<32xf32> to vector<32x1xf32>
    %96 = tpu.reciprocal %95 {approx = true} : vector<32x1xf32> -> vector<32x1xf32>
    %97 = vector.broadcast %96 : vector<32x1xf32> to vector<32x32xf32>
    %98 = arith.mulf %93, %97 : vector<32x32xf32>
    %cst_43 = arith.constant dense<0.000000e+00> : vector<32x16xf32>
    %99 = tpu.matmul %98, %86, %cst_43 {dimension_numbers = #tpu.dot_dimension_numbers<[1], [0], [0], [1], [0, 0, 1, 1], [], []>} : vector<32x32xf32>, vector<32x16xf32>, vector<32x16xf32> -> vector<32x16xf32>
    %100 = tpu.concatenate %51, %67, %83, %99 in 1 : vector<32x16xf32>, vector<32x16xf32>, vector<32x16xf32>, vector<32x16xf32> -> vector<32x64xf32>
    %c0_44 = arith.constant 0 : index
    %c0_45 = arith.constant 0 : index
    %c0_46 = arith.constant 0 : index
    %101 = vector.load %arg10[%c0_44, %c0_45, %c0_46] : memref<2x64x64xf32, #tpu.memory_space<vmem>>, vector<1x64x64xf32>
    %102 = vector.shape_cast %101 : vector<1x64x64xf32> to vector<64x64xf32>
    %cst_47 = arith.constant dense<0.000000e+00> : vector<32x64xf32>
    %103 = tpu.matmul %100, %102, %cst_47 {dimension_numbers = #tpu.dot_dimension_numbers<[1], [0], [0], [1], [0, 0, 1, 1], [], []>} : vector<32x64xf32>, vector<64x64xf32>, vector<32x64xf32> -> vector<32x64xf32>
    %104 = arith.addf %0, %103 : vector<32x64xf32>
    %c0_48 = arith.constant 0 : index
    %c0_49 = arith.constant 0 : index
    %c0_50 = arith.constant 0 : index
    %105 = vector.load %arg11[%c0_48, %c0_49, %c0_50] : memref<2x1x64xf32, #tpu.memory_space<vmem>>, vector<1x1x64xf32>
    %106 = vector.shape_cast %105 : vector<1x1x64xf32> to vector<1x64xf32>
    %107 = arith.mulf %104, %104 : vector<32x64xf32>
    %cst_51 = arith.constant dense<0.000000e+00> : vector<32xf32>
    %108 = vector.multi_reduction <add>, %107, %cst_51 [1] : vector<32x64xf32> to vector<32xf32>
    %109 = vector.shape_cast %108 : vector<32xf32> to vector<32x1xf32>
    %cst_52 = arith.constant 6.400000e+01 : f32
    %110 = vector.broadcast %cst_52 : f32 to vector<32x1xf32>
    %111 = arith.divf %109, %110 : vector<32x1xf32>
    %cst_53 = arith.constant 9.99999974E-6 : f32
    %112 = vector.broadcast %cst_53 : f32 to vector<32x1xf32>
    %113 = arith.addf %111, %112 : vector<32x1xf32>
    %114 = math.rsqrt %113 : vector<32x1xf32>
    %115 = vector.broadcast %114 : vector<32x1xf32> to vector<32x64xf32>
    %116 = arith.mulf %104, %115 : vector<32x64xf32>
    %117 = vector.broadcast %106 : vector<1x64xf32> to vector<32x64xf32>
    %118 = arith.mulf %116, %117 : vector<32x64xf32>
    %c0_54 = arith.constant 0 : index
    %c0_55 = arith.constant 0 : index
    %c0_56 = arith.constant 0 : index
    %119 = vector.load %arg12[%c0_54, %c0_55, %c0_56] : memref<2x64x192xf32, #tpu.memory_space<vmem>>, vector<1x64x192xf32>
    %120 = vector.shape_cast %119 : vector<1x64x192xf32> to vector<64x192xf32>
    %cst_57 = arith.constant dense<0.000000e+00> : vector<32x192xf32>
    %121 = tpu.matmul %118, %120, %cst_57 {dimension_numbers = #tpu.dot_dimension_numbers<[1], [0], [0], [1], [0, 0, 1, 1], [], []>} : vector<32x64xf32>, vector<64x192xf32>, vector<32x192xf32> -> vector<32x192xf32>
    %c0_58 = arith.constant 0 : index
    %c0_59 = arith.constant 0 : index
    %c0_60 = arith.constant 0 : index
    %122 = vector.load %arg13[%c0_58, %c0_59, %c0_60] : memref<2x64x192xf32, #tpu.memory_space<vmem>>, vector<1x64x192xf32>
    %123 = vector.shape_cast %122 : vector<1x64x192xf32> to vector<64x192xf32>
    %cst_61 = arith.constant dense<0.000000e+00> : vector<32x192xf32>
    %124 = tpu.matmul %118, %123, %cst_61 {dimension_numbers = #tpu.dot_dimension_numbers<[1], [0], [0], [1], [0, 0, 1, 1], [], []>} : vector<32x64xf32>, vector<64x192xf32>, vector<32x192xf32> -> vector<32x192xf32>
    %cst_62 = arith.constant 5.000000e-01 : f32
    %125 = vector.broadcast %cst_62 : f32 to vector<32x192xf32>
    %126 = arith.mulf %125, %121 : vector<32x192xf32>
    %127 = math.tanh %126 : vector<32x192xf32>
    %cst_63 = arith.constant 5.000000e-01 : f32
    %128 = vector.broadcast %cst_63 : f32 to vector<32x192xf32>
    %129 = arith.mulf %128, %127 : vector<32x192xf32>
    %cst_64 = arith.constant 5.000000e-01 : f32
    %130 = vector.broadcast %cst_64 : f32 to vector<32x192xf32>
    %131 = arith.addf %129, %130 : vector<32x192xf32>
    %132 = arith.mulf %121, %131 : vector<32x192xf32>
    %133 = arith.mulf %132, %124 : vector<32x192xf32>
    %c0_65 = arith.constant 0 : index
    %c0_66 = arith.constant 0 : index
    %c0_67 = arith.constant 0 : index
    %134 = vector.load %arg14[%c0_65, %c0_66, %c0_67] : memref<2x192x64xf32, #tpu.memory_space<vmem>>, vector<1x192x64xf32>
    %135 = vector.shape_cast %134 : vector<1x192x64xf32> to vector<192x64xf32>
    %cst_68 = arith.constant dense<0.000000e+00> : vector<32x64xf32>
    %136 = tpu.matmul %133, %135, %cst_68 {dimension_numbers = #tpu.dot_dimension_numbers<[1], [0], [0], [1], [0, 0, 1, 1], [], []>} : vector<32x192xf32>, vector<192x64xf32>, vector<32x64xf32> -> vector<32x64xf32>
    %137 = arith.addf %104, %136 : vector<32x64xf32>
    %c1 = arith.constant 1 : index
    %c0_69 = arith.constant 0 : index
    %c0_70 = arith.constant 0 : index
    %138 = vector.load %arg6[%c1, %c0_69, %c0_70] : memref<2x1x64xf32, #tpu.memory_space<vmem>>, vector<1x1x64xf32>
    %139 = vector.shape_cast %138 : vector<1x1x64xf32> to vector<1x64xf32>
    %140 = arith.mulf %137, %137 : vector<32x64xf32>
    %cst_71 = arith.constant dense<0.000000e+00> : vector<32xf32>
    %141 = vector.multi_reduction <add>, %140, %cst_71 [1] : vector<32x64xf32> to vector<32xf32>
    %142 = vector.shape_cast %141 : vector<32xf32> to vector<32x1xf32>
    %cst_72 = arith.constant 6.400000e+01 : f32
    %143 = vector.broadcast %cst_72 : f32 to vector<32x1xf32>
    %144 = arith.divf %142, %143 : vector<32x1xf32>
    %cst_73 = arith.constant 9.99999974E-6 : f32
    %145 = vector.broadcast %cst_73 : f32 to vector<32x1xf32>
    %146 = arith.addf %144, %145 : vector<32x1xf32>
    %147 = math.rsqrt %146 : vector<32x1xf32>
    %148 = vector.broadcast %147 : vector<32x1xf32> to vector<32x64xf32>
    %149 = arith.mulf %137, %148 : vector<32x64xf32>
    %150 = vector.broadcast %139 : vector<1x64xf32> to vector<32x64xf32>
    %151 = arith.mulf %149, %150 : vector<32x64xf32>
    %c1_74 = arith.constant 1 : index
    %c0_75 = arith.constant 0 : index
    %c0_76 = arith.constant 0 : index
    %152 = vector.load %arg7[%c1_74, %c0_75, %c0_76] : memref<2x64x64xf32, #tpu.memory_space<vmem>>, vector<1x64x64xf32>
    %153 = vector.shape_cast %152 : vector<1x64x64xf32> to vector<64x64xf32>
    %cst_77 = arith.constant dense<0.000000e+00> : vector<32x64xf32>
    %154 = tpu.matmul %151, %153, %cst_77 {dimension_numbers = #tpu.dot_dimension_numbers<[1], [0], [0], [1], [0, 0, 1, 1], [], []>} : vector<32x64xf32>, vector<64x64xf32>, vector<32x64xf32> -> vector<32x64xf32>
    %c1_78 = arith.constant 1 : index
    %c0_79 = arith.constant 0 : index
    %c0_80 = arith.constant 0 : index
    %155 = vector.load %arg8[%c1_78, %c0_79, %c0_80] : memref<2x64x64xf32, #tpu.memory_space<vmem>>, vector<1x64x64xf32>
    %156 = vector.shape_cast %155 : vector<1x64x64xf32> to vector<64x64xf32>
    %cst_81 = arith.constant dense<0.000000e+00> : vector<32x64xf32>
    %157 = tpu.matmul %151, %156, %cst_81 {dimension_numbers = #tpu.dot_dimension_numbers<[1], [0], [0], [1], [0, 0, 1, 1], [], []>} : vector<32x64xf32>, vector<64x64xf32>, vector<32x64xf32> -> vector<32x64xf32>
    %c1_82 = arith.constant 1 : index
    %c0_83 = arith.constant 0 : index
    %c0_84 = arith.constant 0 : index
    %158 = vector.load %arg9[%c1_82, %c0_83, %c0_84] : memref<2x64x64xf32, #tpu.memory_space<vmem>>, vector<1x64x64xf32>
    %159 = vector.shape_cast %158 : vector<1x64x64xf32> to vector<64x64xf32>
    %cst_85 = arith.constant dense<0.000000e+00> : vector<32x64xf32>
    %160 = tpu.matmul %151, %159, %cst_85 {dimension_numbers = #tpu.dot_dimension_numbers<[1], [0], [0], [1], [0, 0, 1, 1], [], []>} : vector<32x64xf32>, vector<64x64xf32>, vector<32x64xf32> -> vector<32x64xf32>
    %161 = arith.mulf %154, %2 : vector<32x64xf32>
    %cst_86 = arith.constant dense<0.000000e+00> : vector<32x64xf32>
    %162 = tpu.matmul %154, %4, %cst_86 {dimension_numbers = #tpu.dot_dimension_numbers<[1], [0], [0], [1], [0, 0, 1, 1], [], []>} : vector<32x64xf32>, vector<64x64xf32>, vector<32x64xf32> -> vector<32x64xf32>
    %163 = arith.mulf %162, %3 : vector<32x64xf32>
    %164 = arith.addf %161, %163 : vector<32x64xf32>
    %165 = arith.mulf %157, %2 : vector<32x64xf32>
    %cst_87 = arith.constant dense<0.000000e+00> : vector<32x64xf32>
    %166 = tpu.matmul %157, %4, %cst_87 {dimension_numbers = #tpu.dot_dimension_numbers<[1], [0], [0], [1], [0, 0, 1, 1], [], []>} : vector<32x64xf32>, vector<64x64xf32>, vector<32x64xf32> -> vector<32x64xf32>
    %167 = arith.mulf %166, %3 : vector<32x64xf32>
    %168 = arith.addf %165, %167 : vector<32x64xf32>
    %169 = vector.extract_strided_slice %164 {offsets = [0, 0], sizes = [32, 16], strides = [1, 1]} : vector<32x64xf32> to vector<32x16xf32>
    %170 = vector.extract_strided_slice %168 {offsets = [0, 0], sizes = [32, 16], strides = [1, 1]} : vector<32x64xf32> to vector<32x16xf32>
    %171 = vector.extract_strided_slice %160 {offsets = [0, 0], sizes = [32, 16], strides = [1, 1]} : vector<32x64xf32> to vector<32x16xf32>
    %cst_88 = arith.constant dense<0.000000e+00> : vector<32x32xf32>
    %172 = tpu.matmul %169, %170, %cst_88 {dimension_numbers = #tpu.dot_dimension_numbers<[1], [1], [0], [0], [0, 0, 1, 0], [], []>} : vector<32x16xf32>, vector<32x16xf32>, vector<32x32xf32> -> vector<32x32xf32>
    %173 = arith.addf %172, %1 : vector<32x32xf32>
    %cst_89 = arith.constant dense<0xFF800000> : vector<32xf32>
    %174 = vector.multi_reduction <maximumf>, %173, %cst_89 [1] : vector<32x32xf32> to vector<32xf32>
    %175 = vector.shape_cast %174 : vector<32xf32> to vector<32x1xf32>
    %176 = vector.broadcast %175 : vector<32x1xf32> to vector<32x32xf32>
    %177 = arith.subf %173, %176 : vector<32x32xf32>
    %178 = math.exp %177 : vector<32x32xf32>
    %cst_90 = arith.constant dense<0.000000e+00> : vector<32xf32>
    %179 = vector.multi_reduction <add>, %178, %cst_90 [1] : vector<32x32xf32> to vector<32xf32>
    %180 = vector.shape_cast %179 : vector<32xf32> to vector<32x1xf32>
    %181 = tpu.reciprocal %180 {approx = true} : vector<32x1xf32> -> vector<32x1xf32>
    %182 = vector.broadcast %181 : vector<32x1xf32> to vector<32x32xf32>
    %183 = arith.mulf %178, %182 : vector<32x32xf32>
    %cst_91 = arith.constant dense<0.000000e+00> : vector<32x16xf32>
    %184 = tpu.matmul %183, %171, %cst_91 {dimension_numbers = #tpu.dot_dimension_numbers<[1], [0], [0], [1], [0, 0, 1, 1], [], []>} : vector<32x32xf32>, vector<32x16xf32>, vector<32x16xf32> -> vector<32x16xf32>
    %185 = vector.extract_strided_slice %164 {offsets = [0, 16], sizes = [32, 16], strides = [1, 1]} : vector<32x64xf32> to vector<32x16xf32>
    %186 = vector.extract_strided_slice %168 {offsets = [0, 16], sizes = [32, 16], strides = [1, 1]} : vector<32x64xf32> to vector<32x16xf32>
    %187 = vector.extract_strided_slice %160 {offsets = [0, 16], sizes = [32, 16], strides = [1, 1]} : vector<32x64xf32> to vector<32x16xf32>
    %cst_92 = arith.constant dense<0.000000e+00> : vector<32x32xf32>
    %188 = tpu.matmul %185, %186, %cst_92 {dimension_numbers = #tpu.dot_dimension_numbers<[1], [1], [0], [0], [0, 0, 1, 0], [], []>} : vector<32x16xf32>, vector<32x16xf32>, vector<32x32xf32> -> vector<32x32xf32>
    %189 = arith.addf %188, %1 : vector<32x32xf32>
    %cst_93 = arith.constant dense<0xFF800000> : vector<32xf32>
    %190 = vector.multi_reduction <maximumf>, %189, %cst_93 [1] : vector<32x32xf32> to vector<32xf32>
    %191 = vector.shape_cast %190 : vector<32xf32> to vector<32x1xf32>
    %192 = vector.broadcast %191 : vector<32x1xf32> to vector<32x32xf32>
    %193 = arith.subf %189, %192 : vector<32x32xf32>
    %194 = math.exp %193 : vector<32x32xf32>
    %cst_94 = arith.constant dense<0.000000e+00> : vector<32xf32>
    %195 = vector.multi_reduction <add>, %194, %cst_94 [1] : vector<32x32xf32> to vector<32xf32>
    %196 = vector.shape_cast %195 : vector<32xf32> to vector<32x1xf32>
    %197 = tpu.reciprocal %196 {approx = true} : vector<32x1xf32> -> vector<32x1xf32>
    %198 = vector.broadcast %197 : vector<32x1xf32> to vector<32x32xf32>
    %199 = arith.mulf %194, %198 : vector<32x32xf32>
    %cst_95 = arith.constant dense<0.000000e+00> : vector<32x16xf32>
    %200 = tpu.matmul %199, %187, %cst_95 {dimension_numbers = #tpu.dot_dimension_numbers<[1], [0], [0], [1], [0, 0, 1, 1], [], []>} : vector<32x32xf32>, vector<32x16xf32>, vector<32x16xf32> -> vector<32x16xf32>
    %201 = vector.extract_strided_slice %164 {offsets = [0, 32], sizes = [32, 16], strides = [1, 1]} : vector<32x64xf32> to vector<32x16xf32>
    %202 = vector.extract_strided_slice %168 {offsets = [0, 32], sizes = [32, 16], strides = [1, 1]} : vector<32x64xf32> to vector<32x16xf32>
    %203 = vector.extract_strided_slice %160 {offsets = [0, 32], sizes = [32, 16], strides = [1, 1]} : vector<32x64xf32> to vector<32x16xf32>
    %cst_96 = arith.constant dense<0.000000e+00> : vector<32x32xf32>
    %204 = tpu.matmul %201, %202, %cst_96 {dimension_numbers = #tpu.dot_dimension_numbers<[1], [1], [0], [0], [0, 0, 1, 0], [], []>} : vector<32x16xf32>, vector<32x16xf32>, vector<32x32xf32> -> vector<32x32xf32>
    %205 = arith.addf %204, %1 : vector<32x32xf32>
    %cst_97 = arith.constant dense<0xFF800000> : vector<32xf32>
    %206 = vector.multi_reduction <maximumf>, %205, %cst_97 [1] : vector<32x32xf32> to vector<32xf32>
    %207 = vector.shape_cast %206 : vector<32xf32> to vector<32x1xf32>
    %208 = vector.broadcast %207 : vector<32x1xf32> to vector<32x32xf32>
    %209 = arith.subf %205, %208 : vector<32x32xf32>
    %210 = math.exp %209 : vector<32x32xf32>
    %cst_98 = arith.constant dense<0.000000e+00> : vector<32xf32>
    %211 = vector.multi_reduction <add>, %210, %cst_98 [1] : vector<32x32xf32> to vector<32xf32>
    %212 = vector.shape_cast %211 : vector<32xf32> to vector<32x1xf32>
    %213 = tpu.reciprocal %212 {approx = true} : vector<32x1xf32> -> vector<32x1xf32>
    %214 = vector.broadcast %213 : vector<32x1xf32> to vector<32x32xf32>
    %215 = arith.mulf %210, %214 : vector<32x32xf32>
    %cst_99 = arith.constant dense<0.000000e+00> : vector<32x16xf32>
    %216 = tpu.matmul %215, %203, %cst_99 {dimension_numbers = #tpu.dot_dimension_numbers<[1], [0], [0], [1], [0, 0, 1, 1], [], []>} : vector<32x32xf32>, vector<32x16xf32>, vector<32x16xf32> -> vector<32x16xf32>
    %217 = vector.extract_strided_slice %164 {offsets = [0, 48], sizes = [32, 16], strides = [1, 1]} : vector<32x64xf32> to vector<32x16xf32>
    %218 = vector.extract_strided_slice %168 {offsets = [0, 48], sizes = [32, 16], strides = [1, 1]} : vector<32x64xf32> to vector<32x16xf32>
    %219 = vector.extract_strided_slice %160 {offsets = [0, 48], sizes = [32, 16], strides = [1, 1]} : vector<32x64xf32> to vector<32x16xf32>
    %cst_100 = arith.constant dense<0.000000e+00> : vector<32x32xf32>
    %220 = tpu.matmul %217, %218, %cst_100 {dimension_numbers = #tpu.dot_dimension_numbers<[1], [1], [0], [0], [0, 0, 1, 0], [], []>} : vector<32x16xf32>, vector<32x16xf32>, vector<32x32xf32> -> vector<32x32xf32>
    %221 = arith.addf %220, %1 : vector<32x32xf32>
    %cst_101 = arith.constant dense<0xFF800000> : vector<32xf32>
    %222 = vector.multi_reduction <maximumf>, %221, %cst_101 [1] : vector<32x32xf32> to vector<32xf32>
    %223 = vector.shape_cast %222 : vector<32xf32> to vector<32x1xf32>
    %224 = vector.broadcast %223 : vector<32x1xf32> to vector<32x32xf32>
    %225 = arith.subf %221, %224 : vector<32x32xf32>
    %226 = math.exp %225 : vector<32x32xf32>
    %cst_102 = arith.constant dense<0.000000e+00> : vector<32xf32>
    %227 = vector.multi_reduction <add>, %226, %cst_102 [1] : vector<32x32xf32> to vector<32xf32>
    %228 = vector.shape_cast %227 : vector<32xf32> to vector<32x1xf32>
    %229 = tpu.reciprocal %228 {approx = true} : vector<32x1xf32> -> vector<32x1xf32>
    %230 = vector.broadcast %229 : vector<32x1xf32> to vector<32x32xf32>
    %231 = arith.mulf %226, %230 : vector<32x32xf32>
    %cst_103 = arith.constant dense<0.000000e+00> : vector<32x16xf32>
    %232 = tpu.matmul %231, %219, %cst_103 {dimension_numbers = #tpu.dot_dimension_numbers<[1], [0], [0], [1], [0, 0, 1, 1], [], []>} : vector<32x32xf32>, vector<32x16xf32>, vector<32x16xf32> -> vector<32x16xf32>
    %233 = tpu.concatenate %184, %200, %216, %232 in 1 : vector<32x16xf32>, vector<32x16xf32>, vector<32x16xf32>, vector<32x16xf32> -> vector<32x64xf32>
    %c1_104 = arith.constant 1 : index
    %c0_105 = arith.constant 0 : index
    %c0_106 = arith.constant 0 : index
    %234 = vector.load %arg10[%c1_104, %c0_105, %c0_106] : memref<2x64x64xf32, #tpu.memory_space<vmem>>, vector<1x64x64xf32>
    %235 = vector.shape_cast %234 : vector<1x64x64xf32> to vector<64x64xf32>
    %cst_107 = arith.constant dense<0.000000e+00> : vector<32x64xf32>
    %236 = tpu.matmul %233, %235, %cst_107 {dimension_numbers = #tpu.dot_dimension_numbers<[1], [0], [0], [1], [0, 0, 1, 1], [], []>} : vector<32x64xf32>, vector<64x64xf32>, vector<32x64xf32> -> vector<32x64xf32>
    %237 = arith.addf %137, %236 : vector<32x64xf32>
    %c1_108 = arith.constant 1 : index
    %c0_109 = arith.constant 0 : index
    %c0_110 = arith.constant 0 : index
    %238 = vector.load %arg11[%c1_108, %c0_109, %c0_110] : memref<2x1x64xf32, #tpu.memory_space<vmem>>, vector<1x1x64xf32>
    %239 = vector.shape_cast %238 : vector<1x1x64xf32> to vector<1x64xf32>
    %240 = arith.mulf %237, %237 : vector<32x64xf32>
    %cst_111 = arith.constant dense<0.000000e+00> : vector<32xf32>
    %241 = vector.multi_reduction <add>, %240, %cst_111 [1] : vector<32x64xf32> to vector<32xf32>
    %242 = vector.shape_cast %241 : vector<32xf32> to vector<32x1xf32>
    %cst_112 = arith.constant 6.400000e+01 : f32
    %243 = vector.broadcast %cst_112 : f32 to vector<32x1xf32>
    %244 = arith.divf %242, %243 : vector<32x1xf32>
    %cst_113 = arith.constant 9.99999974E-6 : f32
    %245 = vector.broadcast %cst_113 : f32 to vector<32x1xf32>
    %246 = arith.addf %244, %245 : vector<32x1xf32>
    %247 = math.rsqrt %246 : vector<32x1xf32>
    %248 = vector.broadcast %247 : vector<32x1xf32> to vector<32x64xf32>
    %249 = arith.mulf %237, %248 : vector<32x64xf32>
    %250 = vector.broadcast %239 : vector<1x64xf32> to vector<32x64xf32>
    %251 = arith.mulf %249, %250 : vector<32x64xf32>
    %c1_114 = arith.constant 1 : index
    %c0_115 = arith.constant 0 : index
    %c0_116 = arith.constant 0 : index
    %252 = vector.load %arg12[%c1_114, %c0_115, %c0_116] : memref<2x64x192xf32, #tpu.memory_space<vmem>>, vector<1x64x192xf32>
    %253 = vector.shape_cast %252 : vector<1x64x192xf32> to vector<64x192xf32>
    %cst_117 = arith.constant dense<0.000000e+00> : vector<32x192xf32>
    %254 = tpu.matmul %251, %253, %cst_117 {dimension_numbers = #tpu.dot_dimension_numbers<[1], [0], [0], [1], [0, 0, 1, 1], [], []>} : vector<32x64xf32>, vector<64x192xf32>, vector<32x192xf32> -> vector<32x192xf32>
    %c1_118 = arith.constant 1 : index
    %c0_119 = arith.constant 0 : index
    %c0_120 = arith.constant 0 : index
    %255 = vector.load %arg13[%c1_118, %c0_119, %c0_120] : memref<2x64x192xf32, #tpu.memory_space<vmem>>, vector<1x64x192xf32>
    %256 = vector.shape_cast %255 : vector<1x64x192xf32> to vector<64x192xf32>
    %cst_121 = arith.constant dense<0.000000e+00> : vector<32x192xf32>
    %257 = tpu.matmul %251, %256, %cst_121 {dimension_numbers = #tpu.dot_dimension_numbers<[1], [0], [0], [1], [0, 0, 1, 1], [], []>} : vector<32x64xf32>, vector<64x192xf32>, vector<32x192xf32> -> vector<32x192xf32>
    %cst_122 = arith.constant 5.000000e-01 : f32
    %258 = vector.broadcast %cst_122 : f32 to vector<32x192xf32>
    %259 = arith.mulf %258, %254 : vector<32x192xf32>
    %260 = math.tanh %259 : vector<32x192xf32>
    %cst_123 = arith.constant 5.000000e-01 : f32
    %261 = vector.broadcast %cst_123 : f32 to vector<32x192xf32>
    %262 = arith.mulf %261, %260 : vector<32x192xf32>
    %cst_124 = arith.constant 5.000000e-01 : f32
    %263 = vector.broadcast %cst_124 : f32 to vector<32x192xf32>
    %264 = arith.addf %262, %263 : vector<32x192xf32>
    %265 = arith.mulf %254, %264 : vector<32x192xf32>
    %266 = arith.mulf %265, %257 : vector<32x192xf32>
    %c1_125 = arith.constant 1 : index
    %c0_126 = arith.constant 0 : index
    %c0_127 = arith.constant 0 : index
    %267 = vector.load %arg14[%c1_125, %c0_126, %c0_127] : memref<2x192x64xf32, #tpu.memory_space<vmem>>, vector<1x192x64xf32>
    %268 = vector.shape_cast %267 : vector<1x192x64xf32> to vector<192x64xf32>
    %cst_128 = arith.constant dense<0.000000e+00> : vector<32x64xf32>
    %269 = tpu.matmul %266, %268, %cst_128 {dimension_numbers = #tpu.dot_dimension_numbers<[1], [0], [0], [1], [0, 0, 1, 1], [], []>} : vector<32x192xf32>, vector<192x64xf32>, vector<32x64xf32> -> vector<32x64xf32>
    %270 = arith.addf %237, %269 : vector<32x64xf32>
    %c0_129 = arith.constant 0 : index
    %c0_130 = arith.constant 0 : index
    %271 = vector.load %arg15[%c0_129, %c0_130] : memref<1x64xf32, #tpu.memory_space<vmem>>, vector<1x64xf32>
    %272 = arith.mulf %270, %270 : vector<32x64xf32>
    %cst_131 = arith.constant dense<0.000000e+00> : vector<32xf32>
    %273 = vector.multi_reduction <add>, %272, %cst_131 [1] : vector<32x64xf32> to vector<32xf32>
    %274 = vector.shape_cast %273 : vector<32xf32> to vector<32x1xf32>
    %cst_132 = arith.constant 6.400000e+01 : f32
    %275 = vector.broadcast %cst_132 : f32 to vector<32x1xf32>
    %276 = arith.divf %274, %275 : vector<32x1xf32>
    %cst_133 = arith.constant 9.99999974E-6 : f32
    %277 = vector.broadcast %cst_133 : f32 to vector<32x1xf32>
    %278 = arith.addf %276, %277 : vector<32x1xf32>
    %279 = math.rsqrt %278 : vector<32x1xf32>
    %280 = vector.broadcast %279 : vector<32x1xf32> to vector<32x64xf32>
    %281 = arith.mulf %270, %280 : vector<32x64xf32>
    %282 = vector.broadcast %271 : vector<1x64xf32> to vector<32x64xf32>
    %283 = arith.mulf %281, %282 : vector<32x64xf32>
    %c0_134 = arith.constant 0 : index
    %c0_135 = arith.constant 0 : index
    %284 = vector.load %arg17[%c0_134, %c0_135] : memref<32x64xf32, #tpu.memory_space<vmem>>, vector<32x64xf32>
    tpu.vector_store %arg17[%c0_134, %c0_135], %283 {strides = array<i32>} : memref<32x64xf32, #tpu.memory_space<vmem>>, vector<32x64xf32>,
    %285 = vector.extract_strided_slice %283 {offsets = [15, 0], sizes = [1, 64], strides = [1, 1]} : vector<32x64xf32> to vector<1x64xf32>
    %286 = vector.extract_strided_slice %283 {offsets = [31, 0], sizes = [1, 64], strides = [1, 1]} : vector<32x64xf32> to vector<1x64xf32>
    %287 = tpu.concatenate %285, %286 in 0 : vector<1x64xf32>, vector<1x64xf32> -> vector<2x64xf32>
    %c0_136 = arith.constant 0 : index
    %c0_137 = arith.constant 0 : index
    %288 = vector.load %arg16[%c0_136, %c0_137] : memref<64x128xf32, #tpu.memory_space<vmem>>, vector<64x128xf32>
    %cst_138 = arith.constant dense<0.000000e+00> : vector<2x128xf32>
    %289 = tpu.matmul %287, %288, %cst_138 {dimension_numbers = #tpu.dot_dimension_numbers<[1], [0], [0], [1], [0, 0, 1, 1], [], []>} : vector<2x64xf32>, vector<64x128xf32>, vector<2x128xf32> -> vector<2x128xf32>
    %c0_139 = arith.constant 0 : index
    %c0_140 = arith.constant 0 : index
    %290 = vector.load %arg18[%c0_139, %c0_140] : memref<2x128xf32, #tpu.memory_space<vmem>>, vector<2x128xf32>
    tpu.vector_store %arg18[%c0_139, %c0_140], %289 {strides = array<i32>} : memref<2x128xf32, #tpu.memory_space<vmem>>, vector<2x128xf32>,
    return
  }
  func.func @transform_0(%arg0: i32) -> (i32, i32) {
    %c0_i32 = arith.constant 0 : i32
    %c0_i32_0 = arith.constant 0 : i32
    %c0_i32_1 = arith.constant 0 : i32
    return %c0_i32, %c0_i32_0 : i32, i32
  }
  func.func @transform_1(%arg0: i32) -> (i32, i32) {
    %c0_i32 = arith.constant 0 : i32
    %c0_i32_0 = arith.constant 0 : i32
    %c0_i32_1 = arith.constant 0 : i32
    return %c0_i32, %c0_i32_0 : i32, i32
  }
  func.func @transform_2(%arg0: i32) -> (i32, i32) {
    %c0_i32 = arith.constant 0 : i32
    %c0_i32_0 = arith.constant 0 : i32
    %c0_i32_1 = arith.constant 0 : i32
    return %c0_i32, %c0_i32_0 : i32, i32
  }
  func.func @transform_3(%arg0: i32) -> (i32, i32) {
    %c0_i32 = arith.constant 0 : i32
    %c0_i32_0 = arith.constant 0 : i32
    %c0_i32_1 = arith.constant 0 : i32
    return %c0_i32, %c0_i32_0 : i32, i32
  }
  func.func @transform_4(%arg0: i32) -> (i32, i32) {
    %c0_i32 = arith.constant 0 : i32
    %c0_i32_0 = arith.constant 0 : i32
    %c0_i32_1 = arith.constant 0 : i32
    return %c0_i32, %c0_i32_0 : i32, i32
  }
  func.func @transform_5(%arg0: i32) -> (i32, i32, i32) {
    %c0_i32 = arith.constant 0 : i32
    %c0_i32_0 = arith.constant 0 : i32
    %c0_i32_1 = arith.constant 0 : i32
    %c0_i32_2 = arith.constant 0 : i32
    return %c0_i32, %c0_i32_0, %c0_i32_1 : i32, i32, i32
  }
  func.func @transform_6(%arg0: i32) -> (i32, i32, i32) {
    %c0_i32 = arith.constant 0 : i32
    %c0_i32_0 = arith.constant 0 : i32
    %c0_i32_1 = arith.constant 0 : i32
    %c0_i32_2 = arith.constant 0 : i32
    return %c0_i32, %c0_i32_0, %c0_i32_1 : i32, i32, i32
  }
  func.func @transform_7(%arg0: i32) -> (i32, i32, i32) {
    %c0_i32 = arith.constant 0 : i32
    %c0_i32_0 = arith.constant 0 : i32
    %c0_i32_1 = arith.constant 0 : i32
    %c0_i32_2 = arith.constant 0 : i32
    return %c0_i32, %c0_i32_0, %c0_i32_1 : i32, i32, i32
  }
  func.func @transform_8(%arg0: i32) -> (i32, i32, i32) {
    %c0_i32 = arith.constant 0 : i32
    %c0_i32_0 = arith.constant 0 : i32
    %c0_i32_1 = arith.constant 0 : i32
    %c0_i32_2 = arith.constant 0 : i32
    return %c0_i32, %c0_i32_0, %c0_i32_1 : i32, i32, i32
  }
  func.func @transform_9(%arg0: i32) -> (i32, i32, i32) {
    %c0_i32 = arith.constant 0 : i32
    %c0_i32_0 = arith.constant 0 : i32
    %c0_i32_1 = arith.constant 0 : i32
    %c0_i32_2 = arith.constant 0 : i32
    return %c0_i32, %c0_i32_0, %c0_i32_1 : i32, i32, i32
  }
  func.func @transform_10(%arg0: i32) -> (i32, i32, i32) {
    %c0_i32 = arith.constant 0 : i32
    %c0_i32_0 = arith.constant 0 : i32
    %c0_i32_1 = arith.constant 0 : i32
    %c0_i32_2 = arith.constant 0 : i32
    return %c0_i32, %c0_i32_0, %c0_i32_1 : i32, i32, i32
  }
  func.func @transform_11(%arg0: i32) -> (i32, i32, i32) {
    %c0_i32 = arith.constant 0 : i32
    %c0_i32_0 = arith.constant 0 : i32
    %c0_i32_1 = arith.constant 0 : i32
    %c0_i32_2 = arith.constant 0 : i32
    return %c0_i32, %c0_i32_0, %c0_i32_1 : i32, i32, i32
  }
  func.func @transform_12(%arg0: i32) -> (i32, i32, i32) {
    %c0_i32 = arith.constant 0 : i32
    %c0_i32_0 = arith.constant 0 : i32
    %c0_i32_1 = arith.constant 0 : i32
    %c0_i32_2 = arith.constant 0 : i32
    return %c0_i32, %c0_i32_0, %c0_i32_1 : i32, i32, i32
  }
  func.func @transform_13(%arg0: i32) -> (i32, i32, i32) {
    %c0_i32 = arith.constant 0 : i32
    %c0_i32_0 = arith.constant 0 : i32
    %c0_i32_1 = arith.constant 0 : i32
    %c0_i32_2 = arith.constant 0 : i32
    return %c0_i32, %c0_i32_0, %c0_i32_1 : i32, i32, i32
  }
  func.func @transform_14(%arg0: i32) -> (i32, i32) {
    %c0_i32 = arith.constant 0 : i32
    %c0_i32_0 = arith.constant 0 : i32
    %c0_i32_1 = arith.constant 0 : i32
    return %c0_i32, %c0_i32_0 : i32, i32
  }
  func.func @transform_15(%arg0: i32) -> (i32, i32) {
    %c0_i32 = arith.constant 0 : i32
    %c0_i32_0 = arith.constant 0 : i32
    %c0_i32_1 = arith.constant 0 : i32
    return %c0_i32, %c0_i32_0 : i32, i32
  }
  func.func @transform_16(%arg0: i32) -> (i32, i32) {
    %c0_i32 = arith.constant 0 : i32
    %c0_i32_0 = arith.constant 0 : i32
    %c0_i32_1 = arith.constant 0 : i32
    return %c0_i32, %c0_i32_0 : i32, i32
  }
  func.func @transform_17(%arg0: i32) -> (i32, i32) {
    %c0_i32 = arith.constant 0 : i32
    %c0_i32_0 = arith.constant 0 : i32
    %c0_i32_1 = arith.constant 0 : i32
    return %c0_i32, %c0_i32_0 : i32, i32
  }
}

</mosaic_0001>

<llo_original>
// kernel: tpu_custom_call.1
$region0: #{tpu_custom_call.1}
  #allocation0 [shape = 'u32[]', space=smem, size = 0x4, offset = 0x4, fixed_abs, tag = 'smem constant byte address 0x4 - core index']
  #allocation1 [shape = 'u32[144,128]{1,0:T(1,128)}', space=vmem, size = 0x12000, scoped, tag = 'internal scratch']
  %s0 = inlined_call_operand.hbm [shape: f32[32,64], index: 0, kind: input, shape index: {}]
  %s1 = inlined_call_operand.hbm [shape: f32[32,32], index: 1, kind: input, shape index: {}]
  %s2 = inlined_call_operand.hbm [shape: f32[32,64], index: 2, kind: input, shape index: {}]
  %s3 = inlined_call_operand.hbm [shape: f32[32,64], index: 3, kind: input, shape index: {}]
  %s4 = inlined_call_operand.hbm [shape: f32[64,64], index: 4, kind: input, shape index: {}]
  %s5 = inlined_call_operand.vmem [shape: f32[2,1,64], index: 5, kind: input, shape index: {}]
  %s6 = inlined_call_operand.vmem [shape: f32[2,64,64], index: 6, kind: input, shape index: {}]
  %s7 = inlined_call_operand.hbm [shape: f32[2,64,64], index: 7, kind: input, shape index: {}]
  %s8 = inlined_call_operand.hbm [shape: f32[2,64,64], index: 8, kind: input, shape index: {}]
  %s9 = inlined_call_operand.hbm [shape: f32[2,64,64], index: 9, kind: input, shape index: {}]
  %s10 = inlined_call_operand.vmem [shape: f32[2,1,64], index: 10, kind: input, shape index: {}]
  %s11 = inlined_call_operand.vmem [shape: f32[2,64,192], index: 11, kind: input, shape index: {}]
  %s12 = inlined_call_operand.vmem [shape: f32[2,64,192], index: 12, kind: input, shape index: {}]
  %s13 = inlined_call_operand.vmem [shape: f32[2,192,64], index: 13, kind: input, shape index: {}]
  %s14 = inlined_call_operand.vmem [shape: f32[1,64], index: 14, kind: input, shape index: {}]
  %s15 = inlined_call_operand.hbm [shape: f32[64,128], index: 15, kind: input, shape index: {}]
  %s16 = inlined_call_operand.hbm [shape: f32[32,64], index: 16, kind: output, shape index: {0}]
  %s17 = inlined_call_operand.hbm [shape: f32[2,128], index: 17, kind: output, shape index: {1}]
  %18 = xla_tuple %s16, %s17
  %s19 = sld [smem:[#allocation0]]
  $region118: #{tpu_custom_call.1} parent=0
    _
  %s21 = ssub.s32 1, %s19
  %s22 = scalar_select 0, %s21, %s19
  $region1: #{tpu_custom_call.1} parent=0
    #allocation2 [shape = 'u8[16384]{0}', space=vmem, size = 0x4000, scoped, tag = 'input window, operand 0, single buffered']
    #allocation3 [shape = 's32[1]{0}', space=sflag, size = 0x4, scoped, tag = 'scoped memory for tpu_custom_call.1']
    #allocation4 [shape = 's32[1]{0}', space=sflag, size = 0x4, scoped, tag = 'scoped memory for tpu_custom_call.1']
    #allocation5 [shape = 'u8[16384]{0}', space=vmem, size = 0x4000, scoped, tag = 'input window, operand 1, single buffered']
    #allocation6 [shape = 's32[1]{0}', space=sflag, size = 0x4, scoped, tag = 'scoped memory for tpu_custom_call.1']
    #allocation7 [shape = 'u8[16384]{0}', space=vmem, size = 0x4000, scoped, tag = 'input window, operand 2, single buffered']
    #allocation8 [shape = 'u8[16384]{0}', space=vmem, size = 0x4000, scoped, tag = 'input window, operand 3, single buffered']
    #allocation9 [shape = 's32[1]{0}', space=sflag, size = 0x4, scoped, tag = 'scoped memory for tpu_custom_call.1']
    #allocation10 [shape = 'u8[32768]{0}', space=vmem, size = 0x8000, scoped, tag = 'input window, operand 4, single buffered']
    #allocation11 [shape = 'u8[65536]{0}', space=vmem, size = 0x10000, scoped, tag = 'input window, operand 7, single buffered']
    #allocation12 [shape = 's32[1]{0}', space=sflag, size = 0x4, scoped, tag = 'scoped memory for tpu_custom_call.1']
    #allocation13 [shape = 'u8[65536]{0}', space=vmem, size = 0x10000, scoped, tag = 'input window, operand 8, single buffered']
    #allocation14 [shape = 'u8[65536]{0}', space=vmem, size = 0x10000, scoped, tag = 'input window, operand 9, single buffered']
    #allocation15 [shape = 's32[1]{0}', space=sflag, size = 0x4, scoped, tag = 'scoped memory for tpu_custom_call.1']
    #allocation16 [shape = 'u8[32768]{0}', space=vmem, size = 0x8000, scoped, tag = 'input window, operand 15, single buffered']
    #allocation17 [shape = 'u8[16384]{0}', space=vmem, size = 0x4000, scoped, tag = 'output window, operand 0, single buffered']
    #allocation18 [shape = 'u8[1024]{0}', space=vmem, size = 0x400, scoped, tag = 'output window, operand 1, single buffered']
    #allocation19 [shape = 's32[1]{0}', space=sflag, size = 0x4, scoped, tag = 'scoped memory for tpu_custom_call.1']
    %23 = vsyncpa [#allocation3], 0
    %24 = vsyncpa [#allocation6], 0
    %25 = vsyncpa [#allocation9], 0
    %26 = vsyncpa [#allocation12], 0
    %27 = vsyncpa [#allocation15], 0
    %28 = vsyncpa [#allocation4], 0
    %29 = vsyncpa [#allocation19], 0
    // Predicated region
    $region2: #{tpu_custom_call.1} parent=1 // pred_check
      _
    $region3: #{tpu_custom_call.1} parent=1 // pred_check_branch
      %31 = sbr.rel (0) target = $region5
    $region4: #{tpu_custom_call.1} parent=1 // pred_region
      %s33 = ssub.s32 512, 512
      %34 = vsyncadd [#allocation3], %s33
      %s35 = sshll.u32 [#allocation2], 4
      %s36 = int_to_ptr.vmem [resolvable:$true] %s35
      %41 = dma.hbm_to_vmem [thread:$0]  %s0, 512, %s36, [#allocation3], 128, 128, 8
    $region5: #{tpu_custom_call.1} parent=1 // pred_fallthru
      _
    // Predicated region
    $region6: #{tpu_custom_call.1} parent=1 // pred_check
      _
    $region7: #{tpu_custom_call.1} parent=1 // pred_check_branch
      %43 = sbr.rel (0) target = $region9
    $region8: #{tpu_custom_call.1} parent=1 // pred_region
      %s45 = ssub.s32 512, 512
      %46 = vsyncadd [#allocation6], %s45
      %s47 = sshll.u32 [#allocation5], 4
      %s48 = int_to_ptr.vmem [resolvable:$true] %s47
      %53 = dma.hbm_to_vmem [thread:$0]  %s1, 512, %s48, [#allocation6], 128, 128, 8
    $region9: #{tpu_custom_call.1} parent=1 // pred_fallthru
      _
    // Predicated region
    $region10: #{tpu_custom_call.1} parent=1 // pred_check
      _
    $region11: #{tpu_custom_call.1} parent=1 // pred_check_branch
      %55 = sbr.rel (0) target = $region13
    $region12: #{tpu_custom_call.1} parent=1 // pred_region
      %s57 = ssub.s32 512, 512
      %58 = vsyncadd [#allocation6], %s57
      %s59 = sshll.u32 [#allocation7], 4
      %s60 = int_to_ptr.vmem [resolvable:$true] %s59
      %65 = dma.hbm_to_vmem [thread:$0]  %s2, 512, %s60, [#allocation6], 128, 128, 8
    $region13: #{tpu_custom_call.1} parent=1 // pred_fallthru
      _
    // Predicated region
    $region14: #{tpu_custom_call.1} parent=1 // pred_check
      _
    $region15: #{tpu_custom_call.1} parent=1 // pred_check_branch
      %67 = sbr.rel (0) target = $region17
    $region16: #{tpu_custom_call.1} parent=1 // pred_region
      %s69 = ssub.s32 512, 512
      %70 = vsyncadd [#allocation9], %s69
      %s71 = sshll.u32 [#allocation8], 4
      %s72 = int_to_ptr.vmem [resolvable:$true] %s71
      %77 = dma.hbm_to_vmem [thread:$0]  %s3, 512, %s72, [#allocation9], 128, 128, 8
    $region17: #{tpu_custom_call.1} parent=1 // pred_fallthru
      _
    // Predicated region
    $region18: #{tpu_custom_call.1} parent=1 // pred_check
      _
    $region19: #{tpu_custom_call.1} parent=1 // pred_check_branch
      %79 = sbr.rel (0) target = $region21
    $region20: #{tpu_custom_call.1} parent=1 // pred_region
      %s81 = ssub.s32 1024, 1024
      %82 = vsyncadd [#allocation9], %s81
      %s83 = sshll.u32 [#allocation10], 4
      %s84 = int_to_ptr.vmem [resolvable:$true] %s83
      %89 = dma.hbm_to_vmem [thread:$0]  %s4, 1024, %s84, [#allocation9], 128, 128, 8
    $region21: #{tpu_custom_call.1} parent=1 // pred_fallthru
      _
    // Predicated region
    $region22: #{tpu_custom_call.1} parent=1 // pred_check
      _
    $region23: #{tpu_custom_call.1} parent=1 // pred_check_branch
      %91 = sbr.rel (0) target = $region25
    $region24: #{tpu_custom_call.1} parent=1 // pred_region
      _
    $region25: #{tpu_custom_call.1} parent=1 // pred_fallthru
      _
    // Predicated region
    $region26: #{tpu_custom_call.1} parent=1 // pred_check
      _
    $region27: #{tpu_custom_call.1} parent=1 // pred_check_branch
      %93 = sbr.rel (0) target = $region29
    $region28: #{tpu_custom_call.1} parent=1 // pred_region
      _
    $region29: #{tpu_custom_call.1} parent=1 // pred_fallthru
      _
    // Predicated region
    $region30: #{tpu_custom_call.1} parent=1 // pred_check
      _
    $region31: #{tpu_custom_call.1} parent=1 // pred_check_branch
      %95 = sbr.rel (0) target = $region33
    $region32: #{tpu_custom_call.1} parent=1 // pred_region
      %s97 = ssub.s32 2048, 2048
      %98 = vsyncadd [#allocation12], %s97
      %s99 = sshll.u32 [#allocation11], 4
      %s100 = int_to_ptr.vmem [resolvable:$true] %s99
      %105 = dma.hbm_to_vmem [thread:$0]  %s7, 2048, %s100, [#allocation12], 128, 128, 8
    $region33: #{tpu_custom_call.1} parent=1 // pred_fallthru
      _
    // Predicated region
    $region34: #{tpu_custom_call.1} parent=1 // pred_check
      _
    $region35: #{tpu_custom_call.1} parent=1 // pred_check_branch
      %107 = sbr.rel (0) target = $region37
    $region36: #{tpu_custom_call.1} parent=1 // pred_region
      %s109 = ssub.s32 2048, 2048
      %110 = vsyncadd [#allocation12], %s109
      %s111 = sshll.u32 [#allocation13], 4
      %s112 = int_to_ptr.vmem [resolvable:$true] %s111
      %117 = dma.hbm_to_vmem [thread:$0]  %s8, 2048, %s112, [#allocation12], 128, 128, 8
    $region37: #{tpu_custom_call.1} parent=1 // pred_fallthru
      _
    // Predicated region
    $region38: #{tpu_custom_call.1} parent=1 // pred_check
      _
    $region39: #{tpu_custom_call.1} parent=1 // pred_check_branch
      %119 = sbr.rel (0) target = $region41
    $region40: #{tpu_custom_call.1} parent=1 // pred_region
      %s121 = ssub.s32 2048, 2048
      %122 = vsyncadd [#allocation15], %s121
      %s123 = sshll.u32 [#allocation14], 4
      %s124 = int_to_ptr.vmem [resolvable:$true] %s123
      %129 = dma.hbm_to_vmem [thread:$0]  %s9, 2048, %s124, [#allocation15], 128, 128, 8
    $region41: #{tpu_custom_call.1} parent=1 // pred_fallthru
      _
    // Predicated region
    $region42: #{tpu_custom_call.1} parent=1 // pred_check
      _
    $region43: #{tpu_custom_call.1} parent=1 // pred_check_branch
      %131 = sbr.rel (0) target = $region45
    $region44: #{tpu_custom_call.1} parent=1 // pred_region
      _
    $region45: #{tpu_custom_call.1} parent=1 // pred_fallthru
      _
    // Predicated region
    $region46: #{tpu_custom_call.1} parent=1 // pred_check
      _
    $region47: #{tpu_custom_call.1} parent=1 // pred_check_branch
      %133 = sbr.rel (0) target = $region49
    $region48: #{tpu_custom_call.1} parent=1 // pred_region
      _
    $region49: #{tpu_custom_call.1} parent=1 // pred_fallthru
      _
    // Predicated region
    $region50: #{tpu_custom_call.1} parent=1 // pred_check
      _
    $region51: #{tpu_custom_call.1} parent=1 // pred_check_branch
      %135 = sbr.rel (0) target = $region53
    $region52: #{tpu_custom_call.1} parent=1 // pred_region
      _
    $region53: #{tpu_custom_call.1} parent=1 // pred_fallthru
      _
    // Predicated region
    $region54: #{tpu_custom_call.1} parent=1 // pred_check
      _
    $region55: #{tpu_custom_call.1} parent=1 // pred_check_branch
      %137 = sbr.rel (0) target = $region57
    $region56: #{tpu_custom_call.1} parent=1 // pred_region
      _
    $region57: #{tpu_custom_call.1} parent=1 // pred_fallthru
      _
    // Predicated region
    $region58: #{tpu_custom_call.1} parent=1 // pred_check
      _
    $region59: #{tpu_custom_call.1} parent=1 // pred_check_branch
      %139 = sbr.rel (0) target = $region61
    $region60: #{tpu_custom_call.1} parent=1 // pred_region
      _
    $region61: #{tpu_custom_call.1} parent=1 // pred_fallthru
      _
    // Predicated region
    $region62: #{tpu_custom_call.1} parent=1 // pred_check
      _
    $region63: #{tpu_custom_call.1} parent=1 // pred_check_branch
      %141 = sbr.rel (0) target = $region65
    $region64: #{tpu_custom_call.1} parent=1 // pred_region
      %s143 = ssub.s32 1024, 1024
      %144 = vsyncadd [#allocation15], %s143
      %s145 = sshll.u32 [#allocation16], 4
      %s146 = int_to_ptr.vmem [resolvable:$true] %s145
      %151 = dma.hbm_to_vmem [thread:$0]  %s15, 1024, %s146, [#allocation15], 128, 128, 8
    $region65: #{tpu_custom_call.1} parent=1 // pred_fallthru
      _
    // Predicated region
    $region66: #{tpu_custom_call.1} parent=1 // pred_check
      _
    $region67: #{tpu_custom_call.1} parent=1 // pred_check_branch
      %153 = sbr.rel (0) target = $region69
    $region68: #{tpu_custom_call.1} parent=1 // pred_region
      %154 = dma.done [#allocation3], 512
    $region69: #{tpu_custom_call.1} parent=1 // pred_fallthru
      _
    // Predicated region
    $region70: #{tpu_custom_call.1} parent=1 // pred_check
      _
    $region71: #{tpu_custom_call.1} parent=1 // pred_check_branch
      %156 = sbr.rel (0) target = $region73
    $region72: #{tpu_custom_call.1} parent=1 // pred_region
      %157 = dma.done [#allocation6], 512
    $region73: #{tpu_custom_call.1} parent=1 // pred_fallthru
      _
    // Predicated region
    $region74: #{tpu_custom_call.1} parent=1 // pred_check
      _
    $region75: #{tpu_custom_call.1} parent=1 // pred_check_branch
      %159 = sbr.rel (0) target = $region77
    $region76: #{tpu_custom_call.1} parent=1 // pred_region
      %160 = dma.done [#allocation6], 512
    $region77: #{tpu_custom_call.1} parent=1 // pred_fallthru
      _
    // Predicated region
    $region78: #{tpu_custom_call.1} parent=1 // pred_check
      _
    $region79: #{tpu_custom_call.1} parent=1 // pred_check_branch
      %162 = sbr.rel (0) target = $region81
    $region80: #{tpu_custom_call.1} parent=1 // pred_region
      %163 = dma.done [#allocation9], 512
    $region81: #{tpu_custom_call.1} parent=1 // pred_fallthru
      _
    // Predicated region
    $region82: #{tpu_custom_call.1} parent=1 // pred_check
      _
    $region83: #{tpu_custom_call.1} parent=1 // pred_check_branch
      %165 = sbr.rel (0) target = $region85
    $region84: #{tpu_custom_call.1} parent=1 // pred_region
      %166 = dma.done [#allocation9], 1024
    $region85: #{tpu_custom_call.1} parent=1 // pred_fallthru
      _
    // Predicated region
    $region86: #{tpu_custom_call.1} parent=1 // pred_check
      _
    $region87: #{tpu_custom_call.1} parent=1 // pred_check_branch
      %168 = sbr.rel (0) target = $region89
    $region88: #{tpu_custom_call.1} parent=1 // pred_region
      %169 = dma.done [#allocation12], 2048
    $region89: #{tpu_custom_call.1} parent=1 // pred_fallthru
      _
    // Predicated region
    $region90: #{tpu_custom_call.1} parent=1 // pred_check
      _
    $region91: #{tpu_custom_call.1} parent=1 // pred_check_branch
      %171 = sbr.rel (0) target = $region93
    $region92: #{tpu_custom_call.1} parent=1 // pred_region
      %172 = dma.done [#allocation12], 2048
    $region93: #{tpu_custom_call.1} parent=1 // pred_fallthru
      _
    // Predicated region
    $region94: #{tpu_custom_call.1} parent=1 // pred_check
      _
    $region95: #{tpu_custom_call.1} parent=1 // pred_check_branch
      %174 = sbr.rel (0) target = $region97
    $region96: #{tpu_custom_call.1} parent=1 // pred_region
      %175 = dma.done [#allocation15], 2048
    $region97: #{tpu_custom_call.1} parent=1 // pred_fallthru
      _
    // Predicated region
    $region98: #{tpu_custom_call.1} parent=1 // pred_check
      _
    $region99: #{tpu_custom_call.1} parent=1 // pred_check_branch
      %177 = sbr.rel (0) target = $region101
    $region100: #{tpu_custom_call.1} parent=1 // pred_region
      %178 = dma.done [#allocation15], 1024
    $region101: #{tpu_custom_call.1} parent=1 // pred_fallthru
      _
    %v179 = vld [vmem:[#allocation2] sm:$0xff]
    %v180 = vld [vmem:[#allocation2 + $0x8] sm:$0xff]
    %v181 = vld [vmem:[#allocation2 + $0x10] sm:$0xff]
    %v182 = vld [vmem:[#allocation2 + $0x18] sm:$0xff]
    %v183 = vld [vmem:[#allocation5] sm:$0xff]
    %v184 = vld [vmem:[#allocation5 + $0x8] sm:$0xff]
    %v185 = vld [vmem:[#allocation5 + $0x10] sm:$0xff]
    %v186 = vld [vmem:[#allocation5 + $0x18] sm:$0xff]
    %v187 = vld [vmem:[#allocation7] sm:$0xff]
    %v188 = vld [vmem:[#allocation7 + $0x8] sm:$0xff]
    %v189 = vld [vmem:[#allocation7 + $0x10] sm:$0xff]
    %v190 = vld [vmem:[#allocation7 + $0x18] sm:$0xff]
    %v191 = vld [vmem:[#allocation8] sm:$0xff]
    %v192 = vld [vmem:[#allocation8 + $0x8] sm:$0xff]
    %v193 = vld [vmem:[#allocation8 + $0x10] sm:$0xff]
    %v194 = vld [vmem:[#allocation8 + $0x18] sm:$0xff]
    %v195 = vld [vmem:[#allocation10] sm:$0xff]
    %v196 = vld [vmem:[#allocation10 + $0x8] sm:$0xff]
    %v197 = vld [vmem:[#allocation10 + $0x10] sm:$0xff]
    %v198 = vld [vmem:[#allocation10 + $0x18] sm:$0xff]
    %v199 = vld [vmem:[#allocation10 + $0x20] sm:$0xff]
    %v200 = vld [vmem:[#allocation10 + $0x28] sm:$0xff]
    %v201 = vld [vmem:[#allocation10 + $0x30] sm:$0xff]
    %v202 = vld [vmem:[#allocation10 + $0x38] sm:$0xff]
    %v203 = vld [vmem:[%s5] sm:$0x1]
    %v204 = vmul.f32 %v179, %v179
    %v205 = vmul.f32 %v180, %v180
    %v206 = vmul.f32 %v181, %v181
    %v207 = vmul.f32 %v182, %v182
    %vm208 = vcmask 523264
    %v209 = vsel %vm208, %v204, 0.0
    %210 = vadd.xlane.f32.xlu0 %v209
    %v211 = vpop.xlane.xlu0 %210
    %v212 = vsel %vm208, %v205, 0.0
    %213 = vadd.xlane.f32.xlu0 %v212
    %v214 = vpop.xlane.xlu0 %213
    %v215 = vsel %vm208, %v206, 0.0
    %216 = vadd.xlane.f32.xlu0 %v215
    %v217 = vpop.xlane.xlu0 %216
    %v218 = vsel %vm208, %v207, 0.0
    %219 = vadd.xlane.f32.xlu0 %v218
    %v220 = vpop.xlane.xlu0 %219
    %v221 = vrcp.pop 64.0
    %v222 = vmul.f32 %v211, %v221
    %v223 = vmul.f32 %v214, %v221
    %v224 = vmul.f32 %v217, %v221
    %v225 = vmul.f32 %v220, %v221
    %v226 = vadd.f32 %v222, 1e-05
    %v227 = vadd.f32 %v223, 1e-05
    %v228 = vadd.f32 %v224, 1e-05
    %v229 = vadd.f32 %v225, 1e-05
    %v230 = vrsqrt.pop %v226
    %v231 = vrsqrt.pop %v227
    %v232 = vrsqrt.pop %v228
    %v233 = vrsqrt.pop %v229
    %v234 = vmul.f32 %v179, %v230
    %v235 = vmul.f32 %v180, %v231
    %v236 = vmul.f32 %v181, %v232
    %v237 = vmul.f32 %v182, %v233
    %v239 = vlaneseq
    %v240 = vshrl.u32 %v239, 7
    %v241 = vsub.s32 0, %v240
    %v242 = vrot.slane %v203, %v241
    %v244 = vmul.f32 %v234, %v242
    %v245 = vmul.f32 %v235, %v242
    %v246 = vmul.f32 %v236, %v242
    %v247 = vmul.f32 %v237, %v242
    %v248 = vld [vmem:[%s6] sm:$0xff]
    %v249 = vld [vmem:[%s6 + $0x8] sm:$0xff]
    %v250 = vld [vmem:[%s6 + $0x10] sm:$0xff]
    %v251 = vld [vmem:[%s6 + $0x18] sm:$0xff]
    %v252 = vld [vmem:[%s6 + $0x20] sm:$0xff]
    %v253 = vld [vmem:[%s6 + $0x28] sm:$0xff]
    %v254 = vld [vmem:[%s6 + $0x30] sm:$0xff]
    %v255 = vld [vmem:[%s6 + $0x38] sm:$0xff]
    %v257 = vsel %vm208, %v244, 0
    %v260 = vsel %vm208, %v245, 0
    %v263 = vsel %vm208, %v246, 0
    %v266 = vsel %vm208, %v247, 0
    %268 = vmatprep.subr.mxu0 0.0
    %269 = vmatpush1.msra.mxu0 0.0
    %270 = vmatprep.subr.mxu0 0.0
    %271 = vmatpush1.msra.mxu0 0.0
    %272 = vmatprep.subr.mxu0 0.0
    %273 = vmatpush1.msra.mxu0 0.0
    %274 = vmatprep.subr.mxu0 0.0
    %275 = vmatpush1.msra.mxu0 0.0
    %276 = vmatprep.subr.mxu0 0.0
    %277 = vmatpush1.msra.mxu0 0.0
    %278 = vmatprep.subr.mxu0 0.0
    %279 = vmatpush1.msra.mxu0 0.0
    %280 = vmatprep.subr.mxu0 0.0
    %281 = vmatpush1.msra.mxu0 0.0
    %282 = vmatprep.subr.mxu0 0.0
    %283 = vmatpush1.msra.mxu0 0.0
    %284 = vmatprep.subr.mxu0 0.0
    %285 = vmatpush1.msra.mxu0 %v255
    %286 = vmatprep.subr.mxu0 0.0
    %287 = vmatpush1.msra.mxu0 %v254
    %288 = vmatprep.subr.mxu0 0.0
    %289 = vmatpush1.msra.mxu0 %v253
    %290 = vmatprep.subr.mxu0 0.0
    %291 = vmatpush1.msra.mxu0 %v252
    %292 = vmatprep.subr.mxu0 0.0
    %293 = vmatpush1.msra.mxu0 %v251
    %294 = vmatprep.subr.mxu0 0.0
    %295 = vmatpush1.msra.mxu0 %v250
    %296 = vmatprep.subr.mxu0 0.0
    %297 = vmatpush1.msra.mxu0 %v249
    %298 = vmatprep.subr.mxu0 0.0
    %299 = vmatpush1.msra.mxu0 %v248
    %300 = vmatprep.subr.mxu0 0.0
    %301 = vmatpush2.msra.mxu0 0.0
    %302 = vmatprep.subr.mxu0 0.0
    %303 = vmatpush2.msra.mxu0 0.0
    %304 = vmatprep.subr.mxu0 0.0
    %305 = vmatpush2.msra.mxu0 0.0
    %306 = vmatprep.subr.mxu0 0.0
    %307 = vmatpush2.msra.mxu0 0.0
    %308 = vmatprep.subr.mxu0 0.0
    %309 = vmatpush2.msra.mxu0 0.0
    %310 = vmatprep.subr.mxu0 0.0
    %311 = vmatpush2.msra.mxu0 0.0
    %312 = vmatprep.subr.mxu0 0.0
    %313 = vmatpush2.msra.mxu0 0.0
    %314 = vmatprep.subr.mxu0 0.0
    %315 = vmatpush2.msra.mxu0 0.0
    %316 = vmatprep.subr.mxu0 0.0
    %317 = vmatpush2.msra.mxu0 0.0
    %318 = vmatprep.subr.mxu0 0.0
    %319 = vmatpush2.msra.mxu0 0.0
    %320 = vmatprep.subr.mxu0 0.0
    %321 = vmatpush2.msra.mxu0 0.0
    %322 = vmatprep.subr.mxu0 0.0
    %323 = vmatpush2.msra.mxu0 0.0
    %324 = vmatprep.subr.mxu0 0.0
    %325 = vmatpush2.msra.mxu0 0.0
    %326 = vmatprep.subr.mxu0 0.0
    %327 = vmatpush2.msra.mxu0 0.0
    %328 = vmatprep.subr.mxu0 0.0
    %329 = vmatpush2.msra.mxu0 0.0
    %330 = vmatprep.subr.mxu0 0.0
    %331 = vmatpush2.msra.mxu0 0.0
    %332 = vmatprep.mubr.f32.mxu0 0.0
    %333 = vmatmul.mubr.f32.gmra.mxu0 %v257
    %v334 = vpop.f32.mrf.mxu0
    %v335 = vadd.f32 0.0, %v334
    %v336 = vpop.f32.mrf.mxu0
    %337 = vmatprep.mubr.f32.mxu0 0.0
    %338 = vmatmul.mubr.f32.gmra.mxu0 %v260
    %v339 = vpop.f32.mrf.mxu0
    %v340 = vadd.f32 0.0, %v339
    %v341 = vpop.f32.mrf.mxu0
    %342 = vmatprep.mubr.f32.mxu0 0.0
    %343 = vmatmul.mubr.f32.gmra.mxu0 %v263
    %v344 = vpop.f32.mrf.mxu0
    %v345 = vadd.f32 0.0, %v344
    %v346 = vpop.f32.mrf.mxu0
    %347 = vmatprep.mubr.f32.mxu0 0.0
    %348 = vmatmul.mubr.f32.gmra.mxu0 %v266
    %v349 = vpop.f32.mrf.mxu0
    %v350 = vadd.f32 0.0, %v349
    %v351 = vpop.f32.mrf.mxu0
    %352 = vdwg.mxu0
    %v353 = vld [vmem:[#allocation11] sm:$0xff]
    %v354 = vld [vmem:[#allocation11 + $0x8] sm:$0xff]
    %v355 = vld [vmem:[#allocation11 + $0x10] sm:$0xff]
    %v356 = vld [vmem:[#allocation11 + $0x18] sm:$0xff]
    %v357 = vld [vmem:[#allocation11 + $0x20] sm:$0xff]
    %v358 = vld [vmem:[#allocation11 + $0x28] sm:$0xff]
    %v359 = vld [vmem:[#allocation11 + $0x30] sm:$0xff]
    %v360 = vld [vmem:[#allocation11 + $0x38] sm:$0xff]
    %361 = vmatprep.subr.mxu0 0.0
    %362 = vmatpush1.msra.mxu0 0.0
    %363 = vmatprep.subr.mxu0 0.0
    %364 = vmatpush1.msra.mxu0 0.0
    %365 = vmatprep.subr.mxu0 0.0
    %366 = vmatpush1.msra.mxu0 0.0
    %367 = vmatprep.subr.mxu0 0.0
    %368 = vmatpush1.msra.mxu0 0.0
    %369 = vmatprep.subr.mxu0 0.0
    %370 = vmatpush1.msra.mxu0 0.0
    %371 = vmatprep.subr.mxu0 0.0
    %372 = vmatpush1.msra.mxu0 0.0
    %373 = vmatprep.subr.mxu0 0.0
    %374 = vmatpush1.msra.mxu0 0.0
    %375 = vmatprep.subr.mxu0 0.0
    %376 = vmatpush1.msra.mxu0 0.0
    %377 = vmatprep.subr.mxu0 0.0
    %378 = vmatpush1.msra.mxu0 %v360
    %379 = vmatprep.subr.mxu0 0.0
    %380 = vmatpush1.msra.mxu0 %v359
    %381 = vmatprep.subr.mxu0 0.0
    %382 = vmatpush1.msra.mxu0 %v358
    %383 = vmatprep.subr.mxu0 0.0
    %384 = vmatpush1.msra.mxu0 %v357
    %385 = vmatprep.subr.mxu0 0.0
    %386 = vmatpush1.msra.mxu0 %v356
    %387 = vmatprep.subr.mxu0 0.0
    %388 = vmatpush1.msra.mxu0 %v355
    %389 = vmatprep.subr.mxu0 0.0
    %390 = vmatpush1.msra.mxu0 %v354
    %391 = vmatprep.subr.mxu0 0.0
    %392 = vmatpush1.msra.mxu0 %v353
    %393 = vmatprep.subr.mxu0 0.0
    %394 = vmatpush2.msra.mxu0 0.0
    %395 = vmatprep.subr.mxu0 0.0
    %396 = vmatpush2.msra.mxu0 0.0
    %397 = vmatprep.subr.mxu0 0.0
    %398 = vmatpush2.msra.mxu0 0.0
    %399 = vmatprep.subr.mxu0 0.0
    %400 = vmatpush2.msra.mxu0 0.0
    %401 = vmatprep.subr.mxu0 0.0
    %402 = vmatpush2.msra.mxu0 0.0
    %403 = vmatprep.subr.mxu0 0.0
    %404 = vmatpush2.msra.mxu0 0.0
    %405 = vmatprep.subr.mxu0 0.0
    %406 = vmatpush2.msra.mxu0 0.0
    %407 = vmatprep.subr.mxu0 0.0
    %408 = vmatpush2.msra.mxu0 0.0
    %409 = vmatprep.subr.mxu0 0.0
    %410 = vmatpush2.msra.mxu0 0.0
    %411 = vmatprep.subr.mxu0 0.0
    %412 = vmatpush2.msra.mxu0 0.0
    %413 = vmatprep.subr.mxu0 0.0
    %414 = vmatpush2.msra.mxu0 0.0
    %415 = vmatprep.subr.mxu0 0.0
    %416 = vmatpush2.msra.mxu0 0.0
    %417 = vmatprep.subr.mxu0 0.0
    %418 = vmatpush2.msra.mxu0 0.0
    %419 = vmatprep.subr.mxu0 0.0
    %420 = vmatpush2.msra.mxu0 0.0
    %421 = vmatprep.subr.mxu0 0.0
    %422 = vmatpush2.msra.mxu0 0.0
    %423 = vmatprep.subr.mxu0 0.0
    %424 = vmatpush2.msra.mxu0 0.0
    %425 = vmatprep.mubr.f32.mxu0 0.0
    %426 = vmatmul.mubr.f32.gmra.mxu0 %v257
    %v427 = vpop.f32.mrf.mxu0
    %v428 = vadd.f32 0.0, %v427
    %v429 = vpop.f32.mrf.mxu0
    %430 = vmatprep.mubr.f32.mxu0 0.0
    %431 = vmatmul.mubr.f32.gmra.mxu0 %v260
    %v432 = vpop.f32.mrf.mxu0
    %v433 = vadd.f32 0.0, %v432
    %v434 = vpop.f32.mrf.mxu0
    %435 = vmatprep.mubr.f32.mxu0 0.0
    %436 = vmatmul.mubr.f32.gmra.mxu0 %v263
    %v437 = vpop.f32.mrf.mxu0
    %v438 = vadd.f32 0.0, %v437
    %v439 = vpop.f32.mrf.mxu0
    %440 = vmatprep.mubr.f32.mxu0 0.0
    %441 = vmatmul.mubr.f32.gmra.mxu0 %v266
    %v442 = vpop.f32.mrf.mxu0
    %v443 = vadd.f32 0.0, %v442
    %v444 = vpop.f32.mrf.mxu0
    %445 = vdwg.mxu0
    %v446 = vld [vmem:[#allocation13] sm:$0xff]
    %v447 = vld [vmem:[#allocation13 + $0x8] sm:$0xff]
    %v448 = vld [vmem:[#allocation13 + $0x10] sm:$0xff]
    %v449 = vld [vmem:[#allocation13 + $0x18] sm:$0xff]
    %v450 = vld [vmem:[#allocation13 + $0x20] sm:$0xff]
    %v451 = vld [vmem:[#allocation13 + $0x28] sm:$0xff]
    %v452 = vld [vmem:[#allocation13 + $0x30] sm:$0xff]
    %v453 = vld [vmem:[#allocation13 + $0x38] sm:$0xff]
    %454 = vmatprep.subr.mxu0 0.0
    %455 = vmatpush1.msra.mxu0 0.0
    %456 = vmatprep.subr.mxu0 0.0
    %457 = vmatpush1.msra.mxu0 0.0
    %458 = vmatprep.subr.mxu0 0.0
    %459 = vmatpush1.msra.mxu0 0.0
    %460 = vmatprep.subr.mxu0 0.0
    %461 = vmatpush1.msra.mxu0 0.0
    %462 = vmatprep.subr.mxu0 0.0
    %463 = vmatpush1.msra.mxu0 0.0
    %464 = vmatprep.subr.mxu0 0.0
    %465 = vmatpush1.msra.mxu0 0.0
    %466 = vmatprep.subr.mxu0 0.0
    %467 = vmatpush1.msra.mxu0 0.0
    %468 = vmatprep.subr.mxu0 0.0
    %469 = vmatpush1.msra.mxu0 0.0
    %470 = vmatprep.subr.mxu0 0.0
    %471 = vmatpush1.msra.mxu0 %v453
    %472 = vmatprep.subr.mxu0 0.0
    %473 = vmatpush1.msra.mxu0 %v452
    %474 = vmatprep.subr.mxu0 0.0
    %475 = vmatpush1.msra.mxu0 %v451
    %476 = vmatprep.subr.mxu0 0.0
    %477 = vmatpush1.msra.mxu0 %v450
    %478 = vmatprep.subr.mxu0 0.0
    %479 = vmatpush1.msra.mxu0 %v449
    %480 = vmatprep.subr.mxu0 0.0
    %481 = vmatpush1.msra.mxu0 %v448
    %482 = vmatprep.subr.mxu0 0.0
    %483 = vmatpush1.msra.mxu0 %v447
    %484 = vmatprep.subr.mxu0 0.0
    %485 = vmatpush1.msra.mxu0 %v446
    %486 = vmatprep.subr.mxu0 0.0
    %487 = vmatpush2.msra.mxu0 0.0
    %488 = vmatprep.subr.mxu0 0.0
    %489 = vmatpush2.msra.mxu0 0.0
    %490 = vmatprep.subr.mxu0 0.0
    %491 = vmatpush2.msra.mxu0 0.0
    %492 = vmatprep.subr.mxu0 0.0
    %493 = vmatpush2.msra.mxu0 0.0
    %494 = vmatprep.subr.mxu0 0.0
    %495 = vmatpush2.msra.mxu0 0.0
    %496 = vmatprep.subr.mxu0 0.0
    %497 = vmatpush2.msra.mxu0 0.0
    %498 = vmatprep.subr.mxu0 0.0
    %499 = vmatpush2.msra.mxu0 0.0
    %500 = vmatprep.subr.mxu0 0.0
    %501 = vmatpush2.msra.mxu0 0.0
    %502 = vmatprep.subr.mxu0 0.0
    %503 = vmatpush2.msra.mxu0 0.0
    %504 = vmatprep.subr.mxu0 0.0
    %505 = vmatpush2.msra.mxu0 0.0
    %506 = vmatprep.subr.mxu0 0.0
    %507 = vmatpush2.msra.mxu0 0.0
    %508 = vmatprep.subr.mxu0 0.0
    %509 = vmatpush2.msra.mxu0 0.0
    %510 = vmatprep.subr.mxu0 0.0
    %511 = vmatpush2.msra.mxu0 0.0
    %512 = vmatprep.subr.mxu0 0.0
    %513 = vmatpush2.msra.mxu0 0.0
    %514 = vmatprep.subr.mxu0 0.0
    %515 = vmatpush2.msra.mxu0 0.0
    %516 = vmatprep.subr.mxu0 0.0
    %517 = vmatpush2.msra.mxu0 0.0
    %518 = vmatprep.mubr.f32.mxu0 0.0
    %519 = vmatmul.mubr.f32.gmra.mxu0 %v257
    %v520 = vpop.f32.mrf.mxu0
    %v521 = vadd.f32 0.0, %v520
    %v522 = vpop.f32.mrf.mxu0
    %523 = vmatprep.mubr.f32.mxu0 0.0
    %524 = vmatmul.mubr.f32.gmra.mxu0 %v260
    %v525 = vpop.f32.mrf.mxu0
    %v526 = vadd.f32 0.0, %v525
    %v527 = vpop.f32.mrf.mxu0
    %528 = vmatprep.mubr.f32.mxu0 0.0
    %529 = vmatmul.mubr.f32.gmra.mxu0 %v263
    %v530 = vpop.f32.mrf.mxu0
    %v531 = vadd.f32 0.0, %v530
    %v532 = vpop.f32.mrf.mxu0
    %533 = vmatprep.mubr.f32.mxu0 0.0
    %534 = vmatmul.mubr.f32.gmra.mxu0 %v266
    %v535 = vpop.f32.mrf.mxu0
    %v536 = vadd.f32 0.0, %v535
    %v537 = vpop.f32.mrf.mxu0
    %538 = vdwg.mxu0
    %v539 = vmul.f32 %v335, %v187
    %v540 = vmul.f32 %v340, %v188
    %v541 = vmul.f32 %v345, %v189
    %v542 = vmul.f32 %v350, %v190
    %v544 = vsel %vm208, %v335, 0
    %v547 = vsel %vm208, %v340, 0
    %v550 = vsel %vm208, %v345, 0
    %v553 = vsel %vm208, %v350, 0
    %555 = vmatprep.subr.mxu0 0.0
    %556 = vmatpush1.msra.mxu0 0.0
    %557 = vmatprep.subr.mxu0 0.0
    %558 = vmatpush1.msra.mxu0 0.0
    %559 = vmatprep.subr.mxu0 0.0
    %560 = vmatpush1.msra.mxu0 0.0
    %561 = vmatprep.subr.mxu0 0.0
    %562 = vmatpush1.msra.mxu0 0.0
    %563 = vmatprep.subr.mxu0 0.0
    %564 = vmatpush1.msra.mxu0 0.0
    %565 = vmatprep.subr.mxu0 0.0
    %566 = vmatpush1.msra.mxu0 0.0
    %567 = vmatprep.subr.mxu0 0.0
    %568 = vmatpush1.msra.mxu0 0.0
    %569 = vmatprep.subr.mxu0 0.0
    %570 = vmatpush1.msra.mxu0 0.0
    %571 = vmatprep.subr.mxu0 0.0
    %572 = vmatpush1.msra.mxu0 %v202
    %573 = vmatprep.subr.mxu0 0.0
    %574 = vmatpush1.msra.mxu0 %v201
    %575 = vmatprep.subr.mxu0 0.0
    %576 = vmatpush1.msra.mxu0 %v200
    %577 = vmatprep.subr.mxu0 0.0
    %578 = vmatpush1.msra.mxu0 %v199
    %579 = vmatprep.subr.mxu0 0.0
    %580 = vmatpush1.msra.mxu0 %v198
    %581 = vmatprep.subr.mxu0 0.0
    %582 = vmatpush1.msra.mxu0 %v197
    %583 = vmatprep.subr.mxu0 0.0
    %584 = vmatpush1.msra.mxu0 %v196
    %585 = vmatprep.subr.mxu0 0.0
    %586 = vmatpush1.msra.mxu0 %v195
    %587 = vmatprep.subr.mxu0 0.0
    %588 = vmatpush2.msra.mxu0 0.0
    %589 = vmatprep.subr.mxu0 0.0
    %590 = vmatpush2.msra.mxu0 0.0
    %591 = vmatprep.subr.mxu0 0.0
    %592 = vmatpush2.msra.mxu0 0.0
    %593 = vmatprep.subr.mxu0 0.0
    %594 = vmatpush2.msra.mxu0 0.0
    %595 = vmatprep.subr.mxu0 0.0
    %596 = vmatpush2.msra.mxu0 0.0
    %597 = vmatprep.subr.mxu0 0.0
    %598 = vmatpush2.msra.mxu0 0.0
    %599 = vmatprep.subr.mxu0 0.0
    %600 = vmatpush2.msra.mxu0 0.0
    %601 = vmatprep.subr.mxu0 0.0
    %602 = vmatpush2.msra.mxu0 0.0
    %603 = vmatprep.subr.mxu0 0.0
    %604 = vmatpush2.msra.mxu0 0.0
    %605 = vmatprep.subr.mxu0 0.0
    %606 = vmatpush2.msra.mxu0 0.0
    %607 = vmatprep.subr.mxu0 0.0
    %608 = vmatpush2.msra.mxu0 0.0
    %609 = vmatprep.subr.mxu0 0.0
    %610 = vmatpush2.msra.mxu0 0.0
    %611 = vmatprep.subr.mxu0 0.0
    %612 = vmatpush2.msra.mxu0 0.0
    %613 = vmatprep.subr.mxu0 0.0
    %614 = vmatpush2.msra.mxu0 0.0
    %615 = vmatprep.subr.mxu0 0.0
    %616 = vmatpush2.msra.mxu0 0.0
    %617 = vmatprep.subr.mxu0 0.0
    %618 = vmatpush2.msra.mxu0 0.0
    %619 = vmatprep.mubr.f32.mxu0 0.0
    %620 = vmatmul.mubr.f32.gmra.mxu0 %v544
    %v621 = vpop.f32.mrf.mxu0
    %v622 = vadd.f32 0.0, %v621
    %v623 = vpop.f32.mrf.mxu0
    %624 = vmatprep.mubr.f32.mxu0 0.0
    %625 = vmatmul.mubr.f32.gmra.mxu0 %v547
    %v626 = vpop.f32.mrf.mxu0
    %v627 = vadd.f32 0.0, %v626
    %v628 = vpop.f32.mrf.mxu0
    %629 = vmatprep.mubr.f32.mxu0 0.0
    %630 = vmatmul.mubr.f32.gmra.mxu0 %v550
    %v631 = vpop.f32.mrf.mxu0
    %v632 = vadd.f32 0.0, %v631
    %v633 = vpop.f32.mrf.mxu0
    %634 = vmatprep.mubr.f32.mxu0 0.0
    %635 = vmatmul.mubr.f32.gmra.mxu0 %v553
    %v636 = vpop.f32.mrf.mxu0
    %v637 = vadd.f32 0.0, %v636
    %v638 = vpop.f32.mrf.mxu0
    %639 = vdwg.mxu0
    %v640 = vmul.f32 %v622, %v191
    %v641 = vmul.f32 %v627, %v192
    %v642 = vmul.f32 %v632, %v193
    %v643 = vmul.f32 %v637, %v194
    %v644 = vadd.f32 %v539, %v640
    %v645 = vadd.f32 %v540, %v641
    %v646 = vadd.f32 %v541, %v642
    %v647 = vadd.f32 %v542, %v643
    %v648 = vmul.f32 %v428, %v187
    %v649 = vmul.f32 %v433, %v188
    %v650 = vmul.f32 %v438, %v189
    %v651 = vmul.f32 %v443, %v190
    %v653 = vsel %vm208, %v428, 0
    %v656 = vsel %vm208, %v433, 0
    %v659 = vsel %vm208, %v438, 0
    %v662 = vsel %vm208, %v443, 0
    %664 = vmatprep.subr.mxu0 0.0
    %665 = vmatpush1.msra.mxu0 0.0
    %666 = vmatprep.subr.mxu0 0.0
    %667 = vmatpush1.msra.mxu0 0.0
    %668 = vmatprep.subr.mxu0 0.0
    %669 = vmatpush1.msra.mxu0 0.0
    %670 = vmatprep.subr.mxu0 0.0
    %671 = vmatpush1.msra.mxu0 0.0
    %672 = vmatprep.subr.mxu0 0.0
    %673 = vmatpush1.msra.mxu0 0.0
    %674 = vmatprep.subr.mxu0 0.0
    %675 = vmatpush1.msra.mxu0 0.0
    %676 = vmatprep.subr.mxu0 0.0
    %677 = vmatpush1.msra.mxu0 0.0
    %678 = vmatprep.subr.mxu0 0.0
    %679 = vmatpush1.msra.mxu0 0.0
    %680 = vmatprep.subr.mxu0 0.0
    %681 = vmatpush1.msra.mxu0 %v202
    %682 = vmatprep.subr.mxu0 0.0
    %683 = vmatpush1.msra.mxu0 %v201
    %684 = vmatprep.subr.mxu0 0.0
    %685 = vmatpush1.msra.mxu0 %v200
    %686 = vmatprep.subr.mxu0 0.0
    %687 = vmatpush1.msra.mxu0 %v199
    %688 = vmatprep.subr.mxu0 0.0
    %689 = vmatpush1.msra.mxu0 %v198
    %690 = vmatprep.subr.mxu0 0.0
    %691 = vmatpush1.msra.mxu0 %v197
    %692 = vmatprep.subr.mxu0 0.0
    %693 = vmatpush1.msra.mxu0 %v196
    %694 = vmatprep.subr.mxu0 0.0
    %695 = vmatpush1.msra.mxu0 %v195
    %696 = vmatprep.subr.mxu0 0.0
    %697 = vmatpush2.msra.mxu0 0.0
    %698 = vmatprep.subr.mxu0 0.0
    %699 = vmatpush2.msra.mxu0 0.0
    %700 = vmatprep.subr.mxu0 0.0
    %701 = vmatpush2.msra.mxu0 0.0
    %702 = vmatprep.subr.mxu0 0.0
    %703 = vmatpush2.msra.mxu0 0.0
    %704 = vmatprep.subr.mxu0 0.0
    %705 = vmatpush2.msra.mxu0 0.0
    %706 = vmatprep.subr.mxu0 0.0
    %707 = vmatpush2.msra.mxu0 0.0
    %708 = vmatprep.subr.mxu0 0.0
    %709 = vmatpush2.msra.mxu0 0.0
    %710 = vmatprep.subr.mxu0 0.0
    %711 = vmatpush2.msra.mxu0 0.0
    %712 = vmatprep.subr.mxu0 0.0
    %713 = vmatpush2.msra.mxu0 0.0
    %714 = vmatprep.subr.mxu0 0.0
    %715 = vmatpush2.msra.mxu0 0.0
    %716 = vmatprep.subr.mxu0 0.0
    %717 = vmatpush2.msra.mxu0 0.0
    %718 = vmatprep.subr.mxu0 0.0
    %719 = vmatpush2.msra.mxu0 0.0
    %720 = vmatprep.subr.mxu0 0.0
    %721 = vmatpush2.msra.mxu0 0.0
    %722 = vmatprep.subr.mxu0 0.0
    %723 = vmatpush2.msra.mxu0 0.0
    %724 = vmatprep.subr.mxu0 0.0
    %725 = vmatpush2.msra.mxu0 0.0
    %726 = vmatprep.subr.mxu0 0.0
    %727 = vmatpush2.msra.mxu0 0.0
    %728 = vmatprep.mubr.f32.mxu0 0.0
    %729 = vmatmul.mubr.f32.gmra.mxu0 %v653
    %v730 = vpop.f32.mrf.mxu0
    %v731 = vadd.f32 0.0, %v730
    %v732 = vpop.f32.mrf.mxu0
    %733 = vmatprep.mubr.f32.mxu0 0.0
    %734 = vmatmul.mubr.f32.gmra.mxu0 %v656
    %v735 = vpop.f32.mrf.mxu0
    %v736 = vadd.f32 0.0, %v735
    %v737 = vpop.f32.mrf.mxu0
    %738 = vmatprep.mubr.f32.mxu0 0.0
    %739 = vmatmul.mubr.f32.gmra.mxu0 %v659
    %v740 = vpop.f32.mrf.mxu0
    %v741 = vadd.f32 0.0, %v740
    %v742 = vpop.f32.mrf.mxu0
    %743 = vmatprep.mubr.f32.mxu0 0.0
    %744 = vmatmul.mubr.f32.gmra.mxu0 %v662
    %v745 = vpop.f32.mrf.mxu0
    %v746 = vadd.f32 0.0, %v745
    %v747 = vpop.f32.mrf.mxu0
    %748 = vdwg.mxu0
    %v749 = vmul.f32 %v731, %v191
    %v750 = vmul.f32 %v736, %v192
    %v751 = vmul.f32 %v741, %v193
    %v752 = vmul.f32 %v746, %v194
    %v753 = vadd.f32 %v648, %v749
    %v754 = vadd.f32 %v649, %v750
    %v755 = vadd.f32 %v650, %v751
    %v756 = vadd.f32 %v651, %v752
    %vm757 = vcmask 130048
    %v759 = vsel %vm757, %v644, 0
    %v762 = vsel %vm757, %v645, 0
    %v765 = vsel %vm757, %v646, 0
    %v768 = vsel %vm757, %v647, 0
    %v771 = vsel %vm757, %v753, 0
    %v774 = vsel %vm757, %v754, 0
    %v777 = vsel %vm757, %v755, 0
    %v780 = vsel %vm757, %v756, 0
    %782 = vmatprep.subr.mxu0 0.0
    %783 = vmatpush1.xpose.msra.mxu0 0.0
    %784 = vmatprep.subr.mxu0 0.0
    %785 = vmatpush1.xpose.msra.mxu0 0.0
    %786 = vmatprep.subr.mxu0 0.0
    %787 = vmatpush1.xpose.msra.mxu0 0.0
    %788 = vmatprep.subr.mxu0 0.0
    %789 = vmatpush1.xpose.msra.mxu0 0.0
    %790 = vmatprep.subr.mxu0 0.0
    %791 = vmatpush1.xpose.msra.mxu0 0.0
    %792 = vmatprep.subr.mxu0 0.0
    %793 = vmatpush1.xpose.msra.mxu0 0.0
    %794 = vmatprep.subr.mxu0 0.0
    %795 = vmatpush1.xpose.msra.mxu0 0.0
    %796 = vmatprep.subr.mxu0 0.0
    %797 = vmatpush1.xpose.msra.mxu0 0.0
    %798 = vmatprep.subr.mxu0 0.0
    %799 = vmatpush1.xpose.msra.mxu0 0.0
    %800 = vmatprep.subr.mxu0 0.0
    %801 = vmatpush1.xpose.msra.mxu0 0.0
    %802 = vmatprep.subr.mxu0 0.0
    %803 = vmatpush1.xpose.msra.mxu0 0.0
    %804 = vmatprep.subr.mxu0 0.0
    %805 = vmatpush1.xpose.msra.mxu0 0.0
    %806 = vmatprep.subr.mxu0 0.0
    %807 = vmatpush1.xpose.msra.mxu0 %v780
    %808 = vmatprep.subr.mxu0 0.0
    %809 = vmatpush1.xpose.msra.mxu0 %v777
    %810 = vmatprep.subr.mxu0 0.0
    %811 = vmatpush1.xpose.msra.mxu0 %v774
    %812 = vmatprep.subr.mxu0 0.0
    %813 = vmatpush1.xpose.msra.mxu0 %v771
    %814 = vmatprep.subr.mxu0 0.0
    %815 = vmatpush2.xpose.msra.mxu0 0.0
    %816 = vmatprep.subr.mxu0 0.0
    %817 = vmatpush2.xpose.msra.mxu0 0.0
    %818 = vmatprep.subr.mxu0 0.0
    %819 = vmatpush2.xpose.msra.mxu0 0.0
    %820 = vmatprep.subr.mxu0 0.0
    %821 = vmatpush2.xpose.msra.mxu0 0.0
    %822 = vmatprep.subr.mxu0 0.0
    %823 = vmatpush2.xpose.msra.mxu0 0.0
    %824 = vmatprep.subr.mxu0 0.0
    %825 = vmatpush2.xpose.msra.mxu0 0.0
    %826 = vmatprep.subr.mxu0 0.0
    %827 = vmatpush2.xpose.msra.mxu0 0.0
    %828 = vmatprep.subr.mxu0 0.0
    %829 = vmatpush2.xpose.msra.mxu0 0.0
    %830 = vmatprep.subr.mxu0 0.0
    %831 = vmatpush2.xpose.msra.mxu0 0.0
    %832 = vmatprep.subr.mxu0 0.0
    %833 = vmatpush2.xpose.msra.mxu0 0.0
    %834 = vmatprep.subr.mxu0 0.0
    %835 = vmatpush2.xpose.msra.mxu0 0.0
    %836 = vmatprep.subr.mxu0 0.0
    %837 = vmatpush2.xpose.msra.mxu0 0.0
    %838 = vmatprep.subr.mxu0 0.0
    %839 = vmatpush2.xpose.msra.mxu0 0.0
    %840 = vmatprep.subr.mxu0 0.0
    %841 = vmatpush2.xpose.msra.mxu0 0.0
    %842 = vmatprep.subr.mxu0 0.0
    %843 = vmatpush2.xpose.msra.mxu0 0.0
    %844 = vmatprep.subr.mxu0 0.0
    %845 = vmatpush2.xpose.msra.mxu0 0.0
    %846 = vmatprep.mubr.f32.mxu0 0.0
    %847 = vmatmul.mubr.f32.gmra.mxu0 %v759
    %v848 = vpop.f32.mrf.mxu0
    %v849 = vadd.f32 %v183, %v848
    %v850 = vpop.f32.mrf.mxu0
    %851 = vmatprep.mubr.f32.mxu0 0.0
    %852 = vmatmul.mubr.f32.gmra.mxu0 %v762
    %v853 = vpop.f32.mrf.mxu0
    %v854 = vadd.f32 %v184, %v853
    %v855 = vpop.f32.mrf.mxu0
    %856 = vmatprep.mubr.f32.mxu0 0.0
    %857 = vmatmul.mubr.f32.gmra.mxu0 %v765
    %v858 = vpop.f32.mrf.mxu0
    %v859 = vadd.f32 %v185, %v858
    %v860 = vpop.f32.mrf.mxu0
    %861 = vmatprep.mubr.f32.mxu0 0.0
    %862 = vmatmul.mubr.f32.gmra.mxu0 %v768
    %v863 = vpop.f32.mrf.mxu0
    %v864 = vadd.f32 %v186, %v863
    %v865 = vpop.f32.mrf.mxu0
    %866 = vdwg.mxu0
    %vm867 = vcmask 261120
    %v868 = vsel %vm867, %v849, -inf
    %869 = vmax.xlane.f32.xlu0 %v868
    %v870 = vpop.xlane.xlu0 %869
    %v871 = vsel %vm867, %v854, -inf
    %872 = vmax.xlane.f32.xlu0 %v871
    %v873 = vpop.xlane.xlu0 %872
    %v874 = vsel %vm867, %v859, -inf
    %875 = vmax.xlane.f32.xlu0 %v874
    %v876 = vpop.xlane.xlu0 %875
    %v877 = vsel %vm867, %v864, -inf
    %878 = vmax.xlane.f32.xlu0 %v877
    %v879 = vpop.xlane.xlu0 %878
    %v880 = vsub.f32 %v849, %v870
    %v881 = vsub.f32 %v854, %v873
    %v882 = vsub.f32 %v859, %v876
    %v883 = vsub.f32 %v864, %v879
    %v884 = vmul.f32 %v880, 1.442695
    %v885 = vpow.pop %v884
    %v886 = vmul.f32 %v881, 1.442695
    %v887 = vpow.pop %v886
    %v888 = vmul.f32 %v882, 1.442695
    %v889 = vpow.pop %v888
    %v890 = vmul.f32 %v883, 1.442695
    %v891 = vpow.pop %v890
    %v892 = vsel %vm867, %v885, 0.0
    %893 = vadd.xlane.f32.xlu0 %v892
    %v894 = vpop.xlane.xlu0 %893
    %v895 = vsel %vm867, %v887, 0.0
    %896 = vadd.xlane.f32.xlu0 %v895
    %v897 = vpop.xlane.xlu0 %896
    %v898 = vsel %vm867, %v889, 0.0
    %899 = vadd.xlane.f32.xlu0 %v898
    %v900 = vpop.xlane.xlu0 %899
    %v901 = vsel %vm867, %v891, 0.0
    %902 = vadd.xlane.f32.xlu0 %v901
    %v903 = vpop.xlane.xlu0 %902
    %v904 = vrcp.pop %v894
    %v905 = vrcp.pop %v897
    %v906 = vrcp.pop %v900
    %v907 = vrcp.pop %v903
    %v908 = vmul.f32 %v885, %v904
    %v909 = vmul.f32 %v887, %v905
    %v910 = vmul.f32 %v889, %v906
    %v911 = vmul.f32 %v891, %v907
    %v913 = vsel %vm867, %v908, 0
    %v916 = vsel %vm867, %v909, 0
    %v919 = vsel %vm867, %v910, 0
    %v922 = vsel %vm867, %v911, 0
    %924 = vmatprep.subr.mxu0 0.0
    %925 = vmatpush1.msra.mxu0 0.0
    %926 = vmatprep.subr.mxu0 0.0
    %927 = vmatpush1.msra.mxu0 0.0
    %928 = vmatprep.subr.mxu0 0.0
    %929 = vmatpush1.msra.mxu0 0.0
    %930 = vmatprep.subr.mxu0 0.0
    %931 = vmatpush1.msra.mxu0 0.0
    %932 = vmatprep.subr.mxu0 0.0
    %933 = vmatpush1.msra.mxu0 0.0
    %934 = vmatprep.subr.mxu0 0.0
    %935 = vmatpush1.msra.mxu0 0.0
    %936 = vmatprep.subr.mxu0 0.0
    %937 = vmatpush1.msra.mxu0 0.0
    %938 = vmatprep.subr.mxu0 0.0
    %939 = vmatpush1.msra.mxu0 0.0
    %940 = vmatprep.subr.mxu0 0.0
    %941 = vmatpush1.msra.mxu0 0.0
    %942 = vmatprep.subr.mxu0 0.0
    %943 = vmatpush1.msra.mxu0 0.0
    %944 = vmatprep.subr.mxu0 0.0
    %945 = vmatpush1.msra.mxu0 0.0
    %946 = vmatprep.subr.mxu0 0.0
    %947 = vmatpush1.msra.mxu0 0.0
    %948 = vmatprep.subr.mxu0 0.0
    %949 = vmatpush1.msra.mxu0 %v536
    %950 = vmatprep.subr.mxu0 0.0
    %951 = vmatpush1.msra.mxu0 %v531
    %952 = vmatprep.subr.mxu0 0.0
    %953 = vmatpush1.msra.mxu0 %v526
    %954 = vmatprep.subr.mxu0 0.0
    %955 = vmatpush1.msra.mxu0 %v521
    %956 = vmatprep.subr.mxu0 0.0
    %957 = vmatpush2.msra.mxu0 0.0
    %958 = vmatprep.subr.mxu0 0.0
    %959 = vmatpush2.msra.mxu0 0.0
    %960 = vmatprep.subr.mxu0 0.0
    %961 = vmatpush2.msra.mxu0 0.0
    %962 = vmatprep.subr.mxu0 0.0
    %963 = vmatpush2.msra.mxu0 0.0
    %964 = vmatprep.subr.mxu0 0.0
    %965 = vmatpush2.msra.mxu0 0.0
    %966 = vmatprep.subr.mxu0 0.0
    %967 = vmatpush2.msra.mxu0 0.0
    %968 = vmatprep.subr.mxu0 0.0
    %969 = vmatpush2.msra.mxu0 0.0
    %970 = vmatprep.subr.mxu0 0.0
    %971 = vmatpush2.msra.mxu0 0.0
    %972 = vmatprep.subr.mxu0 0.0
    %973 = vmatpush2.msra.mxu0 0.0
    %974 = vmatprep.subr.mxu0 0.0
    %975 = vmatpush2.msra.mxu0 0.0
    %976 = vmatprep.subr.mxu0 0.0
    %977 = vmatpush2.msra.mxu0 0.0
    %978 = vmatprep.subr.mxu0 0.0
    %979 = vmatpush2.msra.mxu0 0.0
    %980 = vmatprep.subr.mxu0 0.0
    %981 = vmatpush2.msra.mxu0 0.0
    %982 = vmatprep.subr.mxu0 0.0
    %983 = vmatpush2.msra.mxu0 0.0
    %984 = vmatprep.subr.mxu0 0.0
    %985 = vmatpush2.msra.mxu0 0.0
    %986 = vmatprep.subr.mxu0 0.0
    %987 = vmatpush2.msra.mxu0 0.0
    %988 = vmatprep.mubr.f32.mxu0 0.0
    %989 = vmatmul.mubr.f32.gmra.mxu0 %v913
    %v990 = vpop.f32.mrf.mxu0
    %v991 = vadd.f32 0.0, %v990
    %v992 = vpop.f32.mrf.mxu0
    %993 = vmatprep.mubr.f32.mxu0 0.0
    %994 = vmatmul.mubr.f32.gmra.mxu0 %v916
    %v995 = vpop.f32.mrf.mxu0
    %v996 = vadd.f32 0.0, %v995
    %v997 = vpop.f32.mrf.mxu0
    %998 = vmatprep.mubr.f32.mxu0 0.0
    %999 = vmatmul.mubr.f32.gmra.mxu0 %v919
    %v1000 = vpop.f32.mrf.mxu0
    %v1001 = vadd.f32 0.0, %v1000
    %v1002 = vpop.f32.mrf.mxu0
    %1003 = vmatprep.mubr.f32.mxu0 0.0
    %1004 = vmatmul.mubr.f32.gmra.mxu0 %v922
    %v1005 = vpop.f32.mrf.mxu0
    %v1006 = vadd.f32 0.0, %v1005
    %v1007 = vpop.f32.mrf.mxu0
    %1008 = vdwg.mxu0
    %1009 = vrot.lane.b32.xlu0 %v644, 112
    %v1010 = vpop.permute.xlu0 %1009
    %1011 = vrot.lane.b32.xlu0 %v645, 112
    %v1012 = vpop.permute.xlu0 %1011
    %1013 = vrot.lane.b32.xlu0 %v646, 112
    %v1014 = vpop.permute.xlu0 %1013
    %1015 = vrot.lane.b32.xlu0 %v647, 112
    %v1016 = vpop.permute.xlu0 %1015
    %1017 = vrot.lane.b32.xlu0 %v753, 112
    %v1018 = vpop.permute.xlu0 %1017
    %1019 = vrot.lane.b32.xlu0 %v754, 112
    %v1020 = vpop.permute.xlu0 %1019
    %1021 = vrot.lane.b32.xlu0 %v755, 112
    %v1022 = vpop.permute.xlu0 %1021
    %1023 = vrot.lane.b32.xlu0 %v756, 112
    %v1024 = vpop.permute.xlu0 %1023
    %v1025 = vsel %vm757, %v1010, 0
    %v1027 = vsel %vm757, %v1012, 0
    %v1029 = vsel %vm757, %v1014, 0
    %v1031 = vsel %vm757, %v1016, 0
    %v1033 = vsel %vm757, %v1018, 0
    %v1035 = vsel %vm757, %v1020, 0
    %v1037 = vsel %vm757, %v1022, 0
    %v1039 = vsel %vm757, %v1024, 0
    %1041 = vmatprep.subr.mxu0 0.0
    %1042 = vmatpush1.xpose.msra.mxu0 0.0
    %1043 = vmatprep.subr.mxu0 0.0
    %1044 = vmatpush1.xpose.msra.mxu0 0.0
    %1045 = vmatprep.subr.mxu0 0.0
    %1046 = vmatpush1.xpose.msra.mxu0 0.0
    %1047 = vmatprep.subr.mxu0 0.0
    %1048 = vmatpush1.xpose.msra.mxu0 0.0
    %1049 = vmatprep.subr.mxu0 0.0
    %1050 = vmatpush1.xpose.msra.mxu0 0.0
    %1051 = vmatprep.subr.mxu0 0.0
    %1052 = vmatpush1.xpose.msra.mxu0 0.0
    %1053 = vmatprep.subr.mxu0 0.0
    %1054 = vmatpush1.xpose.msra.mxu0 0.0
    %1055 = vmatprep.subr.mxu0 0.0
    %1056 = vmatpush1.xpose.msra.mxu0 0.0
    %1057 = vmatprep.subr.mxu0 0.0
    %1058 = vmatpush1.xpose.msra.mxu0 0.0
    %1059 = vmatprep.subr.mxu0 0.0
    %1060 = vmatpush1.xpose.msra.mxu0 0.0
    %1061 = vmatprep.subr.mxu0 0.0
    %1062 = vmatpush1.xpose.msra.mxu0 0.0
    %1063 = vmatprep.subr.mxu0 0.0
    %1064 = vmatpush1.xpose.msra.mxu0 0.0
    %1065 = vmatprep.subr.mxu0 0.0
    %1066 = vmatpush1.xpose.msra.mxu0 %v1039
    %1067 = vmatprep.subr.mxu0 0.0
    %1068 = vmatpush1.xpose.msra.mxu0 %v1037
    %1069 = vmatprep.subr.mxu0 0.0
    %1070 = vmatpush1.xpose.msra.mxu0 %v1035
    %1071 = vmatprep.subr.mxu0 0.0
    %1072 = vmatpush1.xpose.msra.mxu0 %v1033
    %1073 = vmatprep.subr.mxu0 0.0
    %1074 = vmatpush2.xpose.msra.mxu0 0.0
    %1075 = vmatprep.subr.mxu0 0.0
    %1076 = vmatpush2.xpose.msra.mxu0 0.0
    %1077 = vmatprep.subr.mxu0 0.0
    %1078 = vmatpush2.xpose.msra.mxu0 0.0
    %1079 = vmatprep.subr.mxu0 0.0
    %1080 = vmatpush2.xpose.msra.mxu0 0.0
    %1081 = vmatprep.subr.mxu0 0.0
    %1082 = vmatpush2.xpose.msra.mxu0 0.0
    %1083 = vmatprep.subr.mxu0 0.0
    %1084 = vmatpush2.xpose.msra.mxu0 0.0
    %1085 = vmatprep.subr.mxu0 0.0
    %1086 = vmatpush2.xpose.msra.mxu0 0.0
    %1087 = vmatprep.subr.mxu0 0.0
    %1088 = vmatpush2.xpose.msra.mxu0 0.0
    %1089 = vmatprep.subr.mxu0 0.0
    %1090 = vmatpush2.xpose.msra.mxu0 0.0
    %1091 = vmatprep.subr.mxu0 0.0
    %1092 = vmatpush2.xpose.msra.mxu0 0.0
    %1093 = vmatprep.subr.mxu0 0.0
    %1094 = vmatpush2.xpose.msra.mxu0 0.0
    %1095 = vmatprep.subr.mxu0 0.0
    %1096 = vmatpush2.xpose.msra.mxu0 0.0
    %1097 = vmatprep.subr.mxu0 0.0
    %1098 = vmatpush2.xpose.msra.mxu0 0.0
    %1099 = vmatprep.subr.mxu0 0.0
    %1100 = vmatpush2.xpose.msra.mxu0 0.0
    %1101 = vmatprep.subr.mxu0 0.0
    %1102 = vmatpush2.xpose.msra.mxu0 0.0
    %1103 = vmatprep.subr.mxu0 0.0
    %1104 = vmatpush2.xpose.msra.mxu0 0.0
    %1105 = vmatprep.mubr.f32.mxu0 0.0
    %1106 = vmatmul.mubr.f32.gmra.mxu0 %v1025
    %v1107 = vpop.f32.mrf.mxu0
    %v1108 = vadd.f32 %v183, %v1107
    %v1109 = vpop.f32.mrf.mxu0
    %1110 = vmatprep.mubr.f32.mxu0 0.0
    %1111 = vmatmul.mubr.f32.gmra.mxu0 %v1027
    %v1112 = vpop.f32.mrf.mxu0
    %v1113 = vadd.f32 %v184, %v1112
    %v1114 = vpop.f32.mrf.mxu0
    %1115 = vmatprep.mubr.f32.mxu0 0.0
    %1116 = vmatmul.mubr.f32.gmra.mxu0 %v1029
    %v1117 = vpop.f32.mrf.mxu0
    %v1118 = vadd.f32 %v185, %v1117
    %v1119 = vpop.f32.mrf.mxu0
    %1120 = vmatprep.mubr.f32.mxu0 0.0
    %1121 = vmatmul.mubr.f32.gmra.mxu0 %v1031
    %v1122 = vpop.f32.mrf.mxu0
    %v1123 = vadd.f32 %v186, %v1122
    %v1124 = vpop.f32.mrf.mxu0
    %1125 = vdwg.mxu0
    %v1126 = vsel %vm867, %v1108, -inf
    %1127 = vmax.xlane.f32.xlu0 %v1126
    %v1128 = vpop.xlane.xlu0 %1127
    %v1129 = vsel %vm867, %v1113, -inf
    %1130 = vmax.xlane.f32.xlu0 %v1129
    %v1131 = vpop.xlane.xlu0 %1130
    %v1132 = vsel %vm867, %v1118, -inf
    %1133 = vmax.xlane.f32.xlu0 %v1132
    %v1134 = vpop.xlane.xlu0 %1133
    %v1135 = vsel %vm867, %v1123, -inf
    %1136 = vmax.xlane.f32.xlu0 %v1135
    %v1137 = vpop.xlane.xlu0 %1136
    %v1138 = vsub.f32 %v1108, %v1128
    %v1139 = vsub.f32 %v1113, %v1131
    %v1140 = vsub.f32 %v1118, %v1134
    %v1141 = vsub.f32 %v1123, %v1137
    %v1142 = vmul.f32 %v1138, 1.442695
    %v1143 = vpow.pop %v1142
    %v1144 = vmul.f32 %v1139, 1.442695
    %v1145 = vpow.pop %v1144
    %v1146 = vmul.f32 %v1140, 1.442695
    %v1147 = vpow.pop %v1146
    %v1148 = vmul.f32 %v1141, 1.442695
    %v1149 = vpow.pop %v1148
    %v1150 = vsel %vm867, %v1143, 0.0
    %1151 = vadd.xlane.f32.xlu0 %v1150
    %v1152 = vpop.xlane.xlu0 %1151
    %v1153 = vsel %vm867, %v1145, 0.0
    %1154 = vadd.xlane.f32.xlu0 %v1153
    %v1155 = vpop.xlane.xlu0 %1154
    %v1156 = vsel %vm867, %v1147, 0.0
    %1157 = vadd.xlane.f32.xlu0 %v1156
    %v1158 = vpop.xlane.xlu0 %1157
    %v1159 = vsel %vm867, %v1149, 0.0
    %1160 = vadd.xlane.f32.xlu0 %v1159
    %v1161 = vpop.xlane.xlu0 %1160
    %v1162 = vrcp.pop %v1152
    %v1163 = vrcp.pop %v1155
    %v1164 = vrcp.pop %v1158
    %v1165 = vrcp.pop %v1161
    %v1166 = vmul.f32 %v1143, %v1162
    %v1167 = vmul.f32 %v1145, %v1163
    %v1168 = vmul.f32 %v1147, %v1164
    %v1169 = vmul.f32 %v1149, %v1165
    %1174 = vrot.lane.b32.xlu0 %v521, 112
    %v1175 = vpop.permute.xlu0 %1174
    %1176 = vrot.lane.b32.xlu0 %v526, 112
    %v1177 = vpop.permute.xlu0 %1176
    %1178 = vrot.lane.b32.xlu0 %v531, 112
    %v1179 = vpop.permute.xlu0 %1178
    %1180 = vrot.lane.b32.xlu0 %v536, 112
    %v1181 = vpop.permute.xlu0 %1180
    %v1187 = vsel %vm867, %v1166, 0
    %v1190 = vsel %vm867, %v1167, 0
    %v1193 = vsel %vm867, %v1168, 0
    %v1196 = vsel %vm867, %v1169, 0
    %1198 = vmatprep.subr.mxu0 0.0
    %1199 = vmatpush1.msra.mxu0 0.0
    %1200 = vmatprep.subr.mxu0 0.0
    %1201 = vmatpush1.msra.mxu0 0.0
    %1202 = vmatprep.subr.mxu0 0.0
    %1203 = vmatpush1.msra.mxu0 0.0
    %1204 = vmatprep.subr.mxu0 0.0
    %1205 = vmatpush1.msra.mxu0 0.0
    %1206 = vmatprep.subr.mxu0 0.0
    %1207 = vmatpush1.msra.mxu0 0.0
    %1208 = vmatprep.subr.mxu0 0.0
    %1209 = vmatpush1.msra.mxu0 0.0
    %1210 = vmatprep.subr.mxu0 0.0
    %1211 = vmatpush1.msra.mxu0 0.0
    %1212 = vmatprep.subr.mxu0 0.0
    %1213 = vmatpush1.msra.mxu0 0.0
    %1214 = vmatprep.subr.mxu0 0.0
    %1215 = vmatpush1.msra.mxu0 0.0
    %1216 = vmatprep.subr.mxu0 0.0
    %1217 = vmatpush1.msra.mxu0 0.0
    %1218 = vmatprep.subr.mxu0 0.0
    %1219 = vmatpush1.msra.mxu0 0.0
    %1220 = vmatprep.subr.mxu0 0.0
    %1221 = vmatpush1.msra.mxu0 0.0
    %1222 = vmatprep.subr.mxu0 0.0
    %1223 = vmatpush1.msra.mxu0 %v1181
    %1224 = vmatprep.subr.mxu0 0.0
    %1225 = vmatpush1.msra.mxu0 %v1179
    %1226 = vmatprep.subr.mxu0 0.0
    %1227 = vmatpush1.msra.mxu0 %v1177
    %1228 = vmatprep.subr.mxu0 0.0
    %1229 = vmatpush1.msra.mxu0 %v1175
    %1230 = vmatprep.subr.mxu0 0.0
    %1231 = vmatpush2.msra.mxu0 0.0
    %1232 = vmatprep.subr.mxu0 0.0
    %1233 = vmatpush2.msra.mxu0 0.0
    %1234 = vmatprep.subr.mxu0 0.0
    %1235 = vmatpush2.msra.mxu0 0.0
    %1236 = vmatprep.subr.mxu0 0.0
    %1237 = vmatpush2.msra.mxu0 0.0
    %1238 = vmatprep.subr.mxu0 0.0
    %1239 = vmatpush2.msra.mxu0 0.0
    %1240 = vmatprep.subr.mxu0 0.0
    %1241 = vmatpush2.msra.mxu0 0.0
    %1242 = vmatprep.subr.mxu0 0.0
    %1243 = vmatpush2.msra.mxu0 0.0
    %1244 = vmatprep.subr.mxu0 0.0
    %1245 = vmatpush2.msra.mxu0 0.0
    %1246 = vmatprep.subr.mxu0 0.0
    %1247 = vmatpush2.msra.mxu0 0.0
    %1248 = vmatprep.subr.mxu0 0.0
    %1249 = vmatpush2.msra.mxu0 0.0
    %1250 = vmatprep.subr.mxu0 0.0
    %1251 = vmatpush2.msra.mxu0 0.0
    %1252 = vmatprep.subr.mxu0 0.0
    %1253 = vmatpush2.msra.mxu0 0.0
    %1254 = vmatprep.subr.mxu0 0.0
    %1255 = vmatpush2.msra.mxu0 0.0
    %1256 = vmatprep.subr.mxu0 0.0
    %1257 = vmatpush2.msra.mxu0 0.0
    %1258 = vmatprep.subr.mxu0 0.0
    %1259 = vmatpush2.msra.mxu0 0.0
    %1260 = vmatprep.subr.mxu0 0.0
    %1261 = vmatpush2.msra.mxu0 0.0
    %1262 = vmatprep.mubr.f32.mxu0 0.0
    %1263 = vmatmul.mubr.f32.gmra.mxu0 %v1187
    %v1264 = vpop.f32.mrf.mxu0
    %v1265 = vadd.f32 0.0, %v1264
    %v1266 = vpop.f32.mrf.mxu0
    %1267 = vmatprep.mubr.f32.mxu0 0.0
    %1268 = vmatmul.mubr.f32.gmra.mxu0 %v1190
    %v1269 = vpop.f32.mrf.mxu0
    %v1270 = vadd.f32 0.0, %v1269
    %v1271 = vpop.f32.mrf.mxu0
    %1272 = vmatprep.mubr.f32.mxu0 0.0
    %1273 = vmatmul.mubr.f32.gmra.mxu0 %v1193
    %v1274 = vpop.f32.mrf.mxu0
    %v1275 = vadd.f32 0.0, %v1274
    %v1276 = vpop.f32.mrf.mxu0
    %1277 = vmatprep.mubr.f32.mxu0 0.0
    %1278 = vmatmul.mubr.f32.gmra.mxu0 %v1196
    %v1279 = vpop.f32.mrf.mxu0
    %v1280 = vadd.f32 0.0, %v1279
    %v1281 = vpop.f32.mrf.mxu0
    %1282 = vdwg.mxu0
    %1283 = vrot.lane.b32.xlu0 %v644, 96
    %v1284 = vpop.permute.xlu0 %1283
    %1285 = vrot.lane.b32.xlu0 %v645, 96
    %v1286 = vpop.permute.xlu0 %1285
    %1287 = vrot.lane.b32.xlu0 %v646, 96
    %v1288 = vpop.permute.xlu0 %1287
    %1289 = vrot.lane.b32.xlu0 %v647, 96
    %v1290 = vpop.permute.xlu0 %1289
    %1291 = vrot.lane.b32.xlu0 %v753, 96
    %v1292 = vpop.permute.xlu0 %1291
    %1293 = vrot.lane.b32.xlu0 %v754, 96
    %v1294 = vpop.permute.xlu0 %1293
    %1295 = vrot.lane.b32.xlu0 %v755, 96
    %v1296 = vpop.permute.xlu0 %1295
    %1297 = vrot.lane.b32.xlu0 %v756, 96
    %v1298 = vpop.permute.xlu0 %1297
    %v1299 = vsel %vm757, %v1284, 0
    %v1301 = vsel %vm757, %v1286, 0
    %v1303 = vsel %vm757, %v1288, 0
    %v1305 = vsel %vm757, %v1290, 0
    %v1307 = vsel %vm757, %v1292, 0
    %v1309 = vsel %vm757, %v1294, 0
    %v1311 = vsel %vm757, %v1296, 0
    %v1313 = vsel %vm757, %v1298, 0
    %1315 = vmatprep.subr.mxu0 0.0
    %1316 = vmatpush1.xpose.msra.mxu0 0.0
    %1317 = vmatprep.subr.mxu0 0.0
    %1318 = vmatpush1.xpose.msra.mxu0 0.0
    %1319 = vmatprep.subr.mxu0 0.0
    %1320 = vmatpush1.xpose.msra.mxu0 0.0
    %1321 = vmatprep.subr.mxu0 0.0
    %1322 = vmatpush1.xpose.msra.mxu0 0.0
    %1323 = vmatprep.subr.mxu0 0.0
    %1324 = vmatpush1.xpose.msra.mxu0 0.0
    %1325 = vmatprep.subr.mxu0 0.0
    %1326 = vmatpush1.xpose.msra.mxu0 0.0
    %1327 = vmatprep.subr.mxu0 0.0
    %1328 = vmatpush1.xpose.msra.mxu0 0.0
    %1329 = vmatprep.subr.mxu0 0.0
    %1330 = vmatpush1.xpose.msra.mxu0 0.0
    %1331 = vmatprep.subr.mxu0 0.0
    %1332 = vmatpush1.xpose.msra.mxu0 0.0
    %1333 = vmatprep.subr.mxu0 0.0
    %1334 = vmatpush1.xpose.msra.mxu0 0.0
    %1335 = vmatprep.subr.mxu0 0.0
    %1336 = vmatpush1.xpose.msra.mxu0 0.0
    %1337 = vmatprep.subr.mxu0 0.0
    %1338 = vmatpush1.xpose.msra.mxu0 0.0
    %1339 = vmatprep.subr.mxu0 0.0
    %1340 = vmatpush1.xpose.msra.mxu0 %v1313
    %1341 = vmatprep.subr.mxu0 0.0
    %1342 = vmatpush1.xpose.msra.mxu0 %v1311
    %1343 = vmatprep.subr.mxu0 0.0
    %1344 = vmatpush1.xpose.msra.mxu0 %v1309
    %1345 = vmatprep.subr.mxu0 0.0
    %1346 = vmatpush1.xpose.msra.mxu0 %v1307
    %1347 = vmatprep.subr.mxu0 0.0
    %1348 = vmatpush2.xpose.msra.mxu0 0.0
    %1349 = vmatprep.subr.mxu0 0.0
    %1350 = vmatpush2.xpose.msra.mxu0 0.0
    %1351 = vmatprep.subr.mxu0 0.0
    %1352 = vmatpush2.xpose.msra.mxu0 0.0
    %1353 = vmatprep.subr.mxu0 0.0
    %1354 = vmatpush2.xpose.msra.mxu0 0.0
    %1355 = vmatprep.subr.mxu0 0.0
    %1356 = vmatpush2.xpose.msra.mxu0 0.0
    %1357 = vmatprep.subr.mxu0 0.0
    %1358 = vmatpush2.xpose.msra.mxu0 0.0
    %1359 = vmatprep.subr.mxu0 0.0
    %1360 = vmatpush2.xpose.msra.mxu0 0.0
    %1361 = vmatprep.subr.mxu0 0.0
    %1362 = vmatpush2.xpose.msra.mxu0 0.0
    %1363 = vmatprep.subr.mxu0 0.0
    %1364 = vmatpush2.xpose.msra.mxu0 0.0
    %1365 = vmatprep.subr.mxu0 0.0
    %1366 = vmatpush2.xpose.msra.mxu0 0.0
    %1367 = vmatprep.subr.mxu0 0.0
    %1368 = vmatpush2.xpose.msra.mxu0 0.0
    %1369 = vmatprep.subr.mxu0 0.0
    %1370 = vmatpush2.xpose.msra.mxu0 0.0
    %1371 = vmatprep.subr.mxu0 0.0
    %1372 = vmatpush2.xpose.msra.mxu0 0.0
    %1373 = vmatprep.subr.mxu0 0.0
    %1374 = vmatpush2.xpose.msra.mxu0 0.0
    %1375 = vmatprep.subr.mxu0 0.0
    %1376 = vmatpush2.xpose.msra.mxu0 0.0
    %1377 = vmatprep.subr.mxu0 0.0
    %1378 = vmatpush2.xpose.msra.mxu0 0.0
    %1379 = vmatprep.mubr.f32.mxu0 0.0
    %1380 = vmatmul.mubr.f32.gmra.mxu0 %v1299
    %v1381 = vpop.f32.mrf.mxu0
    %v1382 = vadd.f32 %v183, %v1381
    %v1383 = vpop.f32.mrf.mxu0
    %1384 = vmatprep.mubr.f32.mxu0 0.0
    %1385 = vmatmul.mubr.f32.gmra.mxu0 %v1301
    %v1386 = vpop.f32.mrf.mxu0
    %v1387 = vadd.f32 %v184, %v1386
    %v1388 = vpop.f32.mrf.mxu0
    %1389 = vmatprep.mubr.f32.mxu0 0.0
    %1390 = vmatmul.mubr.f32.gmra.mxu0 %v1303
    %v1391 = vpop.f32.mrf.mxu0
    %v1392 = vadd.f32 %v185, %v1391
    %v1393 = vpop.f32.mrf.mxu0
    %1394 = vmatprep.mubr.f32.mxu0 0.0
    %1395 = vmatmul.mubr.f32.gmra.mxu0 %v1305
    %v1396 = vpop.f32.mrf.mxu0
    %v1397 = vadd.f32 %v186, %v1396
    %v1398 = vpop.f32.mrf.mxu0
    %1399 = vdwg.mxu0
    %v1400 = vsel %vm867, %v1382, -inf
    %1401 = vmax.xlane.f32.xlu0 %v1400
    %v1402 = vpop.xlane.xlu0 %1401
    %v1403 = vsel %vm867, %v1387, -inf
    %1404 = vmax.xlane.f32.xlu0 %v1403
    %v1405 = vpop.xlane.xlu0 %1404
    %v1406 = vsel %vm867, %v1392, -inf
    %1407 = vmax.xlane.f32.xlu0 %v1406
    %v1408 = vpop.xlane.xlu0 %1407
    %v1409 = vsel %vm867, %v1397, -inf
    %1410 = vmax.xlane.f32.xlu0 %v1409
    %v1411 = vpop.xlane.xlu0 %1410
    %v1412 = vsub.f32 %v1382, %v1402
    %v1413 = vsub.f32 %v1387, %v1405
    %v1414 = vsub.f32 %v1392, %v1408
    %v1415 = vsub.f32 %v1397, %v1411
    %v1416 = vmul.f32 %v1412, 1.442695
    %v1417 = vpow.pop %v1416
    %v1418 = vmul.f32 %v1413, 1.442695
    %v1419 = vpow.pop %v1418
    %v1420 = vmul.f32 %v1414, 1.442695
    %v1421 = vpow.pop %v1420
    %v1422 = vmul.f32 %v1415, 1.442695
    %v1423 = vpow.pop %v1422
    %v1424 = vsel %vm867, %v1417, 0.0
    %1425 = vadd.xlane.f32.xlu0 %v1424
    %v1426 = vpop.xlane.xlu0 %1425
    %v1427 = vsel %vm867, %v1419, 0.0
    %1428 = vadd.xlane.f32.xlu0 %v1427
    %v1429 = vpop.xlane.xlu0 %1428
    %v1430 = vsel %vm867, %v1421, 0.0
    %1431 = vadd.xlane.f32.xlu0 %v1430
    %v1432 = vpop.xlane.xlu0 %1431
    %v1433 = vsel %vm867, %v1423, 0.0
    %1434 = vadd.xlane.f32.xlu0 %v1433
    %v1435 = vpop.xlane.xlu0 %1434
    %v1436 = vrcp.pop %v1426
    %v1437 = vrcp.pop %v1429
    %v1438 = vrcp.pop %v1432
    %v1439 = vrcp.pop %v1435
    %v1440 = vmul.f32 %v1417, %v1436
    %v1441 = vmul.f32 %v1419, %v1437
    %v1442 = vmul.f32 %v1421, %v1438
    %v1443 = vmul.f32 %v1423, %v1439
    %1444 = vrot.lane.b32.xlu0 %v521, 96
    %v1445 = vpop.permute.xlu0 %1444
    %1446 = vrot.lane.b32.xlu0 %v526, 96
    %v1447 = vpop.permute.xlu0 %1446
    %1448 = vrot.lane.b32.xlu0 %v531, 96
    %v1449 = vpop.permute.xlu0 %1448
    %1450 = vrot.lane.b32.xlu0 %v536, 96
    %v1451 = vpop.permute.xlu0 %1450
    %v1457 = vsel %vm867, %v1440, 0
    %v1460 = vsel %vm867, %v1441, 0
    %v1463 = vsel %vm867, %v1442, 0
    %v1466 = vsel %vm867, %v1443, 0
    %1468 = vmatprep.subr.mxu0 0.0
    %1469 = vmatpush1.msra.mxu0 0.0
    %1470 = vmatprep.subr.mxu0 0.0
    %1471 = vmatpush1.msra.mxu0 0.0
    %1472 = vmatprep.subr.mxu0 0.0
    %1473 = vmatpush1.msra.mxu0 0.0
    %1474 = vmatprep.subr.mxu0 0.0
    %1475 = vmatpush1.msra.mxu0 0.0
    %1476 = vmatprep.subr.mxu0 0.0
    %1477 = vmatpush1.msra.mxu0 0.0
    %1478 = vmatprep.subr.mxu0 0.0
    %1479 = vmatpush1.msra.mxu0 0.0
    %1480 = vmatprep.subr.mxu0 0.0
    %1481 = vmatpush1.msra.mxu0 0.0
    %1482 = vmatprep.subr.mxu0 0.0
    %1483 = vmatpush1.msra.mxu0 0.0
    %1484 = vmatprep.subr.mxu0 0.0
    %1485 = vmatpush1.msra.mxu0 0.0
    %1486 = vmatprep.subr.mxu0 0.0
    %1487 = vmatpush1.msra.mxu0 0.0
    %1488 = vmatprep.subr.mxu0 0.0
    %1489 = vmatpush1.msra.mxu0 0.0
    %1490 = vmatprep.subr.mxu0 0.0
    %1491 = vmatpush1.msra.mxu0 0.0
    %1492 = vmatprep.subr.mxu0 0.0
    %1493 = vmatpush1.msra.mxu0 %v1451
    %1494 = vmatprep.subr.mxu0 0.0
    %1495 = vmatpush1.msra.mxu0 %v1449
    %1496 = vmatprep.subr.mxu0 0.0
    %1497 = vmatpush1.msra.mxu0 %v1447
    %1498 = vmatprep.subr.mxu0 0.0
    %1499 = vmatpush1.msra.mxu0 %v1445
    %1500 = vmatprep.subr.mxu0 0.0
    %1501 = vmatpush2.msra.mxu0 0.0
    %1502 = vmatprep.subr.mxu0 0.0
    %1503 = vmatpush2.msra.mxu0 0.0
    %1504 = vmatprep.subr.mxu0 0.0
    %1505 = vmatpush2.msra.mxu0 0.0
    %1506 = vmatprep.subr.mxu0 0.0
    %1507 = vmatpush2.msra.mxu0 0.0
    %1508 = vmatprep.subr.mxu0 0.0
    %1509 = vmatpush2.msra.mxu0 0.0
    %1510 = vmatprep.subr.mxu0 0.0
    %1511 = vmatpush2.msra.mxu0 0.0
    %1512 = vmatprep.subr.mxu0 0.0
    %1513 = vmatpush2.msra.mxu0 0.0
    %1514 = vmatprep.subr.mxu0 0.0
    %1515 = vmatpush2.msra.mxu0 0.0
    %1516 = vmatprep.subr.mxu0 0.0
    %1517 = vmatpush2.msra.mxu0 0.0
    %1518 = vmatprep.subr.mxu0 0.0
    %1519 = vmatpush2.msra.mxu0 0.0
    %1520 = vmatprep.subr.mxu0 0.0
    %1521 = vmatpush2.msra.mxu0 0.0
    %1522 = vmatprep.subr.mxu0 0.0
    %1523 = vmatpush2.msra.mxu0 0.0
    %1524 = vmatprep.subr.mxu0 0.0
    %1525 = vmatpush2.msra.mxu0 0.0
    %1526 = vmatprep.subr.mxu0 0.0
    %1527 = vmatpush2.msra.mxu0 0.0
    %1528 = vmatprep.subr.mxu0 0.0
    %1529 = vmatpush2.msra.mxu0 0.0
    %1530 = vmatprep.subr.mxu0 0.0
    %1531 = vmatpush2.msra.mxu0 0.0
    %1532 = vmatprep.mubr.f32.mxu0 0.0
    %1533 = vmatmul.mubr.f32.gmra.mxu0 %v1457
    %v1534 = vpop.f32.mrf.mxu0
    %v1535 = vadd.f32 0.0, %v1534
    %v1536 = vpop.f32.mrf.mxu0
    %1537 = vmatprep.mubr.f32.mxu0 0.0
    %1538 = vmatmul.mubr.f32.gmra.mxu0 %v1460
    %v1539 = vpop.f32.mrf.mxu0
    %v1540 = vadd.f32 0.0, %v1539
    %v1541 = vpop.f32.mrf.mxu0
    %1542 = vmatprep.mubr.f32.mxu0 0.0
    %1543 = vmatmul.mubr.f32.gmra.mxu0 %v1463
    %v1544 = vpop.f32.mrf.mxu0
    %v1545 = vadd.f32 0.0, %v1544
    %v1546 = vpop.f32.mrf.mxu0
    %1547 = vmatprep.mubr.f32.mxu0 0.0
    %1548 = vmatmul.mubr.f32.gmra.mxu0 %v1466
    %v1549 = vpop.f32.mrf.mxu0
    %v1550 = vadd.f32 0.0, %v1549
    %v1551 = vpop.f32.mrf.mxu0
    %1552 = vdwg.mxu0
    %1553 = vrot.lane.b32.xlu0 %v644, 80
    %v1554 = vpop.permute.xlu0 %1553
    %1555 = vrot.lane.b32.xlu0 %v645, 80
    %v1556 = vpop.permute.xlu0 %1555
    %1557 = vrot.lane.b32.xlu0 %v646, 80
    %v1558 = vpop.permute.xlu0 %1557
    %1559 = vrot.lane.b32.xlu0 %v647, 80
    %v1560 = vpop.permute.xlu0 %1559
    %1561 = vrot.lane.b32.xlu0 %v753, 80
    %v1562 = vpop.permute.xlu0 %1561
    %1563 = vrot.lane.b32.xlu0 %v754, 80
    %v1564 = vpop.permute.xlu0 %1563
    %1565 = vrot.lane.b32.xlu0 %v755, 80
    %v1566 = vpop.permute.xlu0 %1565
    %1567 = vrot.lane.b32.xlu0 %v756, 80
    %v1568 = vpop.permute.xlu0 %1567
    %v1569 = vsel %vm757, %v1554, 0
    %v1571 = vsel %vm757, %v1556, 0
    %v1573 = vsel %vm757, %v1558, 0
    %v1575 = vsel %vm757, %v1560, 0
    %v1577 = vsel %vm757, %v1562, 0
    %v1579 = vsel %vm757, %v1564, 0
    %v1581 = vsel %vm757, %v1566, 0
    %v1583 = vsel %vm757, %v1568, 0
    %1585 = vmatprep.subr.mxu0 0.0
    %1586 = vmatpush1.xpose.msra.mxu0 0.0
    %1587 = vmatprep.subr.mxu0 0.0
    %1588 = vmatpush1.xpose.msra.mxu0 0.0
    %1589 = vmatprep.subr.mxu0 0.0
    %1590 = vmatpush1.xpose.msra.mxu0 0.0
    %1591 = vmatprep.subr.mxu0 0.0
    %1592 = vmatpush1.xpose.msra.mxu0 0.0
    %1593 = vmatprep.subr.mxu0 0.0
    %1594 = vmatpush1.xpose.msra.mxu0 0.0
    %1595 = vmatprep.subr.mxu0 0.0
    %1596 = vmatpush1.xpose.msra.mxu0 0.0
    %1597 = vmatprep.subr.mxu0 0.0
    %1598 = vmatpush1.xpose.msra.mxu0 0.0
    %1599 = vmatprep.subr.mxu0 0.0
    %1600 = vmatpush1.xpose.msra.mxu0 0.0
    %1601 = vmatprep.subr.mxu0 0.0
    %1602 = vmatpush1.xpose.msra.mxu0 0.0
    %1603 = vmatprep.subr.mxu0 0.0
    %1604 = vmatpush1.xpose.msra.mxu0 0.0
    %1605 = vmatprep.subr.mxu0 0.0
    %1606 = vmatpush1.xpose.msra.mxu0 0.0
    %1607 = vmatprep.subr.mxu0 0.0
    %1608 = vmatpush1.xpose.msra.mxu0 0.0
    %1609 = vmatprep.subr.mxu0 0.0
    %1610 = vmatpush1.xpose.msra.mxu0 %v1583
    %1611 = vmatprep.subr.mxu0 0.0
    %1612 = vmatpush1.xpose.msra.mxu0 %v1581
    %1613 = vmatprep.subr.mxu0 0.0
    %1614 = vmatpush1.xpose.msra.mxu0 %v1579
    %1615 = vmatprep.subr.mxu0 0.0
    %1616 = vmatpush1.xpose.msra.mxu0 %v1577
    %1617 = vmatprep.subr.mxu0 0.0
    %1618 = vmatpush2.xpose.msra.mxu0 0.0
    %1619 = vmatprep.subr.mxu0 0.0
    %1620 = vmatpush2.xpose.msra.mxu0 0.0
    %1621 = vmatprep.subr.mxu0 0.0
    %1622 = vmatpush2.xpose.msra.mxu0 0.0
    %1623 = vmatprep.subr.mxu0 0.0
    %1624 = vmatpush2.xpose.msra.mxu0 0.0
    %1625 = vmatprep.subr.mxu0 0.0
    %1626 = vmatpush2.xpose.msra.mxu0 0.0
    %1627 = vmatprep.subr.mxu0 0.0
    %1628 = vmatpush2.xpose.msra.mxu0 0.0
    %1629 = vmatprep.subr.mxu0 0.0
    %1630 = vmatpush2.xpose.msra.mxu0 0.0
    %1631 = vmatprep.subr.mxu0 0.0
    %1632 = vmatpush2.xpose.msra.mxu0 0.0
    %1633 = vmatprep.subr.mxu0 0.0
    %1634 = vmatpush2.xpose.msra.mxu0 0.0
    %1635 = vmatprep.subr.mxu0 0.0
    %1636 = vmatpush2.xpose.msra.mxu0 0.0
    %1637 = vmatprep.subr.mxu0 0.0
    %1638 = vmatpush2.xpose.msra.mxu0 0.0
    %1639 = vmatprep.subr.mxu0 0.0
    %1640 = vmatpush2.xpose.msra.mxu0 0.0
    %1641 = vmatprep.subr.mxu0 0.0
    %1642 = vmatpush2.xpose.msra.mxu0 0.0
    %1643 = vmatprep.subr.mxu0 0.0
    %1644 = vmatpush2.xpose.msra.mxu0 0.0
    %1645 = vmatprep.subr.mxu0 0.0
    %1646 = vmatpush2.xpose.msra.mxu0 0.0
    %1647 = vmatprep.subr.mxu0 0.0
    %1648 = vmatpush2.xpose.msra.mxu0 0.0
    %1649 = vmatprep.mubr.f32.mxu0 0.0
    %1650 = vmatmul.mubr.f32.gmra.mxu0 %v1569
    %v1651 = vpop.f32.mrf.mxu0
    %v1652 = vadd.f32 %v183, %v1651
    %v1653 = vpop.f32.mrf.mxu0
    %1654 = vmatprep.mubr.f32.mxu0 0.0
    %1655 = vmatmul.mubr.f32.gmra.mxu0 %v1571
    %v1656 = vpop.f32.mrf.mxu0
    %v1657 = vadd.f32 %v184, %v1656
    %v1658 = vpop.f32.mrf.mxu0
    %1659 = vmatprep.mubr.f32.mxu0 0.0
    %1660 = vmatmul.mubr.f32.gmra.mxu0 %v1573
    %v1661 = vpop.f32.mrf.mxu0
    %v1662 = vadd.f32 %v185, %v1661
    %v1663 = vpop.f32.mrf.mxu0
    %1664 = vmatprep.mubr.f32.mxu0 0.0
    %1665 = vmatmul.mubr.f32.gmra.mxu0 %v1575
    %v1666 = vpop.f32.mrf.mxu0
    %v1667 = vadd.f32 %v186, %v1666
    %v1668 = vpop.f32.mrf.mxu0
    %1669 = vdwg.mxu0
    %v1670 = vsel %vm867, %v1652, -inf
    %1671 = vmax.xlane.f32.xlu0 %v1670
    %v1672 = vpop.xlane.xlu0 %1671
    %v1673 = vsel %vm867, %v1657, -inf
    %1674 = vmax.xlane.f32.xlu0 %v1673
    %v1675 = vpop.xlane.xlu0 %1674
    %v1676 = vsel %vm867, %v1662, -inf
    %1677 = vmax.xlane.f32.xlu0 %v1676
    %v1678 = vpop.xlane.xlu0 %1677
    %v1679 = vsel %vm867, %v1667, -inf
    %1680 = vmax.xlane.f32.xlu0 %v1679
    %v1681 = vpop.xlane.xlu0 %1680
    %v1682 = vsub.f32 %v1652, %v1672
    %v1683 = vsub.f32 %v1657, %v1675
    %v1684 = vsub.f32 %v1662, %v1678
    %v1685 = vsub.f32 %v1667, %v1681
    %v1686 = vmul.f32 %v1682, 1.442695
    %v1687 = vpow.pop %v1686
    %v1688 = vmul.f32 %v1683, 1.442695
    %v1689 = vpow.pop %v1688
    %v1690 = vmul.f32 %v1684, 1.442695
    %v1691 = vpow.pop %v1690
    %v1692 = vmul.f32 %v1685, 1.442695
    %v1693 = vpow.pop %v1692
    %v1694 = vsel %vm867, %v1687, 0.0
    %1695 = vadd.xlane.f32.xlu0 %v1694
    %v1696 = vpop.xlane.xlu0 %1695
    %v1697 = vsel %vm867, %v1689, 0.0
    %1698 = vadd.xlane.f32.xlu0 %v1697
    %v1699 = vpop.xlane.xlu0 %1698
    %v1700 = vsel %vm867, %v1691, 0.0
    %1701 = vadd.xlane.f32.xlu0 %v1700
    %v1702 = vpop.xlane.xlu0 %1701
    %v1703 = vsel %vm867, %v1693, 0.0
    %1704 = vadd.xlane.f32.xlu0 %v1703
    %v1705 = vpop.xlane.xlu0 %1704
    %v1706 = vrcp.pop %v1696
    %v1707 = vrcp.pop %v1699
    %v1708 = vrcp.pop %v1702
    %v1709 = vrcp.pop %v1705
    %v1710 = vmul.f32 %v1687, %v1706
    %v1711 = vmul.f32 %v1689, %v1707
    %v1712 = vmul.f32 %v1691, %v1708
    %v1713 = vmul.f32 %v1693, %v1709
    %1714 = vrot.lane.b32.xlu0 %v521, 80
    %v1715 = vpop.permute.xlu0 %1714
    %1716 = vrot.lane.b32.xlu0 %v526, 80
    %v1717 = vpop.permute.xlu0 %1716
    %1718 = vrot.lane.b32.xlu0 %v531, 80
    %v1719 = vpop.permute.xlu0 %1718
    %1720 = vrot.lane.b32.xlu0 %v536, 80
    %v1721 = vpop.permute.xlu0 %1720
    %v1727 = vsel %vm867, %v1710, 0
    %v1730 = vsel %vm867, %v1711, 0
    %v1733 = vsel %vm867, %v1712, 0
    %v1736 = vsel %vm867, %v1713, 0
    %1738 = vmatprep.subr.mxu0 0.0
    %1739 = vmatpush1.msra.mxu0 0.0
    %1740 = vmatprep.subr.mxu0 0.0
    %1741 = vmatpush1.msra.mxu0 0.0
    %1742 = vmatprep.subr.mxu0 0.0
    %1743 = vmatpush1.msra.mxu0 0.0
    %1744 = vmatprep.subr.mxu0 0.0
    %1745 = vmatpush1.msra.mxu0 0.0
    %1746 = vmatprep.subr.mxu0 0.0
    %1747 = vmatpush1.msra.mxu0 0.0
    %1748 = vmatprep.subr.mxu0 0.0
    %1749 = vmatpush1.msra.mxu0 0.0
    %1750 = vmatprep.subr.mxu0 0.0
    %1751 = vmatpush1.msra.mxu0 0.0
    %1752 = vmatprep.subr.mxu0 0.0
    %1753 = vmatpush1.msra.mxu0 0.0
    %1754 = vmatprep.subr.mxu0 0.0
    %1755 = vmatpush1.msra.mxu0 0.0
    %1756 = vmatprep.subr.mxu0 0.0
    %1757 = vmatpush1.msra.mxu0 0.0
    %1758 = vmatprep.subr.mxu0 0.0
    %1759 = vmatpush1.msra.mxu0 0.0
    %1760 = vmatprep.subr.mxu0 0.0
    %1761 = vmatpush1.msra.mxu0 0.0
    %1762 = vmatprep.subr.mxu0 0.0
    %1763 = vmatpush1.msra.mxu0 %v1721
    %1764 = vmatprep.subr.mxu0 0.0
    %1765 = vmatpush1.msra.mxu0 %v1719
    %1766 = vmatprep.subr.mxu0 0.0
    %1767 = vmatpush1.msra.mxu0 %v1717
    %1768 = vmatprep.subr.mxu0 0.0
    %1769 = vmatpush1.msra.mxu0 %v1715
    %1770 = vmatprep.subr.mxu0 0.0
    %1771 = vmatpush2.msra.mxu0 0.0
    %1772 = vmatprep.subr.mxu0 0.0
    %1773 = vmatpush2.msra.mxu0 0.0
    %1774 = vmatprep.subr.mxu0 0.0
    %1775 = vmatpush2.msra.mxu0 0.0
    %1776 = vmatprep.subr.mxu0 0.0
    %1777 = vmatpush2.msra.mxu0 0.0
    %1778 = vmatprep.subr.mxu0 0.0
    %1779 = vmatpush2.msra.mxu0 0.0
    %1780 = vmatprep.subr.mxu0 0.0
    %1781 = vmatpush2.msra.mxu0 0.0
    %1782 = vmatprep.subr.mxu0 0.0
    %1783 = vmatpush2.msra.mxu0 0.0
    %1784 = vmatprep.subr.mxu0 0.0
    %1785 = vmatpush2.msra.mxu0 0.0
    %1786 = vmatprep.subr.mxu0 0.0
    %1787 = vmatpush2.msra.mxu0 0.0
    %1788 = vmatprep.subr.mxu0 0.0
    %1789 = vmatpush2.msra.mxu0 0.0
    %1790 = vmatprep.subr.mxu0 0.0
    %1791 = vmatpush2.msra.mxu0 0.0
    %1792 = vmatprep.subr.mxu0 0.0
    %1793 = vmatpush2.msra.mxu0 0.0
    %1794 = vmatprep.subr.mxu0 0.0
    %1795 = vmatpush2.msra.mxu0 0.0
    %1796 = vmatprep.subr.mxu0 0.0
    %1797 = vmatpush2.msra.mxu0 0.0
    %1798 = vmatprep.subr.mxu0 0.0
    %1799 = vmatpush2.msra.mxu0 0.0
    %1800 = vmatprep.subr.mxu0 0.0
    %1801 = vmatpush2.msra.mxu0 0.0
    %1802 = vmatprep.mubr.f32.mxu0 0.0
    %1803 = vmatmul.mubr.f32.gmra.mxu0 %v1727
    %v1804 = vpop.f32.mrf.mxu0
    %v1805 = vadd.f32 0.0, %v1804
    %v1806 = vpop.f32.mrf.mxu0
    %1807 = vmatprep.mubr.f32.mxu0 0.0
    %1808 = vmatmul.mubr.f32.gmra.mxu0 %v1730
    %v1809 = vpop.f32.mrf.mxu0
    %v1810 = vadd.f32 0.0, %v1809
    %v1811 = vpop.f32.mrf.mxu0
    %1812 = vmatprep.mubr.f32.mxu0 0.0
    %1813 = vmatmul.mubr.f32.gmra.mxu0 %v1733
    %v1814 = vpop.f32.mrf.mxu0
    %v1815 = vadd.f32 0.0, %v1814
    %v1816 = vpop.f32.mrf.mxu0
    %1817 = vmatprep.mubr.f32.mxu0 0.0
    %1818 = vmatmul.mubr.f32.gmra.mxu0 %v1736
    %v1819 = vpop.f32.mrf.mxu0
    %v1820 = vadd.f32 0.0, %v1819
    %v1821 = vpop.f32.mrf.mxu0
    %1822 = vdwg.mxu0
    %1827 = vrot.lane.b32.xlu0 %v1265, 16
    %v1828 = vpop.permute.xlu0 %1827
    %1829 = vrot.lane.b32.xlu0 %v1270, 16
    %v1830 = vpop.permute.xlu0 %1829
    %1831 = vrot.lane.b32.xlu0 %v1275, 16
    %v1832 = vpop.permute.xlu0 %1831
    %1833 = vrot.lane.b32.xlu0 %v1280, 16
    %v1834 = vpop.permute.xlu0 %1833
    %1843 = vrot.lane.b32.xlu0 %v1535, 32
    %v1844 = vpop.permute.xlu0 %1843
    %1845 = vrot.lane.b32.xlu0 %v1540, 32
    %v1846 = vpop.permute.xlu0 %1845
    %1847 = vrot.lane.b32.xlu0 %v1545, 32
    %v1848 = vpop.permute.xlu0 %1847
    %1849 = vrot.lane.b32.xlu0 %v1550, 32
    %v1850 = vpop.permute.xlu0 %1849
    %1859 = vrot.lane.b32.xlu0 %v1805, 48
    %v1860 = vpop.permute.xlu0 %1859
    %1861 = vrot.lane.b32.xlu0 %v1810, 48
    %v1862 = vpop.permute.xlu0 %1861
    %1863 = vrot.lane.b32.xlu0 %v1815, 48
    %v1864 = vpop.permute.xlu0 %1863
    %1865 = vrot.lane.b32.xlu0 %v1820, 48
    %v1866 = vpop.permute.xlu0 %1865
    %v1871 = vsel %vm757, %v991, %v1828
    %v1872 = vsel %vm757, %v996, %v1830
    %v1873 = vsel %vm757, %v1001, %v1832
    %v1874 = vsel %vm757, %v1006, %v1834
    %v1875 = vsel %vm867, %v1871, %v1844
    %v1876 = vsel %vm867, %v1872, %v1846
    %v1877 = vsel %vm867, %v1873, %v1848
    %v1878 = vsel %vm867, %v1874, %v1850
    %vm1879 = vcmask 392192
    %v1880 = vsel %vm1879, %v1875, %v1860
    %v1881 = vsel %vm1879, %v1876, %v1862
    %v1882 = vsel %vm1879, %v1877, %v1864
    %v1883 = vsel %vm1879, %v1878, %v1866
    %v1884 = vld [vmem:[#allocation14] sm:$0xff]
    %v1885 = vld [vmem:[#allocation14 + $0x8] sm:$0xff]
    %v1886 = vld [vmem:[#allocation14 + $0x10] sm:$0xff]
    %v1887 = vld [vmem:[#allocation14 + $0x18] sm:$0xff]
    %v1888 = vld [vmem:[#allocation14 + $0x20] sm:$0xff]
    %v1889 = vld [vmem:[#allocation14 + $0x28] sm:$0xff]
    %v1890 = vld [vmem:[#allocation14 + $0x30] sm:$0xff]
    %v1891 = vld [vmem:[#allocation14 + $0x38] sm:$0xff]
    %v1893 = vsel %vm208, %v1880, 0
    %v1896 = vsel %vm208, %v1881, 0
    %v1899 = vsel %vm208, %v1882, 0
    %v1902 = vsel %vm208, %v1883, 0
    %1904 = vmatprep.subr.mxu0 0.0
    %1905 = vmatpush1.msra.mxu0 0.0
    %1906 = vmatprep.subr.mxu0 0.0
    %1907 = vmatpush1.msra.mxu0 0.0
    %1908 = vmatprep.subr.mxu0 0.0
    %1909 = vmatpush1.msra.mxu0 0.0
    %1910 = vmatprep.subr.mxu0 0.0
    %1911 = vmatpush1.msra.mxu0 0.0
    %1912 = vmatprep.subr.mxu0 0.0
    %1913 = vmatpush1.msra.mxu0 0.0
    %1914 = vmatprep.subr.mxu0 0.0
    %1915 = vmatpush1.msra.mxu0 0.0
    %1916 = vmatprep.subr.mxu0 0.0
    %1917 = vmatpush1.msra.mxu0 0.0
    %1918 = vmatprep.subr.mxu0 0.0
    %1919 = vmatpush1.msra.mxu0 0.0
    %1920 = vmatprep.subr.mxu0 0.0
    %1921 = vmatpush1.msra.mxu0 %v1891
    %1922 = vmatprep.subr.mxu0 0.0
    %1923 = vmatpush1.msra.mxu0 %v1890
    %1924 = vmatprep.subr.mxu0 0.0
    %1925 = vmatpush1.msra.mxu0 %v1889
    %1926 = vmatprep.subr.mxu0 0.0
    %1927 = vmatpush1.msra.mxu0 %v1888
    %1928 = vmatprep.subr.mxu0 0.0
    %1929 = vmatpush1.msra.mxu0 %v1887
    %1930 = vmatprep.subr.mxu0 0.0
    %1931 = vmatpush1.msra.mxu0 %v1886
    %1932 = vmatprep.subr.mxu0 0.0
    %1933 = vmatpush1.msra.mxu0 %v1885
    %1934 = vmatprep.subr.mxu0 0.0
    %1935 = vmatpush1.msra.mxu0 %v1884
    %1936 = vmatprep.subr.mxu0 0.0
    %1937 = vmatpush2.msra.mxu0 0.0
    %1938 = vmatprep.subr.mxu0 0.0
    %1939 = vmatpush2.msra.mxu0 0.0
    %1940 = vmatprep.subr.mxu0 0.0
    %1941 = vmatpush2.msra.mxu0 0.0
    %1942 = vmatprep.subr.mxu0 0.0
    %1943 = vmatpush2.msra.mxu0 0.0
    %1944 = vmatprep.subr.mxu0 0.0
    %1945 = vmatpush2.msra.mxu0 0.0
    %1946 = vmatprep.subr.mxu0 0.0
    %1947 = vmatpush2.msra.mxu0 0.0
    %1948 = vmatprep.subr.mxu0 0.0
    %1949 = vmatpush2.msra.mxu0 0.0
    %1950 = vmatprep.subr.mxu0 0.0
    %1951 = vmatpush2.msra.mxu0 0.0
    %1952 = vmatprep.subr.mxu0 0.0
    %1953 = vmatpush2.msra.mxu0 0.0
    %1954 = vmatprep.subr.mxu0 0.0
    %1955 = vmatpush2.msra.mxu0 0.0
    %1956 = vmatprep.subr.mxu0 0.0
    %1957 = vmatpush2.msra.mxu0 0.0
    %1958 = vmatprep.subr.mxu0 0.0
    %1959 = vmatpush2.msra.mxu0 0.0
    %1960 = vmatprep.subr.mxu0 0.0
    %1961 = vmatpush2.msra.mxu0 0.0
    %1962 = vmatprep.subr.mxu0 0.0
    %1963 = vmatpush2.msra.mxu0 0.0
    %1964 = vmatprep.subr.mxu0 0.0
    %1965 = vmatpush2.msra.mxu0 0.0
    %1966 = vmatprep.subr.mxu0 0.0
    %1967 = vmatpush2.msra.mxu0 0.0
    %1968 = vmatprep.mubr.f32.mxu0 0.0
    %1969 = vmatmul.mubr.f32.gmra.mxu0 %v1893
    %v1970 = vpop.f32.mrf.mxu0
    %v1971 = vadd.f32 0.0, %v1970
    %v1972 = vpop.f32.mrf.mxu0
    %1973 = vmatprep.mubr.f32.mxu0 0.0
    %1974 = vmatmul.mubr.f32.gmra.mxu0 %v1896
    %v1975 = vpop.f32.mrf.mxu0
    %v1976 = vadd.f32 0.0, %v1975
    %v1977 = vpop.f32.mrf.mxu0
    %1978 = vmatprep.mubr.f32.mxu0 0.0
    %1979 = vmatmul.mubr.f32.gmra.mxu0 %v1899
    %v1980 = vpop.f32.mrf.mxu0
    %v1981 = vadd.f32 0.0, %v1980
    %v1982 = vpop.f32.mrf.mxu0
    %1983 = vmatprep.mubr.f32.mxu0 0.0
    %1984 = vmatmul.mubr.f32.gmra.mxu0 %v1902
    %v1985 = vpop.f32.mrf.mxu0
    %v1986 = vadd.f32 0.0, %v1985
    %v1987 = vpop.f32.mrf.mxu0
    %1988 = vdwg.mxu0
    %v1989 = vadd.f32 %v179, %v1971
    %v1990 = vadd.f32 %v180, %v1976
    %v1991 = vadd.f32 %v181, %v1981
    %v1992 = vadd.f32 %v182, %v1986
    %v1993 = vld [vmem:[%s10] sm:$0x1]
    %v1994 = vmul.f32 %v1989, %v1989
    %v1995 = vmul.f32 %v1990, %v1990
    %v1996 = vmul.f32 %v1991, %v1991
    %v1997 = vmul.f32 %v1992, %v1992
    %v1998 = vsel %vm208, %v1994, 0.0
    %1999 = vadd.xlane.f32.xlu0 %v1998
    %v2000 = vpop.xlane.xlu0 %1999
    %v2001 = vsel %vm208, %v1995, 0.0
    %2002 = vadd.xlane.f32.xlu0 %v2001
    %v2003 = vpop.xlane.xlu0 %2002
    %v2004 = vsel %vm208, %v1996, 0.0
    %2005 = vadd.xlane.f32.xlu0 %v2004
    %v2006 = vpop.xlane.xlu0 %2005
    %v2007 = vsel %vm208, %v1997, 0.0
    %2008 = vadd.xlane.f32.xlu0 %v2007
    %v2009 = vpop.xlane.xlu0 %2008
    %v2010 = vmul.f32 %v2000, %v221
    %v2011 = vmul.f32 %v2003, %v221
    %v2012 = vmul.f32 %v2006, %v221
    %v2013 = vmul.f32 %v2009, %v221
    %v2014 = vadd.f32 %v2010, 1e-05
    %v2015 = vadd.f32 %v2011, 1e-05
    %v2016 = vadd.f32 %v2012, 1e-05
    %v2017 = vadd.f32 %v2013, 1e-05
    %v2018 = vrsqrt.pop %v2014
    %v2019 = vrsqrt.pop %v2015
    %v2020 = vrsqrt.pop %v2016
    %v2021 = vrsqrt.pop %v2017
    %v2022 = vmul.f32 %v1989, %v2018
    %v2023 = vmul.f32 %v1990, %v2019
    %v2024 = vmul.f32 %v1991, %v2020
    %v2025 = vmul.f32 %v1992, %v2021
    %v2027 = vlaneseq
    %v2028 = vshrl.u32 %v2027, 7
    %v2029 = vsub.s32 0, %v2028
    %v2030 = vrot.slane %v1993, %v2029
    %v2032 = vmul.f32 %v2022, %v2030
    %v2033 = vmul.f32 %v2023, %v2030
    %v2034 = vmul.f32 %v2024, %v2030
    %v2035 = vmul.f32 %v2025, %v2030
    %v2036 = vld [vmem:[%s11] sm:$0xff]
    %v2037 = vld [vmem:[%s11 + $0x8] sm:$0xff]
    %v2038 = vld [vmem:[%s11 + $0x10] sm:$0xff]
    %v2039 = vld [vmem:[%s11 + $0x18] sm:$0xff]
    %v2040 = vld [vmem:[%s11 + $0x20] sm:$0xff]
    %v2041 = vld [vmem:[%s11 + $0x28] sm:$0xff]
    %v2042 = vld [vmem:[%s11 + $0x30] sm:$0xff]
    %v2043 = vld [vmem:[%s11 + $0x38] sm:$0xff]
    %v2044 = vld [vmem:[%s11 + $0x40] sm:$0xff]
    %v2045 = vld [vmem:[%s11 + $0x48] sm:$0xff]
    %v2046 = vld [vmem:[%s11 + $0x50] sm:$0xff]
    %v2047 = vld [vmem:[%s11 + $0x58] sm:$0xff]
    %v2048 = vld [vmem:[%s11 + $0x60] sm:$0xff]
    %v2049 = vld [vmem:[%s11 + $0x68] sm:$0xff]
    %v2050 = vld [vmem:[%s11 + $0x70] sm:$0xff]
    %v2051 = vld [vmem:[%s11 + $0x78] sm:$0xff]
    %v2053 = vsel %vm208, %v2032, 0
    %v2056 = vsel %vm208, %v2033, 0
    %v2059 = vsel %vm208, %v2034, 0
    %v2062 = vsel %vm208, %v2035, 0
    %2064 = vmatprep.subr.mxu0 0.0
    %2065 = vmatpush1.msra.mxu0 0.0
    %2066 = vmatprep.subr.mxu0 0.0
    %2067 = vmatpush1.msra.mxu0 0.0
    %2068 = vmatprep.subr.mxu0 0.0
    %2069 = vmatpush1.msra.mxu0 0.0
    %2070 = vmatprep.subr.mxu0 0.0
    %2071 = vmatpush1.msra.mxu0 0.0
    %2072 = vmatprep.subr.mxu0 0.0
    %2073 = vmatpush1.msra.mxu0 0.0
    %2074 = vmatprep.subr.mxu0 0.0
    %2075 = vmatpush1.msra.mxu0 0.0
    %2076 = vmatprep.subr.mxu0 0.0
    %2077 = vmatpush1.msra.mxu0 0.0
    %2078 = vmatprep.subr.mxu0 0.0
    %2079 = vmatpush1.msra.mxu0 0.0
    %2080 = vmatprep.subr.mxu0 %v2051
    %2081 = vmatpush1.msra.mxu0 %v2050
    %2082 = vmatprep.subr.mxu0 %v2049
    %2083 = vmatpush1.msra.mxu0 %v2048
    %2084 = vmatprep.subr.mxu0 %v2047
    %2085 = vmatpush1.msra.mxu0 %v2046
    %2086 = vmatprep.subr.mxu0 %v2045
    %2087 = vmatpush1.msra.mxu0 %v2044
    %2088 = vmatprep.subr.mxu0 %v2043
    %2089 = vmatpush1.msra.mxu0 %v2042
    %2090 = vmatprep.subr.mxu0 %v2041
    %2091 = vmatpush1.msra.mxu0 %v2040
    %2092 = vmatprep.subr.mxu0 %v2039
    %2093 = vmatpush1.msra.mxu0 %v2038
    %2094 = vmatprep.subr.mxu0 %v2037
    %2095 = vmatpush1.msra.mxu0 %v2036
    %2096 = vmatprep.subr.mxu0 0.0
    %2097 = vmatpush2.msra.mxu0 0.0
    %2098 = vmatprep.subr.mxu0 0.0
    %2099 = vmatpush2.msra.mxu0 0.0
    %2100 = vmatprep.subr.mxu0 0.0
    %2101 = vmatpush2.msra.mxu0 0.0
    %2102 = vmatprep.subr.mxu0 0.0
    %2103 = vmatpush2.msra.mxu0 0.0
    %2104 = vmatprep.subr.mxu0 0.0
    %2105 = vmatpush2.msra.mxu0 0.0
    %2106 = vmatprep.subr.mxu0 0.0
    %2107 = vmatpush2.msra.mxu0 0.0
    %2108 = vmatprep.subr.mxu0 0.0
    %2109 = vmatpush2.msra.mxu0 0.0
    %2110 = vmatprep.subr.mxu0 0.0
    %2111 = vmatpush2.msra.mxu0 0.0
    %2112 = vmatprep.subr.mxu0 0.0
    %2113 = vmatpush2.msra.mxu0 0.0
    %2114 = vmatprep.subr.mxu0 0.0
    %2115 = vmatpush2.msra.mxu0 0.0
    %2116 = vmatprep.subr.mxu0 0.0
    %2117 = vmatpush2.msra.mxu0 0.0
    %2118 = vmatprep.subr.mxu0 0.0
    %2119 = vmatpush2.msra.mxu0 0.0
    %2120 = vmatprep.subr.mxu0 0.0
    %2121 = vmatpush2.msra.mxu0 0.0
    %2122 = vmatprep.subr.mxu0 0.0
    %2123 = vmatpush2.msra.mxu0 0.0
    %2124 = vmatprep.subr.mxu0 0.0
    %2125 = vmatpush2.msra.mxu0 0.0
    %2126 = vmatprep.subr.mxu0 0.0
    %2127 = vmatpush2.msra.mxu0 0.0
    %2128 = vmatprep.mubr.f32.mxu0 0.0
    %2129 = vmatmul.mubr.f32.gmra.mxu0 %v2053
    %v2130 = vpop.f32.mrf.mxu0
    %v2131 = vadd.f32 0.0, %v2130
    %v2132 = vpop.f32.mrf.mxu0
    %v2133 = vadd.f32 0.0, %v2132
    %2134 = vmatprep.mubr.f32.mxu0 0.0
    %2135 = vmatmul.mubr.f32.gmra.mxu0 %v2056
    %v2136 = vpop.f32.mrf.mxu0
    %v2137 = vadd.f32 0.0, %v2136
    %v2138 = vpop.f32.mrf.mxu0
    %v2139 = vadd.f32 0.0, %v2138
    %2140 = vmatprep.mubr.f32.mxu0 0.0
    %2141 = vmatmul.mubr.f32.gmra.mxu0 %v2059
    %v2142 = vpop.f32.mrf.mxu0
    %v2143 = vadd.f32 0.0, %v2142
    %v2144 = vpop.f32.mrf.mxu0
    %v2145 = vadd.f32 0.0, %v2144
    %2146 = vmatprep.mubr.f32.mxu0 0.0
    %2147 = vmatmul.mubr.f32.gmra.mxu0 %v2062
    %v2148 = vpop.f32.mrf.mxu0
    %v2149 = vadd.f32 0.0, %v2148
    %v2150 = vpop.f32.mrf.mxu0
    %v2151 = vadd.f32 0.0, %v2150
    %2152 = vdwg.mxu0
    %v2153 = vld [vmem:[%s12] sm:$0xff]
    %v2154 = vld [vmem:[%s12 + $0x8] sm:$0xff]
    %v2155 = vld [vmem:[%s12 + $0x10] sm:$0xff]
    %v2156 = vld [vmem:[%s12 + $0x18] sm:$0xff]
    %v2157 = vld [vmem:[%s12 + $0x20] sm:$0xff]
    %v2158 = vld [vmem:[%s12 + $0x28] sm:$0xff]
    %v2159 = vld [vmem:[%s12 + $0x30] sm:$0xff]
    %v2160 = vld [vmem:[%s12 + $0x38] sm:$0xff]
    %v2161 = vld [vmem:[%s12 + $0x40] sm:$0xff]
    %v2162 = vld [vmem:[%s12 + $0x48] sm:$0xff]
    %v2163 = vld [vmem:[%s12 + $0x50] sm:$0xff]
    %v2164 = vld [vmem:[%s12 + $0x58] sm:$0xff]
    %v2165 = vld [vmem:[%s12 + $0x60] sm:$0xff]
    %v2166 = vld [vmem:[%s12 + $0x68] sm:$0xff]
    %v2167 = vld [vmem:[%s12 + $0x70] sm:$0xff]
    %v2168 = vld [vmem:[%s12 + $0x78] sm:$0xff]
    %2169 = vmatprep.subr.mxu0 0.0
    %2170 = vmatpush1.msra.mxu0 0.0
    %2171 = vmatprep.subr.mxu0 0.0
    %2172 = vmatpush1.msra.mxu0 0.0
    %2173 = vmatprep.subr.mxu0 0.0
    %2174 = vmatpush1.msra.mxu0 0.0
    %2175 = vmatprep.subr.mxu0 0.0
    %2176 = vmatpush1.msra.mxu0 0.0
    %2177 = vmatprep.subr.mxu0 0.0
    %2178 = vmatpush1.msra.mxu0 0.0
    %2179 = vmatprep.subr.mxu0 0.0
    %2180 = vmatpush1.msra.mxu0 0.0
    %2181 = vmatprep.subr.mxu0 0.0
    %2182 = vmatpush1.msra.mxu0 0.0
    %2183 = vmatprep.subr.mxu0 0.0
    %2184 = vmatpush1.msra.mxu0 0.0
    %2185 = vmatprep.subr.mxu0 %v2168
    %2186 = vmatpush1.msra.mxu0 %v2167
    %2187 = vmatprep.subr.mxu0 %v2166
    %2188 = vmatpush1.msra.mxu0 %v2165
    %2189 = vmatprep.subr.mxu0 %v2164
    %2190 = vmatpush1.msra.mxu0 %v2163
    %2191 = vmatprep.subr.mxu0 %v2162
    %2192 = vmatpush1.msra.mxu0 %v2161
    %2193 = vmatprep.subr.mxu0 %v2160
    %2194 = vmatpush1.msra.mxu0 %v2159
    %2195 = vmatprep.subr.mxu0 %v2158
    %2196 = vmatpush1.msra.mxu0 %v2157
    %2197 = vmatprep.subr.mxu0 %v2156
    %2198 = vmatpush1.msra.mxu0 %v2155
    %2199 = vmatprep.subr.mxu0 %v2154
    %2200 = vmatpush1.msra.mxu0 %v2153
    %2201 = vmatprep.subr.mxu0 0.0
    %2202 = vmatpush2.msra.mxu0 0.0
    %2203 = vmatprep.subr.mxu0 0.0
    %2204 = vmatpush2.msra.mxu0 0.0
    %2205 = vmatprep.subr.mxu0 0.0
    %2206 = vmatpush2.msra.mxu0 0.0
    %2207 = vmatprep.subr.mxu0 0.0
    %2208 = vmatpush2.msra.mxu0 0.0
    %2209 = vmatprep.subr.mxu0 0.0
    %2210 = vmatpush2.msra.mxu0 0.0
    %2211 = vmatprep.subr.mxu0 0.0
    %2212 = vmatpush2.msra.mxu0 0.0
    %2213 = vmatprep.subr.mxu0 0.0
    %2214 = vmatpush2.msra.mxu0 0.0
    %2215 = vmatprep.subr.mxu0 0.0
    %2216 = vmatpush2.msra.mxu0 0.0
    %2217 = vmatprep.subr.mxu0 0.0
    %2218 = vmatpush2.msra.mxu0 0.0
    %2219 = vmatprep.subr.mxu0 0.0
    %2220 = vmatpush2.msra.mxu0 0.0
    %2221 = vmatprep.subr.mxu0 0.0
    %2222 = vmatpush2.msra.mxu0 0.0
    %2223 = vmatprep.subr.mxu0 0.0
    %2224 = vmatpush2.msra.mxu0 0.0
    %2225 = vmatprep.subr.mxu0 0.0
    %2226 = vmatpush2.msra.mxu0 0.0
    %2227 = vmatprep.subr.mxu0 0.0
    %2228 = vmatpush2.msra.mxu0 0.0
    %2229 = vmatprep.subr.mxu0 0.0
    %2230 = vmatpush2.msra.mxu0 0.0
    %2231 = vmatprep.subr.mxu0 0.0
    %2232 = vmatpush2.msra.mxu0 0.0
    %2233 = vmatprep.mubr.f32.mxu0 0.0
    %2234 = vmatmul.mubr.f32.gmra.mxu0 %v2053
    %v2235 = vpop.f32.mrf.mxu0
    %v2236 = vadd.f32 0.0, %v2235
    %v2237 = vpop.f32.mrf.mxu0
    %v2238 = vadd.f32 0.0, %v2237
    %2239 = vmatprep.mubr.f32.mxu0 0.0
    %2240 = vmatmul.mubr.f32.gmra.mxu0 %v2056
    %v2241 = vpop.f32.mrf.mxu0
    %v2242 = vadd.f32 0.0, %v2241
    %v2243 = vpop.f32.mrf.mxu0
    %v2244 = vadd.f32 0.0, %v2243
    %2245 = vmatprep.mubr.f32.mxu0 0.0
    %2246 = vmatmul.mubr.f32.gmra.mxu0 %v2059
    %v2247 = vpop.f32.mrf.mxu0
    %v2248 = vadd.f32 0.0, %v2247
    %v2249 = vpop.f32.mrf.mxu0
    %v2250 = vadd.f32 0.0, %v2249
    %2251 = vmatprep.mubr.f32.mxu0 0.0
    %2252 = vmatmul.mubr.f32.gmra.mxu0 %v2062
    %v2253 = vpop.f32.mrf.mxu0
    %v2254 = vadd.f32 0.0, %v2253
    %v2255 = vpop.f32.mrf.mxu0
    %v2256 = vadd.f32 0.0, %v2255
    %2257 = vdwg.mxu0
    %v2258 = vmul.f32 %v2131, 0.5
    %v2259 = vmul.f32 %v2133, 0.5
    %v2260 = vmul.f32 %v2137, 0.5
    %v2261 = vmul.f32 %v2139, 0.5
    %v2262 = vmul.f32 %v2143, 0.5
    %v2263 = vmul.f32 %v2145, 0.5
    %v2264 = vmul.f32 %v2149, 0.5
    %v2265 = vmul.f32 %v2151, 0.5
    %v2266 = vtanh.pop %v2258
    %v2267 = vtanh.pop %v2259
    %v2268 = vtanh.pop %v2260
    %v2269 = vtanh.pop %v2261
    %v2270 = vtanh.pop %v2262
    %v2271 = vtanh.pop %v2263
    %v2272 = vtanh.pop %v2264
    %v2273 = vtanh.pop %v2265
    %v2274 = vmul.f32 %v2266, 0.5
    %v2275 = vmul.f32 %v2267, 0.5
    %v2276 = vmul.f32 %v2268, 0.5
    %v2277 = vmul.f32 %v2269, 0.5
    %v2278 = vmul.f32 %v2270, 0.5
    %v2279 = vmul.f32 %v2271, 0.5
    %v2280 = vmul.f32 %v2272, 0.5
    %v2281 = vmul.f32 %v2273, 0.5
    %v2282 = vadd.f32 %v2274, 0.5
    %v2283 = vadd.f32 %v2275, 0.5
    %v2284 = vadd.f32 %v2276, 0.5
    %v2285 = vadd.f32 %v2277, 0.5
    %v2286 = vadd.f32 %v2278, 0.5
    %v2287 = vadd.f32 %v2279, 0.5
    %v2288 = vadd.f32 %v2280, 0.5
    %v2289 = vadd.f32 %v2281, 0.5
    %v2290 = vmul.f32 %v2131, %v2282
    %v2291 = vmul.f32 %v2133, %v2283
    %v2292 = vmul.f32 %v2137, %v2284
    %v2293 = vmul.f32 %v2139, %v2285
    %v2294 = vmul.f32 %v2143, %v2286
    %v2295 = vmul.f32 %v2145, %v2287
    %v2296 = vmul.f32 %v2149, %v2288
    %v2297 = vmul.f32 %v2151, %v2289
    %v2298 = vmul.f32 %v2290, %v2236
    %v2299 = vmul.f32 %v2291, %v2238
    %v2300 = vmul.f32 %v2292, %v2242
    %v2301 = vmul.f32 %v2293, %v2244
    %v2302 = vmul.f32 %v2294, %v2248
    %v2303 = vmul.f32 %v2295, %v2250
    %v2304 = vmul.f32 %v2296, %v2254
    %v2305 = vmul.f32 %v2297, %v2256
    %v2306 = vld [vmem:[%s13] sm:$0xff]
    %v2307 = vld [vmem:[%s13 + $0x8] sm:$0xff]
    %v2308 = vld [vmem:[%s13 + $0x10] sm:$0xff]
    %v2309 = vld [vmem:[%s13 + $0x18] sm:$0xff]
    %v2310 = vld [vmem:[%s13 + $0x20] sm:$0xff]
    %v2311 = vld [vmem:[%s13 + $0x28] sm:$0xff]
    %v2312 = vld [vmem:[%s13 + $0x30] sm:$0xff]
    %v2313 = vld [vmem:[%s13 + $0x38] sm:$0xff]
    %v2314 = vld [vmem:[%s13 + $0x40] sm:$0xff]
    %v2315 = vld [vmem:[%s13 + $0x48] sm:$0xff]
    %v2316 = vld [vmem:[%s13 + $0x50] sm:$0xff]
    %v2317 = vld [vmem:[%s13 + $0x58] sm:$0xff]
    %v2318 = vld [vmem:[%s13 + $0x60] sm:$0xff]
    %v2319 = vld [vmem:[%s13 + $0x68] sm:$0xff]
    %v2320 = vld [vmem:[%s13 + $0x70] sm:$0xff]
    %v2321 = vld [vmem:[%s13 + $0x78] sm:$0xff]
    %v2322 = vld [vmem:[%s13 + $0x80] sm:$0xff]
    %v2323 = vld [vmem:[%s13 + $0x88] sm:$0xff]
    %v2324 = vld [vmem:[%s13 + $0x90] sm:$0xff]
    %v2325 = vld [vmem:[%s13 + $0x98] sm:$0xff]
    %v2326 = vld [vmem:[%s13 + $0xa0] sm:$0xff]
    %v2327 = vld [vmem:[%s13 + $0xa8] sm:$0xff]
    %v2328 = vld [vmem:[%s13 + $0xb0] sm:$0xff]
    %v2329 = vld [vmem:[%s13 + $0xb8] sm:$0xff]
    %v2331 = vsel %vm208, %v2299, 0
    %v2334 = vsel %vm208, %v2301, 0
    %v2337 = vsel %vm208, %v2303, 0
    %v2340 = vsel %vm208, %v2305, 0
    %2342 = vmatprep.subr.mxu0 0.0
    %2343 = vmatpush1.msra.mxu0 %v2321
    %2344 = vmatprep.subr.mxu0 0.0
    %2345 = vmatpush1.msra.mxu0 %v2320
    %2346 = vmatprep.subr.mxu0 0.0
    %2347 = vmatpush1.msra.mxu0 %v2319
    %2348 = vmatprep.subr.mxu0 0.0
    %2349 = vmatpush1.msra.mxu0 %v2318
    %2350 = vmatprep.subr.mxu0 0.0
    %2351 = vmatpush1.msra.mxu0 %v2317
    %2352 = vmatprep.subr.mxu0 0.0
    %2353 = vmatpush1.msra.mxu0 %v2316
    %2354 = vmatprep.subr.mxu0 0.0
    %2355 = vmatpush1.msra.mxu0 %v2315
    %2356 = vmatprep.subr.mxu0 0.0
    %2357 = vmatpush1.msra.mxu0 %v2314
    %2358 = vmatprep.subr.mxu0 0.0
    %2359 = vmatpush1.msra.mxu0 %v2313
    %2360 = vmatprep.subr.mxu0 0.0
    %2361 = vmatpush1.msra.mxu0 %v2312
    %2362 = vmatprep.subr.mxu0 0.0
    %2363 = vmatpush1.msra.mxu0 %v2311
    %2364 = vmatprep.subr.mxu0 0.0
    %2365 = vmatpush1.msra.mxu0 %v2310
    %2366 = vmatprep.subr.mxu0 0.0
    %2367 = vmatpush1.msra.mxu0 %v2309
    %2368 = vmatprep.subr.mxu0 0.0
    %2369 = vmatpush1.msra.mxu0 %v2308
    %2370 = vmatprep.subr.mxu0 0.0
    %2371 = vmatpush1.msra.mxu0 %v2307
    %2372 = vmatprep.subr.mxu0 0.0
    %2373 = vmatpush1.msra.mxu0 %v2306
    %2374 = vmatprep.subr.mxu0 0.0
    %2375 = vmatpush2.msra.mxu0 0.0
    %2376 = vmatprep.subr.mxu0 0.0
    %2377 = vmatpush2.msra.mxu0 0.0
    %2378 = vmatprep.subr.mxu0 0.0
    %2379 = vmatpush2.msra.mxu0 0.0
    %2380 = vmatprep.subr.mxu0 0.0
    %2381 = vmatpush2.msra.mxu0 0.0
    %2382 = vmatprep.subr.mxu0 0.0
    %2383 = vmatpush2.msra.mxu0 0.0
    %2384 = vmatprep.subr.mxu0 0.0
    %2385 = vmatpush2.msra.mxu0 0.0
    %2386 = vmatprep.subr.mxu0 0.0
    %2387 = vmatpush2.msra.mxu0 0.0
    %2388 = vmatprep.subr.mxu0 0.0
    %2389 = vmatpush2.msra.mxu0 0.0
    %2390 = vmatprep.subr.mxu0 0.0
    %2391 = vmatpush2.msra.mxu0 %v2329
    %2392 = vmatprep.subr.mxu0 0.0
    %2393 = vmatpush2.msra.mxu0 %v2328
    %2394 = vmatprep.subr.mxu0 0.0
    %2395 = vmatpush2.msra.mxu0 %v2327
    %2396 = vmatprep.subr.mxu0 0.0
    %2397 = vmatpush2.msra.mxu0 %v2326
    %2398 = vmatprep.subr.mxu0 0.0
    %2399 = vmatpush2.msra.mxu0 %v2325
    %2400 = vmatprep.subr.mxu0 0.0
    %2401 = vmatpush2.msra.mxu0 %v2324
    %2402 = vmatprep.subr.mxu0 0.0
    %2403 = vmatpush2.msra.mxu0 %v2323
    %2404 = vmatprep.subr.mxu0 0.0
    %2405 = vmatpush2.msra.mxu0 %v2322
    %2406 = vmatprep.mubr.f32.mxu0 %v2331
    %2407 = vmatmul.mubr.f32.gmra.mxu0 %v2298
    %v2408 = vpop.f32.mrf.mxu0
    %v2409 = vadd.f32 0.0, %v2408
    %v2410 = vpop.f32.mrf.mxu0
    %2411 = vmatprep.mubr.f32.mxu0 %v2334
    %2412 = vmatmul.mubr.f32.gmra.mxu0 %v2300
    %v2413 = vpop.f32.mrf.mxu0
    %v2414 = vadd.f32 0.0, %v2413
    %v2415 = vpop.f32.mrf.mxu0
    %2416 = vmatprep.mubr.f32.mxu0 %v2337
    %2417 = vmatmul.mubr.f32.gmra.mxu0 %v2302
    %v2418 = vpop.f32.mrf.mxu0
    %v2419 = vadd.f32 0.0, %v2418
    %v2420 = vpop.f32.mrf.mxu0
    %2421 = vmatprep.mubr.f32.mxu0 %v2340
    %2422 = vmatmul.mubr.f32.gmra.mxu0 %v2304
    %v2423 = vpop.f32.mrf.mxu0
    %v2424 = vadd.f32 0.0, %v2423
    %v2425 = vpop.f32.mrf.mxu0
    %2426 = vdwg.mxu0
    %v2427 = vadd.f32 %v1989, %v2409
    %v2428 = vadd.f32 %v1990, %v2414
    %v2429 = vadd.f32 %v1991, %v2419
    %v2430 = vadd.f32 %v1992, %v2424
    %s2431 = scalar_lea.vmem %s5, 1
    %v2432 = vld [vmem:[%s2431] sm:$0x1]
    %v2433 = vmul.f32 %v2427, %v2427
    %v2434 = vmul.f32 %v2428, %v2428
    %v2435 = vmul.f32 %v2429, %v2429
    %v2436 = vmul.f32 %v2430, %v2430
    %v2437 = vsel %vm208, %v2433, 0.0
    %2438 = vadd.xlane.f32.xlu0 %v2437
    %v2439 = vpop.xlane.xlu0 %2438
    %v2440 = vsel %vm208, %v2434, 0.0
    %2441 = vadd.xlane.f32.xlu0 %v2440
    %v2442 = vpop.xlane.xlu0 %2441
    %v2443 = vsel %vm208, %v2435, 0.0
    %2444 = vadd.xlane.f32.xlu0 %v2443
    %v2445 = vpop.xlane.xlu0 %2444
    %v2446 = vsel %vm208, %v2436, 0.0
    %2447 = vadd.xlane.f32.xlu0 %v2446
    %v2448 = vpop.xlane.xlu0 %2447
    %v2449 = vmul.f32 %v2439, %v221
    %v2450 = vmul.f32 %v2442, %v221
    %v2451 = vmul.f32 %v2445, %v221
    %v2452 = vmul.f32 %v2448, %v221
    %v2453 = vadd.f32 %v2449, 1e-05
    %v2454 = vadd.f32 %v2450, 1e-05
    %v2455 = vadd.f32 %v2451, 1e-05
    %v2456 = vadd.f32 %v2452, 1e-05
    %v2457 = vrsqrt.pop %v2453
    %v2458 = vrsqrt.pop %v2454
    %v2459 = vrsqrt.pop %v2455
    %v2460 = vrsqrt.pop %v2456
    %v2461 = vmul.f32 %v2427, %v2457
    %v2462 = vmul.f32 %v2428, %v2458
    %v2463 = vmul.f32 %v2429, %v2459
    %v2464 = vmul.f32 %v2430, %v2460
    %v2466 = vlaneseq
    %v2467 = vshrl.u32 %v2466, 7
    %v2468 = vsub.s32 0, %v2467
    %v2469 = vrot.slane %v2432, %v2468
    %v2471 = vmul.f32 %v2461, %v2469
    %v2472 = vmul.f32 %v2462, %v2469
    %v2473 = vmul.f32 %v2463, %v2469
    %v2474 = vmul.f32 %v2464, %v2469
    %s2475 = scalar_lea.vmem %s6, 64
    %v2476 = vld [vmem:[%s2475] sm:$0xff]
    %v2477 = vld [vmem:[%s2475 + $0x8] sm:$0xff]
    %v2478 = vld [vmem:[%s2475 + $0x10] sm:$0xff]
    %v2479 = vld [vmem:[%s2475 + $0x18] sm:$0xff]
    %v2480 = vld [vmem:[%s2475 + $0x20] sm:$0xff]
    %v2481 = vld [vmem:[%s2475 + $0x28] sm:$0xff]
    %v2482 = vld [vmem:[%s2475 + $0x30] sm:$0xff]
    %v2483 = vld [vmem:[%s2475 + $0x38] sm:$0xff]
    %v2485 = vsel %vm208, %v2471, 0
    %v2488 = vsel %vm208, %v2472, 0
    %v2491 = vsel %vm208, %v2473, 0
    %v2494 = vsel %vm208, %v2474, 0
    %2496 = vmatprep.subr.mxu0 0.0
    %2497 = vmatpush1.msra.mxu0 0.0
    %2498 = vmatprep.subr.mxu0 0.0
    %2499 = vmatpush1.msra.mxu0 0.0
    %2500 = vmatprep.subr.mxu0 0.0
    %2501 = vmatpush1.msra.mxu0 0.0
    %2502 = vmatprep.subr.mxu0 0.0
    %2503 = vmatpush1.msra.mxu0 0.0
    %2504 = vmatprep.subr.mxu0 0.0
    %2505 = vmatpush1.msra.mxu0 0.0
    %2506 = vmatprep.subr.mxu0 0.0
    %2507 = vmatpush1.msra.mxu0 0.0
    %2508 = vmatprep.subr.mxu0 0.0
    %2509 = vmatpush1.msra.mxu0 0.0
    %2510 = vmatprep.subr.mxu0 0.0
    %2511 = vmatpush1.msra.mxu0 0.0
    %2512 = vmatprep.subr.mxu0 0.0
    %2513 = vmatpush1.msra.mxu0 %v2483
    %2514 = vmatprep.subr.mxu0 0.0
    %2515 = vmatpush1.msra.mxu0 %v2482
    %2516 = vmatprep.subr.mxu0 0.0
    %2517 = vmatpush1.msra.mxu0 %v2481
    %2518 = vmatprep.subr.mxu0 0.0
    %2519 = vmatpush1.msra.mxu0 %v2480
    %2520 = vmatprep.subr.mxu0 0.0
    %2521 = vmatpush1.msra.mxu0 %v2479
    %2522 = vmatprep.subr.mxu0 0.0
    %2523 = vmatpush1.msra.mxu0 %v2478
    %2524 = vmatprep.subr.mxu0 0.0
    %2525 = vmatpush1.msra.mxu0 %v2477
    %2526 = vmatprep.subr.mxu0 0.0
    %2527 = vmatpush1.msra.mxu0 %v2476
    %2528 = vmatprep.subr.mxu0 0.0
    %2529 = vmatpush2.msra.mxu0 0.0
    %2530 = vmatprep.subr.mxu0 0.0
    %2531 = vmatpush2.msra.mxu0 0.0
    %2532 = vmatprep.subr.mxu0 0.0
    %2533 = vmatpush2.msra.mxu0 0.0
    %2534 = vmatprep.subr.mxu0 0.0
    %2535 = vmatpush2.msra.mxu0 0.0
    %2536 = vmatprep.subr.mxu0 0.0
    %2537 = vmatpush2.msra.mxu0 0.0
    %2538 = vmatprep.subr.mxu0 0.0
    %2539 = vmatpush2.msra.mxu0 0.0
    %2540 = vmatprep.subr.mxu0 0.0
    %2541 = vmatpush2.msra.mxu0 0.0
    %2542 = vmatprep.subr.mxu0 0.0
    %2543 = vmatpush2.msra.mxu0 0.0
    %2544 = vmatprep.subr.mxu0 0.0
    %2545 = vmatpush2.msra.mxu0 0.0
    %2546 = vmatprep.subr.mxu0 0.0
    %2547 = vmatpush2.msra.mxu0 0.0
    %2548 = vmatprep.subr.mxu0 0.0
    %2549 = vmatpush2.msra.mxu0 0.0
    %2550 = vmatprep.subr.mxu0 0.0
    %2551 = vmatpush2.msra.mxu0 0.0
    %2552 = vmatprep.subr.mxu0 0.0
    %2553 = vmatpush2.msra.mxu0 0.0
    %2554 = vmatprep.subr.mxu0 0.0
    %2555 = vmatpush2.msra.mxu0 0.0
    %2556 = vmatprep.subr.mxu0 0.0
    %2557 = vmatpush2.msra.mxu0 0.0
    %2558 = vmatprep.subr.mxu0 0.0
    %2559 = vmatpush2.msra.mxu0 0.0
    %2560 = vmatprep.mubr.f32.mxu0 0.0
    %2561 = vmatmul.mubr.f32.gmra.mxu0 %v2485
    %v2562 = vpop.f32.mrf.mxu0
    %v2563 = vadd.f32 0.0, %v2562
    %v2564 = vpop.f32.mrf.mxu0
    %2565 = vmatprep.mubr.f32.mxu0 0.0
    %2566 = vmatmul.mubr.f32.gmra.mxu0 %v2488
    %v2567 = vpop.f32.mrf.mxu0
    %v2568 = vadd.f32 0.0, %v2567
    %v2569 = vpop.f32.mrf.mxu0
    %2570 = vmatprep.mubr.f32.mxu0 0.0
    %2571 = vmatmul.mubr.f32.gmra.mxu0 %v2491
    %v2572 = vpop.f32.mrf.mxu0
    %v2573 = vadd.f32 0.0, %v2572
    %v2574 = vpop.f32.mrf.mxu0
    %2575 = vmatprep.mubr.f32.mxu0 0.0
    %2576 = vmatmul.mubr.f32.gmra.mxu0 %v2494
    %v2577 = vpop.f32.mrf.mxu0
    %v2578 = vadd.f32 0.0, %v2577
    %v2579 = vpop.f32.mrf.mxu0
    %2580 = vdwg.mxu0
    %s2581 = scalar_lea.vmem [#allocation11], 64
    %v2582 = vld [vmem:[%s2581] sm:$0xff]
    %v2583 = vld [vmem:[%s2581 + $0x8] sm:$0xff]
    %v2584 = vld [vmem:[%s2581 + $0x10] sm:$0xff]
    %v2585 = vld [vmem:[%s2581 + $0x18] sm:$0xff]
    %v2586 = vld [vmem:[%s2581 + $0x20] sm:$0xff]
    %v2587 = vld [vmem:[%s2581 + $0x28] sm:$0xff]
    %v2588 = vld [vmem:[%s2581 + $0x30] sm:$0xff]
    %v2589 = vld [vmem:[%s2581 + $0x38] sm:$0xff]
    %2590 = vmatprep.subr.mxu0 0.0
    %2591 = vmatpush1.msra.mxu0 0.0
    %2592 = vmatprep.subr.mxu0 0.0
    %2593 = vmatpush1.msra.mxu0 0.0
    %2594 = vmatprep.subr.mxu0 0.0
    %2595 = vmatpush1.msra.mxu0 0.0
    %2596 = vmatprep.subr.mxu0 0.0
    %2597 = vmatpush1.msra.mxu0 0.0
    %2598 = vmatprep.subr.mxu0 0.0
    %2599 = vmatpush1.msra.mxu0 0.0
    %2600 = vmatprep.subr.mxu0 0.0
    %2601 = vmatpush1.msra.mxu0 0.0
    %2602 = vmatprep.subr.mxu0 0.0
    %2603 = vmatpush1.msra.mxu0 0.0
    %2604 = vmatprep.subr.mxu0 0.0
    %2605 = vmatpush1.msra.mxu0 0.0
    %2606 = vmatprep.subr.mxu0 0.0
    %2607 = vmatpush1.msra.mxu0 %v2589
    %2608 = vmatprep.subr.mxu0 0.0
    %2609 = vmatpush1.msra.mxu0 %v2588
    %2610 = vmatprep.subr.mxu0 0.0
    %2611 = vmatpush1.msra.mxu0 %v2587
    %2612 = vmatprep.subr.mxu0 0.0
    %2613 = vmatpush1.msra.mxu0 %v2586
    %2614 = vmatprep.subr.mxu0 0.0
    %2615 = vmatpush1.msra.mxu0 %v2585
    %2616 = vmatprep.subr.mxu0 0.0
    %2617 = vmatpush1.msra.mxu0 %v2584
    %2618 = vmatprep.subr.mxu0 0.0
    %2619 = vmatpush1.msra.mxu0 %v2583
    %2620 = vmatprep.subr.mxu0 0.0
    %2621 = vmatpush1.msra.mxu0 %v2582
    %2622 = vmatprep.subr.mxu0 0.0
    %2623 = vmatpush2.msra.mxu0 0.0
    %2624 = vmatprep.subr.mxu0 0.0
    %2625 = vmatpush2.msra.mxu0 0.0
    %2626 = vmatprep.subr.mxu0 0.0
    %2627 = vmatpush2.msra.mxu0 0.0
    %2628 = vmatprep.subr.mxu0 0.0
    %2629 = vmatpush2.msra.mxu0 0.0
    %2630 = vmatprep.subr.mxu0 0.0
    %2631 = vmatpush2.msra.mxu0 0.0
    %2632 = vmatprep.subr.mxu0 0.0
    %2633 = vmatpush2.msra.mxu0 0.0
    %2634 = vmatprep.subr.mxu0 0.0
    %2635 = vmatpush2.msra.mxu0 0.0
    %2636 = vmatprep.subr.mxu0 0.0
    %2637 = vmatpush2.msra.mxu0 0.0
    %2638 = vmatprep.subr.mxu0 0.0
    %2639 = vmatpush2.msra.mxu0 0.0
    %2640 = vmatprep.subr.mxu0 0.0
    %2641 = vmatpush2.msra.mxu0 0.0
    %2642 = vmatprep.subr.mxu0 0.0
    %2643 = vmatpush2.msra.mxu0 0.0
    %2644 = vmatprep.subr.mxu0 0.0
    %2645 = vmatpush2.msra.mxu0 0.0
    %2646 = vmatprep.subr.mxu0 0.0
    %2647 = vmatpush2.msra.mxu0 0.0
    %2648 = vmatprep.subr.mxu0 0.0
    %2649 = vmatpush2.msra.mxu0 0.0
    %2650 = vmatprep.subr.mxu0 0.0
    %2651 = vmatpush2.msra.mxu0 0.0
    %2652 = vmatprep.subr.mxu0 0.0
    %2653 = vmatpush2.msra.mxu0 0.0
    %2654 = vmatprep.mubr.f32.mxu0 0.0
    %2655 = vmatmul.mubr.f32.gmra.mxu0 %v2485
    %v2656 = vpop.f32.mrf.mxu0
    %v2657 = vadd.f32 0.0, %v2656
    %v2658 = vpop.f32.mrf.mxu0
    %2659 = vmatprep.mubr.f32.mxu0 0.0
    %2660 = vmatmul.mubr.f32.gmra.mxu0 %v2488
    %v2661 = vpop.f32.mrf.mxu0
    %v2662 = vadd.f32 0.0, %v2661
    %v2663 = vpop.f32.mrf.mxu0
    %2664 = vmatprep.mubr.f32.mxu0 0.0
    %2665 = vmatmul.mubr.f32.gmra.mxu0 %v2491
    %v2666 = vpop.f32.mrf.mxu0
    %v2667 = vadd.f32 0.0, %v2666
    %v2668 = vpop.f32.mrf.mxu0
    %2669 = vmatprep.mubr.f32.mxu0 0.0
    %2670 = vmatmul.mubr.f32.gmra.mxu0 %v2494
    %v2671 = vpop.f32.mrf.mxu0
    %v2672 = vadd.f32 0.0, %v2671
    %v2673 = vpop.f32.mrf.mxu0
    %2674 = vdwg.mxu0
    %s2675 = scalar_lea.vmem [#allocation13], 64
    %v2676 = vld [vmem:[%s2675] sm:$0xff]
    %v2677 = vld [vmem:[%s2675 + $0x8] sm:$0xff]
    %v2678 = vld [vmem:[%s2675 + $0x10] sm:$0xff]
    %v2679 = vld [vmem:[%s2675 + $0x18] sm:$0xff]
    %v2680 = vld [vmem:[%s2675 + $0x20] sm:$0xff]
    %v2681 = vld [vmem:[%s2675 + $0x28] sm:$0xff]
    %v2682 = vld [vmem:[%s2675 + $0x30] sm:$0xff]
    %v2683 = vld [vmem:[%s2675 + $0x38] sm:$0xff]
    %2684 = vmatprep.subr.mxu0 0.0
    %2685 = vmatpush1.msra.mxu0 0.0
    %2686 = vmatprep.subr.mxu0 0.0
    %2687 = vmatpush1.msra.mxu0 0.0
    %2688 = vmatprep.subr.mxu0 0.0
    %2689 = vmatpush1.msra.mxu0 0.0
    %2690 = vmatprep.subr.mxu0 0.0
    %2691 = vmatpush1.msra.mxu0 0.0
    %2692 = vmatprep.subr.mxu0 0.0
    %2693 = vmatpush1.msra.mxu0 0.0
    %2694 = vmatprep.subr.mxu0 0.0
    %2695 = vmatpush1.msra.mxu0 0.0
    %2696 = vmatprep.subr.mxu0 0.0
    %2697 = vmatpush1.msra.mxu0 0.0
    %2698 = vmatprep.subr.mxu0 0.0
    %2699 = vmatpush1.msra.mxu0 0.0
    %2700 = vmatprep.subr.mxu0 0.0
    %2701 = vmatpush1.msra.mxu0 %v2683
    %2702 = vmatprep.subr.mxu0 0.0
    %2703 = vmatpush1.msra.mxu0 %v2682
    %2704 = vmatprep.subr.mxu0 0.0
    %2705 = vmatpush1.msra.mxu0 %v2681
    %2706 = vmatprep.subr.mxu0 0.0
    %2707 = vmatpush1.msra.mxu0 %v2680
    %2708 = vmatprep.subr.mxu0 0.0
    %2709 = vmatpush1.msra.mxu0 %v2679
    %2710 = vmatprep.subr.mxu0 0.0
    %2711 = vmatpush1.msra.mxu0 %v2678
    %2712 = vmatprep.subr.mxu0 0.0
    %2713 = vmatpush1.msra.mxu0 %v2677
    %2714 = vmatprep.subr.mxu0 0.0
    %2715 = vmatpush1.msra.mxu0 %v2676
    %2716 = vmatprep.subr.mxu0 0.0
    %2717 = vmatpush2.msra.mxu0 0.0
    %2718 = vmatprep.subr.mxu0 0.0
    %2719 = vmatpush2.msra.mxu0 0.0
    %2720 = vmatprep.subr.mxu0 0.0
    %2721 = vmatpush2.msra.mxu0 0.0
    %2722 = vmatprep.subr.mxu0 0.0
    %2723 = vmatpush2.msra.mxu0 0.0
    %2724 = vmatprep.subr.mxu0 0.0
    %2725 = vmatpush2.msra.mxu0 0.0
    %2726 = vmatprep.subr.mxu0 0.0
    %2727 = vmatpush2.msra.mxu0 0.0
    %2728 = vmatprep.subr.mxu0 0.0
    %2729 = vmatpush2.msra.mxu0 0.0
    %2730 = vmatprep.subr.mxu0 0.0
    %2731 = vmatpush2.msra.mxu0 0.0
    %2732 = vmatprep.subr.mxu0 0.0
    %2733 = vmatpush2.msra.mxu0 0.0
    %2734 = vmatprep.subr.mxu0 0.0
    %2735 = vmatpush2.msra.mxu0 0.0
    %2736 = vmatprep.subr.mxu0 0.0
    %2737 = vmatpush2.msra.mxu0 0.0
    %2738 = vmatprep.subr.mxu0 0.0
    %2739 = vmatpush2.msra.mxu0 0.0
    %2740 = vmatprep.subr.mxu0 0.0
    %2741 = vmatpush2.msra.mxu0 0.0
    %2742 = vmatprep.subr.mxu0 0.0
    %2743 = vmatpush2.msra.mxu0 0.0
    %2744 = vmatprep.subr.mxu0 0.0
    %2745 = vmatpush2.msra.mxu0 0.0
    %2746 = vmatprep.subr.mxu0 0.0
    %2747 = vmatpush2.msra.mxu0 0.0
    %2748 = vmatprep.mubr.f32.mxu0 0.0
    %2749 = vmatmul.mubr.f32.gmra.mxu0 %v2485
    %v2750 = vpop.f32.mrf.mxu0
    %v2751 = vadd.f32 0.0, %v2750
    %v2752 = vpop.f32.mrf.mxu0
    %2753 = vmatprep.mubr.f32.mxu0 0.0
    %2754 = vmatmul.mubr.f32.gmra.mxu0 %v2488
    %v2755 = vpop.f32.mrf.mxu0
    %v2756 = vadd.f32 0.0, %v2755
    %v2757 = vpop.f32.mrf.mxu0
    %2758 = vmatprep.mubr.f32.mxu0 0.0
    %2759 = vmatmul.mubr.f32.gmra.mxu0 %v2491
    %v2760 = vpop.f32.mrf.mxu0
    %v2761 = vadd.f32 0.0, %v2760
    %v2762 = vpop.f32.mrf.mxu0
    %2763 = vmatprep.mubr.f32.mxu0 0.0
    %2764 = vmatmul.mubr.f32.gmra.mxu0 %v2494
    %v2765 = vpop.f32.mrf.mxu0
    %v2766 = vadd.f32 0.0, %v2765
    %v2767 = vpop.f32.mrf.mxu0
    %2768 = vdwg.mxu0
    %v2769 = vmul.f32 %v2563, %v187
    %v2770 = vmul.f32 %v2568, %v188
    %v2771 = vmul.f32 %v2573, %v189
    %v2772 = vmul.f32 %v2578, %v190
    %v2774 = vsel %vm208, %v2563, 0
    %v2777 = vsel %vm208, %v2568, 0
    %v2780 = vsel %vm208, %v2573, 0
    %v2783 = vsel %vm208, %v2578, 0
    %2785 = vmatprep.subr.mxu0 0.0
    %2786 = vmatpush1.msra.mxu0 0.0
    %2787 = vmatprep.subr.mxu0 0.0
    %2788 = vmatpush1.msra.mxu0 0.0
    %2789 = vmatprep.subr.mxu0 0.0
    %2790 = vmatpush1.msra.mxu0 0.0
    %2791 = vmatprep.subr.mxu0 0.0
    %2792 = vmatpush1.msra.mxu0 0.0
    %2793 = vmatprep.subr.mxu0 0.0
    %2794 = vmatpush1.msra.mxu0 0.0
    %2795 = vmatprep.subr.mxu0 0.0
    %2796 = vmatpush1.msra.mxu0 0.0
    %2797 = vmatprep.subr.mxu0 0.0
    %2798 = vmatpush1.msra.mxu0 0.0
    %2799 = vmatprep.subr.mxu0 0.0
    %2800 = vmatpush1.msra.mxu0 0.0
    %2801 = vmatprep.subr.mxu0 0.0
    %2802 = vmatpush1.msra.mxu0 %v202
    %2803 = vmatprep.subr.mxu0 0.0
    %2804 = vmatpush1.msra.mxu0 %v201
    %2805 = vmatprep.subr.mxu0 0.0
    %2806 = vmatpush1.msra.mxu0 %v200
    %2807 = vmatprep.subr.mxu0 0.0
    %2808 = vmatpush1.msra.mxu0 %v199
    %2809 = vmatprep.subr.mxu0 0.0
    %2810 = vmatpush1.msra.mxu0 %v198
    %2811 = vmatprep.subr.mxu0 0.0
    %2812 = vmatpush1.msra.mxu0 %v197
    %2813 = vmatprep.subr.mxu0 0.0
    %2814 = vmatpush1.msra.mxu0 %v196
    %2815 = vmatprep.subr.mxu0 0.0
    %2816 = vmatpush1.msra.mxu0 %v195
    %2817 = vmatprep.subr.mxu0 0.0
    %2818 = vmatpush2.msra.mxu0 0.0
    %2819 = vmatprep.subr.mxu0 0.0
    %2820 = vmatpush2.msra.mxu0 0.0
    %2821 = vmatprep.subr.mxu0 0.0
    %2822 = vmatpush2.msra.mxu0 0.0
    %2823 = vmatprep.subr.mxu0 0.0
    %2824 = vmatpush2.msra.mxu0 0.0
    %2825 = vmatprep.subr.mxu0 0.0
    %2826 = vmatpush2.msra.mxu0 0.0
    %2827 = vmatprep.subr.mxu0 0.0
    %2828 = vmatpush2.msra.mxu0 0.0
    %2829 = vmatprep.subr.mxu0 0.0
    %2830 = vmatpush2.msra.mxu0 0.0
    %2831 = vmatprep.subr.mxu0 0.0
    %2832 = vmatpush2.msra.mxu0 0.0
    %2833 = vmatprep.subr.mxu0 0.0
    %2834 = vmatpush2.msra.mxu0 0.0
    %2835 = vmatprep.subr.mxu0 0.0
    %2836 = vmatpush2.msra.mxu0 0.0
    %2837 = vmatprep.subr.mxu0 0.0
    %2838 = vmatpush2.msra.mxu0 0.0
    %2839 = vmatprep.subr.mxu0 0.0
    %2840 = vmatpush2.msra.mxu0 0.0
    %2841 = vmatprep.subr.mxu0 0.0
    %2842 = vmatpush2.msra.mxu0 0.0
    %2843 = vmatprep.subr.mxu0 0.0
    %2844 = vmatpush2.msra.mxu0 0.0
    %2845 = vmatprep.subr.mxu0 0.0
    %2846 = vmatpush2.msra.mxu0 0.0
    %2847 = vmatprep.subr.mxu0 0.0
    %2848 = vmatpush2.msra.mxu0 0.0
    %2849 = vmatprep.mubr.f32.mxu0 0.0
    %2850 = vmatmul.mubr.f32.gmra.mxu0 %v2774
    %v2851 = vpop.f32.mrf.mxu0
    %v2852 = vadd.f32 0.0, %v2851
    %v2853 = vpop.f32.mrf.mxu0
    %2854 = vmatprep.mubr.f32.mxu0 0.0
    %2855 = vmatmul.mubr.f32.gmra.mxu0 %v2777
    %v2856 = vpop.f32.mrf.mxu0
    %v2857 = vadd.f32 0.0, %v2856
    %v2858 = vpop.f32.mrf.mxu0
    %2859 = vmatprep.mubr.f32.mxu0 0.0
    %2860 = vmatmul.mubr.f32.gmra.mxu0 %v2780
    %v2861 = vpop.f32.mrf.mxu0
    %v2862 = vadd.f32 0.0, %v2861
    %v2863 = vpop.f32.mrf.mxu0
    %2864 = vmatprep.mubr.f32.mxu0 0.0
    %2865 = vmatmul.mubr.f32.gmra.mxu0 %v2783
    %v2866 = vpop.f32.mrf.mxu0
    %v2867 = vadd.f32 0.0, %v2866
    %v2868 = vpop.f32.mrf.mxu0
    %2869 = vdwg.mxu0
    %v2870 = vmul.f32 %v2852, %v191
    %v2871 = vmul.f32 %v2857, %v192
    %v2872 = vmul.f32 %v2862, %v193
    %v2873 = vmul.f32 %v2867, %v194
    %v2874 = vadd.f32 %v2769, %v2870
    %v2875 = vadd.f32 %v2770, %v2871
    %v2876 = vadd.f32 %v2771, %v2872
    %v2877 = vadd.f32 %v2772, %v2873
    %v2878 = vmul.f32 %v2657, %v187
    %v2879 = vmul.f32 %v2662, %v188
    %v2880 = vmul.f32 %v2667, %v189
    %v2881 = vmul.f32 %v2672, %v190
    %v2883 = vsel %vm208, %v2657, 0
    %v2886 = vsel %vm208, %v2662, 0
    %v2889 = vsel %vm208, %v2667, 0
    %v2892 = vsel %vm208, %v2672, 0
    %2894 = vmatprep.subr.mxu0 0.0
    %2895 = vmatpush1.msra.mxu0 0.0
    %2896 = vmatprep.subr.mxu0 0.0
    %2897 = vmatpush1.msra.mxu0 0.0
    %2898 = vmatprep.subr.mxu0 0.0
    %2899 = vmatpush1.msra.mxu0 0.0
    %2900 = vmatprep.subr.mxu0 0.0
    %2901 = vmatpush1.msra.mxu0 0.0
    %2902 = vmatprep.subr.mxu0 0.0
    %2903 = vmatpush1.msra.mxu0 0.0
    %2904 = vmatprep.subr.mxu0 0.0
    %2905 = vmatpush1.msra.mxu0 0.0
    %2906 = vmatprep.subr.mxu0 0.0
    %2907 = vmatpush1.msra.mxu0 0.0
    %2908 = vmatprep.subr.mxu0 0.0
    %2909 = vmatpush1.msra.mxu0 0.0
    %2910 = vmatprep.subr.mxu0 0.0
    %2911 = vmatpush1.msra.mxu0 %v202
    %2912 = vmatprep.subr.mxu0 0.0
    %2913 = vmatpush1.msra.mxu0 %v201
    %2914 = vmatprep.subr.mxu0 0.0
    %2915 = vmatpush1.msra.mxu0 %v200
    %2916 = vmatprep.subr.mxu0 0.0
    %2917 = vmatpush1.msra.mxu0 %v199
    %2918 = vmatprep.subr.mxu0 0.0
    %2919 = vmatpush1.msra.mxu0 %v198
    %2920 = vmatprep.subr.mxu0 0.0
    %2921 = vmatpush1.msra.mxu0 %v197
    %2922 = vmatprep.subr.mxu0 0.0
    %2923 = vmatpush1.msra.mxu0 %v196
    %2924 = vmatprep.subr.mxu0 0.0
    %2925 = vmatpush1.msra.mxu0 %v195
    %2926 = vmatprep.subr.mxu0 0.0
    %2927 = vmatpush2.msra.mxu0 0.0
    %2928 = vmatprep.subr.mxu0 0.0
    %2929 = vmatpush2.msra.mxu0 0.0
    %2930 = vmatprep.subr.mxu0 0.0
    %2931 = vmatpush2.msra.mxu0 0.0
    %2932 = vmatprep.subr.mxu0 0.0
    %2933 = vmatpush2.msra.mxu0 0.0
    %2934 = vmatprep.subr.mxu0 0.0
    %2935 = vmatpush2.msra.mxu0 0.0
    %2936 = vmatprep.subr.mxu0 0.0
    %2937 = vmatpush2.msra.mxu0 0.0
    %2938 = vmatprep.subr.mxu0 0.0
    %2939 = vmatpush2.msra.mxu0 0.0
    %2940 = vmatprep.subr.mxu0 0.0
    %2941 = vmatpush2.msra.mxu0 0.0
    %2942 = vmatprep.subr.mxu0 0.0
    %2943 = vmatpush2.msra.mxu0 0.0
    %2944 = vmatprep.subr.mxu0 0.0
    %2945 = vmatpush2.msra.mxu0 0.0
    %2946 = vmatprep.subr.mxu0 0.0
    %2947 = vmatpush2.msra.mxu0 0.0
    %2948 = vmatprep.subr.mxu0 0.0
    %2949 = vmatpush2.msra.mxu0 0.0
    %2950 = vmatprep.subr.mxu0 0.0
    %2951 = vmatpush2.msra.mxu0 0.0
    %2952 = vmatprep.subr.mxu0 0.0
    %2953 = vmatpush2.msra.mxu0 0.0
    %2954 = vmatprep.subr.mxu0 0.0
    %2955 = vmatpush2.msra.mxu0 0.0
    %2956 = vmatprep.subr.mxu0 0.0
    %2957 = vmatpush2.msra.mxu0 0.0
    %2958 = vmatprep.mubr.f32.mxu0 0.0
    %2959 = vmatmul.mubr.f32.gmra.mxu0 %v2883
    %v2960 = vpop.f32.mrf.mxu0
    %v2961 = vadd.f32 0.0, %v2960
    %v2962 = vpop.f32.mrf.mxu0
    %2963 = vmatprep.mubr.f32.mxu0 0.0
    %2964 = vmatmul.mubr.f32.gmra.mxu0 %v2886
    %v2965 = vpop.f32.mrf.mxu0
    %v2966 = vadd.f32 0.0, %v2965
    %v2967 = vpop.f32.mrf.mxu0
    %2968 = vmatprep.mubr.f32.mxu0 0.0
    %2969 = vmatmul.mubr.f32.gmra.mxu0 %v2889
    %v2970 = vpop.f32.mrf.mxu0
    %v2971 = vadd.f32 0.0, %v2970
    %v2972 = vpop.f32.mrf.mxu0
    %2973 = vmatprep.mubr.f32.mxu0 0.0
    %2974 = vmatmul.mubr.f32.gmra.mxu0 %v2892
    %v2975 = vpop.f32.mrf.mxu0
    %v2976 = vadd.f32 0.0, %v2975
    %v2977 = vpop.f32.mrf.mxu0
    %2978 = vdwg.mxu0
    %v2979 = vmul.f32 %v2961, %v191
    %v2980 = vmul.f32 %v2966, %v192
    %v2981 = vmul.f32 %v2971, %v193
    %v2982 = vmul.f32 %v2976, %v194
    %v2983 = vadd.f32 %v2878, %v2979
    %v2984 = vadd.f32 %v2879, %v2980
    %v2985 = vadd.f32 %v2880, %v2981
    %v2986 = vadd.f32 %v2881, %v2982
    %v2988 = vsel %vm757, %v2874, 0
    %v2991 = vsel %vm757, %v2875, 0
    %v2994 = vsel %vm757, %v2876, 0
    %v2997 = vsel %vm757, %v2877, 0
    %v3000 = vsel %vm757, %v2983, 0
    %v3003 = vsel %vm757, %v2984, 0
    %v3006 = vsel %vm757, %v2985, 0
    %v3009 = vsel %vm757, %v2986, 0
    %3011 = vmatprep.subr.mxu0 0.0
    %3012 = vmatpush1.xpose.msra.mxu0 0.0
    %3013 = vmatprep.subr.mxu0 0.0
    %3014 = vmatpush1.xpose.msra.mxu0 0.0
    %3015 = vmatprep.subr.mxu0 0.0
    %3016 = vmatpush1.xpose.msra.mxu0 0.0
    %3017 = vmatprep.subr.mxu0 0.0
    %3018 = vmatpush1.xpose.msra.mxu0 0.0
    %3019 = vmatprep.subr.mxu0 0.0
    %3020 = vmatpush1.xpose.msra.mxu0 0.0
    %3021 = vmatprep.subr.mxu0 0.0
    %3022 = vmatpush1.xpose.msra.mxu0 0.0
    %3023 = vmatprep.subr.mxu0 0.0
    %3024 = vmatpush1.xpose.msra.mxu0 0.0
    %3025 = vmatprep.subr.mxu0 0.0
    %3026 = vmatpush1.xpose.msra.mxu0 0.0
    %3027 = vmatprep.subr.mxu0 0.0
    %3028 = vmatpush1.xpose.msra.mxu0 0.0
    %3029 = vmatprep.subr.mxu0 0.0
    %3030 = vmatpush1.xpose.msra.mxu0 0.0
    %3031 = vmatprep.subr.mxu0 0.0
    %3032 = vmatpush1.xpose.msra.mxu0 0.0
    %3033 = vmatprep.subr.mxu0 0.0
    %3034 = vmatpush1.xpose.msra.mxu0 0.0
    %3035 = vmatprep.subr.mxu0 0.0
    %3036 = vmatpush1.xpose.msra.mxu0 %v3009
    %3037 = vmatprep.subr.mxu0 0.0
    %3038 = vmatpush1.xpose.msra.mxu0 %v3006
    %3039 = vmatprep.subr.mxu0 0.0
    %3040 = vmatpush1.xpose.msra.mxu0 %v3003
    %3041 = vmatprep.subr.mxu0 0.0
    %3042 = vmatpush1.xpose.msra.mxu0 %v3000
    %3043 = vmatprep.subr.mxu0 0.0
    %3044 = vmatpush2.xpose.msra.mxu0 0.0
    %3045 = vmatprep.subr.mxu0 0.0
    %3046 = vmatpush2.xpose.msra.mxu0 0.0
    %3047 = vmatprep.subr.mxu0 0.0
    %3048 = vmatpush2.xpose.msra.mxu0 0.0
    %3049 = vmatprep.subr.mxu0 0.0
    %3050 = vmatpush2.xpose.msra.mxu0 0.0
    %3051 = vmatprep.subr.mxu0 0.0
    %3052 = vmatpush2.xpose.msra.mxu0 0.0
    %3053 = vmatprep.subr.mxu0 0.0
    %3054 = vmatpush2.xpose.msra.mxu0 0.0
    %3055 = vmatprep.subr.mxu0 0.0
    %3056 = vmatpush2.xpose.msra.mxu0 0.0
    %3057 = vmatprep.subr.mxu0 0.0
    %3058 = vmatpush2.xpose.msra.mxu0 0.0
    %3059 = vmatprep.subr.mxu0 0.0
    %3060 = vmatpush2.xpose.msra.mxu0 0.0
    %3061 = vmatprep.subr.mxu0 0.0
    %3062 = vmatpush2.xpose.msra.mxu0 0.0
    %3063 = vmatprep.subr.mxu0 0.0
    %3064 = vmatpush2.xpose.msra.mxu0 0.0
    %3065 = vmatprep.subr.mxu0 0.0
    %3066 = vmatpush2.xpose.msra.mxu0 0.0
    %3067 = vmatprep.subr.mxu0 0.0
    %3068 = vmatpush2.xpose.msra.mxu0 0.0
    %3069 = vmatprep.subr.mxu0 0.0
    %3070 = vmatpush2.xpose.msra.mxu0 0.0
    %3071 = vmatprep.subr.mxu0 0.0
    %3072 = vmatpush2.xpose.msra.mxu0 0.0
    %3073 = vmatprep.subr.mxu0 0.0
    %3074 = vmatpush2.xpose.msra.mxu0 0.0
    %3075 = vmatprep.mubr.f32.mxu0 0.0
    %3076 = vmatmul.mubr.f32.gmra.mxu0 %v2988
    %v3077 = vpop.f32.mrf.mxu0
    %v3078 = vadd.f32 %v183, %v3077
    %v3079 = vpop.f32.mrf.mxu0
    %3080 = vmatprep.mubr.f32.mxu0 0.0
    %3081 = vmatmul.mubr.f32.gmra.mxu0 %v2991
    %v3082 = vpop.f32.mrf.mxu0
    %v3083 = vadd.f32 %v184, %v3082
    %v3084 = vpop.f32.mrf.mxu0
    %3085 = vmatprep.mubr.f32.mxu0 0.0
    %3086 = vmatmul.mubr.f32.gmra.mxu0 %v2994
    %v3087 = vpop.f32.mrf.mxu0
    %v3088 = vadd.f32 %v185, %v3087
    %v3089 = vpop.f32.mrf.mxu0
    %3090 = vmatprep.mubr.f32.mxu0 0.0
    %3091 = vmatmul.mubr.f32.gmra.mxu0 %v2997
    %v3092 = vpop.f32.mrf.mxu0
    %v3093 = vadd.f32 %v186, %v3092
    %v3094 = vpop.f32.mrf.mxu0
    %3095 = vdwg.mxu0
    %v3096 = vsel %vm867, %v3078, -inf
    %3097 = vmax.xlane.f32.xlu0 %v3096
    %v3098 = vpop.xlane.xlu0 %3097
    %v3099 = vsel %vm867, %v3083, -inf
    %3100 = vmax.xlane.f32.xlu0 %v3099
    %v3101 = vpop.xlane.xlu0 %3100
    %v3102 = vsel %vm867, %v3088, -inf
    %3103 = vmax.xlane.f32.xlu0 %v3102
    %v3104 = vpop.xlane.xlu0 %3103
    %v3105 = vsel %vm867, %v3093, -inf
    %3106 = vmax.xlane.f32.xlu0 %v3105
    %v3107 = vpop.xlane.xlu0 %3106
    %v3108 = vsub.f32 %v3078, %v3098
    %v3109 = vsub.f32 %v3083, %v3101
    %v3110 = vsub.f32 %v3088, %v3104
    %v3111 = vsub.f32 %v3093, %v3107
    %v3112 = vmul.f32 %v3108, 1.442695
    %v3113 = vpow.pop %v3112
    %v3114 = vmul.f32 %v3109, 1.442695
    %v3115 = vpow.pop %v3114
    %v3116 = vmul.f32 %v3110, 1.442695
    %v3117 = vpow.pop %v3116
    %v3118 = vmul.f32 %v3111, 1.442695
    %v3119 = vpow.pop %v3118
    %v3120 = vsel %vm867, %v3113, 0.0
    %3121 = vadd.xlane.f32.xlu0 %v3120
    %v3122 = vpop.xlane.xlu0 %3121
    %v3123 = vsel %vm867, %v3115, 0.0
    %3124 = vadd.xlane.f32.xlu0 %v3123
    %v3125 = vpop.xlane.xlu0 %3124
    %v3126 = vsel %vm867, %v3117, 0.0
    %3127 = vadd.xlane.f32.xlu0 %v3126
    %v3128 = vpop.xlane.xlu0 %3127
    %v3129 = vsel %vm867, %v3119, 0.0
    %3130 = vadd.xlane.f32.xlu0 %v3129
    %v3131 = vpop.xlane.xlu0 %3130
    %v3132 = vrcp.pop %v3122
    %v3133 = vrcp.pop %v3125
    %v3134 = vrcp.pop %v3128
    %v3135 = vrcp.pop %v3131
    %v3136 = vmul.f32 %v3113, %v3132
    %v3137 = vmul.f32 %v3115, %v3133
    %v3138 = vmul.f32 %v3117, %v3134
    %v3139 = vmul.f32 %v3119, %v3135
    %v3141 = vsel %vm867, %v3136, 0
    %v3144 = vsel %vm867, %v3137, 0
    %v3147 = vsel %vm867, %v3138, 0
    %v3150 = vsel %vm867, %v3139, 0
    %3152 = vmatprep.subr.mxu0 0.0
    %3153 = vmatpush1.msra.mxu0 0.0
    %3154 = vmatprep.subr.mxu0 0.0
    %3155 = vmatpush1.msra.mxu0 0.0
    %3156 = vmatprep.subr.mxu0 0.0
    %3157 = vmatpush1.msra.mxu0 0.0
    %3158 = vmatprep.subr.mxu0 0.0
    %3159 = vmatpush1.msra.mxu0 0.0
    %3160 = vmatprep.subr.mxu0 0.0
    %3161 = vmatpush1.msra.mxu0 0.0
    %3162 = vmatprep.subr.mxu0 0.0
    %3163 = vmatpush1.msra.mxu0 0.0
    %3164 = vmatprep.subr.mxu0 0.0
    %3165 = vmatpush1.msra.mxu0 0.0
    %3166 = vmatprep.subr.mxu0 0.0
    %3167 = vmatpush1.msra.mxu0 0.0
    %3168 = vmatprep.subr.mxu0 0.0
    %3169 = vmatpush1.msra.mxu0 0.0
    %3170 = vmatprep.subr.mxu0 0.0
    %3171 = vmatpush1.msra.mxu0 0.0
    %3172 = vmatprep.subr.mxu0 0.0
    %3173 = vmatpush1.msra.mxu0 0.0
    %3174 = vmatprep.subr.mxu0 0.0
    %3175 = vmatpush1.msra.mxu0 0.0
    %3176 = vmatprep.subr.mxu0 0.0
    %3177 = vmatpush1.msra.mxu0 %v2766
    %3178 = vmatprep.subr.mxu0 0.0
    %3179 = vmatpush1.msra.mxu0 %v2761
    %3180 = vmatprep.subr.mxu0 0.0
    %3181 = vmatpush1.msra.mxu0 %v2756
    %3182 = vmatprep.subr.mxu0 0.0
    %3183 = vmatpush1.msra.mxu0 %v2751
    %3184 = vmatprep.subr.mxu0 0.0
    %3185 = vmatpush2.msra.mxu0 0.0
    %3186 = vmatprep.subr.mxu0 0.0
    %3187 = vmatpush2.msra.mxu0 0.0
    %3188 = vmatprep.subr.mxu0 0.0
    %3189 = vmatpush2.msra.mxu0 0.0
    %3190 = vmatprep.subr.mxu0 0.0
    %3191 = vmatpush2.msra.mxu0 0.0
    %3192 = vmatprep.subr.mxu0 0.0
    %3193 = vmatpush2.msra.mxu0 0.0
    %3194 = vmatprep.subr.mxu0 0.0
    %3195 = vmatpush2.msra.mxu0 0.0
    %3196 = vmatprep.subr.mxu0 0.0
    %3197 = vmatpush2.msra.mxu0 0.0
    %3198 = vmatprep.subr.mxu0 0.0
    %3199 = vmatpush2.msra.mxu0 0.0
    %3200 = vmatprep.subr.mxu0 0.0
    %3201 = vmatpush2.msra.mxu0 0.0
    %3202 = vmatprep.subr.mxu0 0.0
    %3203 = vmatpush2.msra.mxu0 0.0
    %3204 = vmatprep.subr.mxu0 0.0
    %3205 = vmatpush2.msra.mxu0 0.0
    %3206 = vmatprep.subr.mxu0 0.0
    %3207 = vmatpush2.msra.mxu0 0.0
    %3208 = vmatprep.subr.mxu0 0.0
    %3209 = vmatpush2.msra.mxu0 0.0
    %3210 = vmatprep.subr.mxu0 0.0
    %3211 = vmatpush2.msra.mxu0 0.0
    %3212 = vmatprep.subr.mxu0 0.0
    %3213 = vmatpush2.msra.mxu0 0.0
    %3214 = vmatprep.subr.mxu0 0.0
    %3215 = vmatpush2.msra.mxu0 0.0
    %3216 = vmatprep.mubr.f32.mxu0 0.0
    %3217 = vmatmul.mubr.f32.gmra.mxu0 %v3141
    %v3218 = vpop.f32.mrf.mxu0
    %v3219 = vadd.f32 0.0, %v3218
    %v3220 = vpop.f32.mrf.mxu0
    %3221 = vmatprep.mubr.f32.mxu0 0.0
    %3222 = vmatmul.mubr.f32.gmra.mxu0 %v3144
    %v3223 = vpop.f32.mrf.mxu0
    %v3224 = vadd.f32 0.0, %v3223
    %v3225 = vpop.f32.mrf.mxu0
    %3226 = vmatprep.mubr.f32.mxu0 0.0
    %3227 = vmatmul.mubr.f32.gmra.mxu0 %v3147
    %v3228 = vpop.f32.mrf.mxu0
    %v3229 = vadd.f32 0.0, %v3228
    %v3230 = vpop.f32.mrf.mxu0
    %3231 = vmatprep.mubr.f32.mxu0 0.0
    %3232 = vmatmul.mubr.f32.gmra.mxu0 %v3150
    %v3233 = vpop.f32.mrf.mxu0
    %v3234 = vadd.f32 0.0, %v3233
    %v3235 = vpop.f32.mrf.mxu0
    %3236 = vdwg.mxu0
    %3237 = vrot.lane.b32.xlu0 %v2874, 112
    %v3238 = vpop.permute.xlu0 %3237
    %3239 = vrot.lane.b32.xlu0 %v2875, 112
    %v3240 = vpop.permute.xlu0 %3239
    %3241 = vrot.lane.b32.xlu0 %v2876, 112
    %v3242 = vpop.permute.xlu0 %3241
    %3243 = vrot.lane.b32.xlu0 %v2877, 112
    %v3244 = vpop.permute.xlu0 %3243
    %3245 = vrot.lane.b32.xlu0 %v2983, 112
    %v3246 = vpop.permute.xlu0 %3245
    %3247 = vrot.lane.b32.xlu0 %v2984, 112
    %v3248 = vpop.permute.xlu0 %3247
    %3249 = vrot.lane.b32.xlu0 %v2985, 112
    %v3250 = vpop.permute.xlu0 %3249
    %3251 = vrot.lane.b32.xlu0 %v2986, 112
    %v3252 = vpop.permute.xlu0 %3251
    %v3253 = vsel %vm757, %v3238, 0
    %v3255 = vsel %vm757, %v3240, 0
    %v3257 = vsel %vm757, %v3242, 0
    %v3259 = vsel %vm757, %v3244, 0
    %v3261 = vsel %vm757, %v3246, 0
    %v3263 = vsel %vm757, %v3248, 0
    %v3265 = vsel %vm757, %v3250, 0
    %v3267 = vsel %vm757, %v3252, 0
    %3269 = vmatprep.subr.mxu0 0.0
    %3270 = vmatpush1.xpose.msra.mxu0 0.0
    %3271 = vmatprep.subr.mxu0 0.0
    %3272 = vmatpush1.xpose.msra.mxu0 0.0
    %3273 = vmatprep.subr.mxu0 0.0
    %3274 = vmatpush1.xpose.msra.mxu0 0.0
    %3275 = vmatprep.subr.mxu0 0.0
    %3276 = vmatpush1.xpose.msra.mxu0 0.0
    %3277 = vmatprep.subr.mxu0 0.0
    %3278 = vmatpush1.xpose.msra.mxu0 0.0
    %3279 = vmatprep.subr.mxu0 0.0
    %3280 = vmatpush1.xpose.msra.mxu0 0.0
    %3281 = vmatprep.subr.mxu0 0.0
    %3282 = vmatpush1.xpose.msra.mxu0 0.0
    %3283 = vmatprep.subr.mxu0 0.0
    %3284 = vmatpush1.xpose.msra.mxu0 0.0
    %3285 = vmatprep.subr.mxu0 0.0
    %3286 = vmatpush1.xpose.msra.mxu0 0.0
    %3287 = vmatprep.subr.mxu0 0.0
    %3288 = vmatpush1.xpose.msra.mxu0 0.0
    %3289 = vmatprep.subr.mxu0 0.0
    %3290 = vmatpush1.xpose.msra.mxu0 0.0
    %3291 = vmatprep.subr.mxu0 0.0
    %3292 = vmatpush1.xpose.msra.mxu0 0.0
    %3293 = vmatprep.subr.mxu0 0.0
    %3294 = vmatpush1.xpose.msra.mxu0 %v3267
    %3295 = vmatprep.subr.mxu0 0.0
    %3296 = vmatpush1.xpose.msra.mxu0 %v3265
    %3297 = vmatprep.subr.mxu0 0.0
    %3298 = vmatpush1.xpose.msra.mxu0 %v3263
    %3299 = vmatprep.subr.mxu0 0.0
    %3300 = vmatpush1.xpose.msra.mxu0 %v3261
    %3301 = vmatprep.subr.mxu0 0.0
    %3302 = vmatpush2.xpose.msra.mxu0 0.0
    %3303 = vmatprep.subr.mxu0 0.0
    %3304 = vmatpush2.xpose.msra.mxu0 0.0
    %3305 = vmatprep.subr.mxu0 0.0
    %3306 = vmatpush2.xpose.msra.mxu0 0.0
    %3307 = vmatprep.subr.mxu0 0.0
    %3308 = vmatpush2.xpose.msra.mxu0 0.0
    %3309 = vmatprep.subr.mxu0 0.0
    %3310 = vmatpush2.xpose.msra.mxu0 0.0
    %3311 = vmatprep.subr.mxu0 0.0
    %3312 = vmatpush2.xpose.msra.mxu0 0.0
    %3313 = vmatprep.subr.mxu0 0.0
    %3314 = vmatpush2.xpose.msra.mxu0 0.0
    %3315 = vmatprep.subr.mxu0 0.0
    %3316 = vmatpush2.xpose.msra.mxu0 0.0
    %3317 = vmatprep.subr.mxu0 0.0
    %3318 = vmatpush2.xpose.msra.mxu0 0.0
    %3319 = vmatprep.subr.mxu0 0.0
    %3320 = vmatpush2.xpose.msra.mxu0 0.0
    %3321 = vmatprep.subr.mxu0 0.0
    %3322 = vmatpush2.xpose.msra.mxu0 0.0
    %3323 = vmatprep.subr.mxu0 0.0
    %3324 = vmatpush2.xpose.msra.mxu0 0.0
    %3325 = vmatprep.subr.mxu0 0.0
    %3326 = vmatpush2.xpose.msra.mxu0 0.0
    %3327 = vmatprep.subr.mxu0 0.0
    %3328 = vmatpush2.xpose.msra.mxu0 0.0
    %3329 = vmatprep.subr.mxu0 0.0
    %3330 = vmatpush2.xpose.msra.mxu0 0.0
    %3331 = vmatprep.subr.mxu0 0.0
    %3332 = vmatpush2.xpose.msra.mxu0 0.0
    %3333 = vmatprep.mubr.f32.mxu0 0.0
    %3334 = vmatmul.mubr.f32.gmra.mxu0 %v3253
    %v3335 = vpop.f32.mrf.mxu0
    %v3336 = vadd.f32 %v183, %v3335
    %v3337 = vpop.f32.mrf.mxu0
    %3338 = vmatprep.mubr.f32.mxu0 0.0
    %3339 = vmatmul.mubr.f32.gmra.mxu0 %v3255
    %v3340 = vpop.f32.mrf.mxu0
    %v3341 = vadd.f32 %v184, %v3340
    %v3342 = vpop.f32.mrf.mxu0
    %3343 = vmatprep.mubr.f32.mxu0 0.0
    %3344 = vmatmul.mubr.f32.gmra.mxu0 %v3257
    %v3345 = vpop.f32.mrf.mxu0
    %v3346 = vadd.f32 %v185, %v3345
    %v3347 = vpop.f32.mrf.mxu0
    %3348 = vmatprep.mubr.f32.mxu0 0.0
    %3349 = vmatmul.mubr.f32.gmra.mxu0 %v3259
    %v3350 = vpop.f32.mrf.mxu0
    %v3351 = vadd.f32 %v186, %v3350
    %v3352 = vpop.f32.mrf.mxu0
    %3353 = vdwg.mxu0
    %v3354 = vsel %vm867, %v3336, -inf
    %3355 = vmax.xlane.f32.xlu0 %v3354
    %v3356 = vpop.xlane.xlu0 %3355
    %v3357 = vsel %vm867, %v3341, -inf
    %3358 = vmax.xlane.f32.xlu0 %v3357
    %v3359 = vpop.xlane.xlu0 %3358
    %v3360 = vsel %vm867, %v3346, -inf
    %3361 = vmax.xlane.f32.xlu0 %v3360
    %v3362 = vpop.xlane.xlu0 %3361
    %v3363 = vsel %vm867, %v3351, -inf
    %3364 = vmax.xlane.f32.xlu0 %v3363
    %v3365 = vpop.xlane.xlu0 %3364
    %v3366 = vsub.f32 %v3336, %v3356
    %v3367 = vsub.f32 %v3341, %v3359
    %v3368 = vsub.f32 %v3346, %v3362
    %v3369 = vsub.f32 %v3351, %v3365
    %v3370 = vmul.f32 %v3366, 1.442695
    %v3371 = vpow.pop %v3370
    %v3372 = vmul.f32 %v3367, 1.442695
    %v3373 = vpow.pop %v3372
    %v3374 = vmul.f32 %v3368, 1.442695
    %v3375 = vpow.pop %v3374
    %v3376 = vmul.f32 %v3369, 1.442695
    %v3377 = vpow.pop %v3376
    %v3378 = vsel %vm867, %v3371, 0.0
    %3379 = vadd.xlane.f32.xlu0 %v3378
    %v3380 = vpop.xlane.xlu0 %3379
    %v3381 = vsel %vm867, %v3373, 0.0
    %3382 = vadd.xlane.f32.xlu0 %v3381
    %v3383 = vpop.xlane.xlu0 %3382
    %v3384 = vsel %vm867, %v3375, 0.0
    %3385 = vadd.xlane.f32.xlu0 %v3384
    %v3386 = vpop.xlane.xlu0 %3385
    %v3387 = vsel %vm867, %v3377, 0.0
    %3388 = vadd.xlane.f32.xlu0 %v3387
    %v3389 = vpop.xlane.xlu0 %3388
    %v3390 = vrcp.pop %v3380
    %v3391 = vrcp.pop %v3383
    %v3392 = vrcp.pop %v3386
    %v3393 = vrcp.pop %v3389
    %v3394 = vmul.f32 %v3371, %v3390
    %v3395 = vmul.f32 %v3373, %v3391
    %v3396 = vmul.f32 %v3375, %v3392
    %v3397 = vmul.f32 %v3377, %v3393
    %3402 = vrot.lane.b32.xlu0 %v2751, 112
    %v3403 = vpop.permute.xlu0 %3402
    %3404 = vrot.lane.b32.xlu0 %v2756, 112
    %v3405 = vpop.permute.xlu0 %3404
    %3406 = vrot.lane.b32.xlu0 %v2761, 112
    %v3407 = vpop.permute.xlu0 %3406
    %3408 = vrot.lane.b32.xlu0 %v2766, 112
    %v3409 = vpop.permute.xlu0 %3408
    %v3415 = vsel %vm867, %v3394, 0
    %v3418 = vsel %vm867, %v3395, 0
    %v3421 = vsel %vm867, %v3396, 0
    %v3424 = vsel %vm867, %v3397, 0
    %3426 = vmatprep.subr.mxu0 0.0
    %3427 = vmatpush1.msra.mxu0 0.0
    %3428 = vmatprep.subr.mxu0 0.0
    %3429 = vmatpush1.msra.mxu0 0.0
    %3430 = vmatprep.subr.mxu0 0.0
    %3431 = vmatpush1.msra.mxu0 0.0
    %3432 = vmatprep.subr.mxu0 0.0
    %3433 = vmatpush1.msra.mxu0 0.0
    %3434 = vmatprep.subr.mxu0 0.0
    %3435 = vmatpush1.msra.mxu0 0.0
    %3436 = vmatprep.subr.mxu0 0.0
    %3437 = vmatpush1.msra.mxu0 0.0
    %3438 = vmatprep.subr.mxu0 0.0
    %3439 = vmatpush1.msra.mxu0 0.0
    %3440 = vmatprep.subr.mxu0 0.0
    %3441 = vmatpush1.msra.mxu0 0.0
    %3442 = vmatprep.subr.mxu0 0.0
    %3443 = vmatpush1.msra.mxu0 0.0
    %3444 = vmatprep.subr.mxu0 0.0
    %3445 = vmatpush1.msra.mxu0 0.0
    %3446 = vmatprep.subr.mxu0 0.0
    %3447 = vmatpush1.msra.mxu0 0.0
    %3448 = vmatprep.subr.mxu0 0.0
    %3449 = vmatpush1.msra.mxu0 0.0
    %3450 = vmatprep.subr.mxu0 0.0
    %3451 = vmatpush1.msra.mxu0 %v3409
    %3452 = vmatprep.subr.mxu0 0.0
    %3453 = vmatpush1.msra.mxu0 %v3407
    %3454 = vmatprep.subr.mxu0 0.0
    %3455 = vmatpush1.msra.mxu0 %v3405
    %3456 = vmatprep.subr.mxu0 0.0
    %3457 = vmatpush1.msra.mxu0 %v3403
    %3458 = vmatprep.subr.mxu0 0.0
    %3459 = vmatpush2.msra.mxu0 0.0
    %3460 = vmatprep.subr.mxu0 0.0
    %3461 = vmatpush2.msra.mxu0 0.0
    %3462 = vmatprep.subr.mxu0 0.0
    %3463 = vmatpush2.msra.mxu0 0.0
    %3464 = vmatprep.subr.mxu0 0.0
    %3465 = vmatpush2.msra.mxu0 0.0
    %3466 = vmatprep.subr.mxu0 0.0
    %3467 = vmatpush2.msra.mxu0 0.0
    %3468 = vmatprep.subr.mxu0 0.0
    %3469 = vmatpush2.msra.mxu0 0.0
    %3470 = vmatprep.subr.mxu0 0.0
    %3471 = vmatpush2.msra.mxu0 0.0
    %3472 = vmatprep.subr.mxu0 0.0
    %3473 = vmatpush2.msra.mxu0 0.0
    %3474 = vmatprep.subr.mxu0 0.0
    %3475 = vmatpush2.msra.mxu0 0.0
    %3476 = vmatprep.subr.mxu0 0.0
    %3477 = vmatpush2.msra.mxu0 0.0
    %3478 = vmatprep.subr.mxu0 0.0
    %3479 = vmatpush2.msra.mxu0 0.0
    %3480 = vmatprep.subr.mxu0 0.0
    %3481 = vmatpush2.msra.mxu0 0.0
    %3482 = vmatprep.subr.mxu0 0.0
    %3483 = vmatpush2.msra.mxu0 0.0
    %3484 = vmatprep.subr.mxu0 0.0
    %3485 = vmatpush2.msra.mxu0 0.0
    %3486 = vmatprep.subr.mxu0 0.0
    %3487 = vmatpush2.msra.mxu0 0.0
    %3488 = vmatprep.subr.mxu0 0.0
    %3489 = vmatpush2.msra.mxu0 0.0
    %3490 = vmatprep.mubr.f32.mxu0 0.0
    %3491 = vmatmul.mubr.f32.gmra.mxu0 %v3415
    %v3492 = vpop.f32.mrf.mxu0
    %v3493 = vadd.f32 0.0, %v3492
    %v3494 = vpop.f32.mrf.mxu0
    %3495 = vmatprep.mubr.f32.mxu0 0.0
    %3496 = vmatmul.mubr.f32.gmra.mxu0 %v3418
    %v3497 = vpop.f32.mrf.mxu0
    %v3498 = vadd.f32 0.0, %v3497
    %v3499 = vpop.f32.mrf.mxu0
    %3500 = vmatprep.mubr.f32.mxu0 0.0
    %3501 = vmatmul.mubr.f32.gmra.mxu0 %v3421
    %v3502 = vpop.f32.mrf.mxu0
    %v3503 = vadd.f32 0.0, %v3502
    %v3504 = vpop.f32.mrf.mxu0
    %3505 = vmatprep.mubr.f32.mxu0 0.0
    %3506 = vmatmul.mubr.f32.gmra.mxu0 %v3424
    %v3507 = vpop.f32.mrf.mxu0
    %v3508 = vadd.f32 0.0, %v3507
    %v3509 = vpop.f32.mrf.mxu0
    %3510 = vdwg.mxu0
    %3511 = vrot.lane.b32.xlu0 %v2874, 96
    %v3512 = vpop.permute.xlu0 %3511
    %3513 = vrot.lane.b32.xlu0 %v2875, 96
    %v3514 = vpop.permute.xlu0 %3513
    %3515 = vrot.lane.b32.xlu0 %v2876, 96
    %v3516 = vpop.permute.xlu0 %3515
    %3517 = vrot.lane.b32.xlu0 %v2877, 96
    %v3518 = vpop.permute.xlu0 %3517
    %3519 = vrot.lane.b32.xlu0 %v2983, 96
    %v3520 = vpop.permute.xlu0 %3519
    %3521 = vrot.lane.b32.xlu0 %v2984, 96
    %v3522 = vpop.permute.xlu0 %3521
    %3523 = vrot.lane.b32.xlu0 %v2985, 96
    %v3524 = vpop.permute.xlu0 %3523
    %3525 = vrot.lane.b32.xlu0 %v2986, 96
    %v3526 = vpop.permute.xlu0 %3525
    %v3527 = vsel %vm757, %v3512, 0
    %v3529 = vsel %vm757, %v3514, 0
    %v3531 = vsel %vm757, %v3516, 0
    %v3533 = vsel %vm757, %v3518, 0
    %v3535 = vsel %vm757, %v3520, 0
    %v3537 = vsel %vm757, %v3522, 0
    %v3539 = vsel %vm757, %v3524, 0
    %v3541 = vsel %vm757, %v3526, 0
    %3543 = vmatprep.subr.mxu0 0.0
    %3544 = vmatpush1.xpose.msra.mxu0 0.0
    %3545 = vmatprep.subr.mxu0 0.0
    %3546 = vmatpush1.xpose.msra.mxu0 0.0
    %3547 = vmatprep.subr.mxu0 0.0
    %3548 = vmatpush1.xpose.msra.mxu0 0.0
    %3549 = vmatprep.subr.mxu0 0.0
    %3550 = vmatpush1.xpose.msra.mxu0 0.0
    %3551 = vmatprep.subr.mxu0 0.0
    %3552 = vmatpush1.xpose.msra.mxu0 0.0
    %3553 = vmatprep.subr.mxu0 0.0
    %3554 = vmatpush1.xpose.msra.mxu0 0.0
    %3555 = vmatprep.subr.mxu0 0.0
    %3556 = vmatpush1.xpose.msra.mxu0 0.0
    %3557 = vmatprep.subr.mxu0 0.0
    %3558 = vmatpush1.xpose.msra.mxu0 0.0
    %3559 = vmatprep.subr.mxu0 0.0
    %3560 = vmatpush1.xpose.msra.mxu0 0.0
    %3561 = vmatprep.subr.mxu0 0.0
    %3562 = vmatpush1.xpose.msra.mxu0 0.0
    %3563 = vmatprep.subr.mxu0 0.0
    %3564 = vmatpush1.xpose.msra.mxu0 0.0
    %3565 = vmatprep.subr.mxu0 0.0
    %3566 = vmatpush1.xpose.msra.mxu0 0.0
    %3567 = vmatprep.subr.mxu0 0.0
    %3568 = vmatpush1.xpose.msra.mxu0 %v3541
    %3569 = vmatprep.subr.mxu0 0.0
    %3570 = vmatpush1.xpose.msra.mxu0 %v3539
    %3571 = vmatprep.subr.mxu0 0.0
    %3572 = vmatpush1.xpose.msra.mxu0 %v3537
    %3573 = vmatprep.subr.mxu0 0.0
    %3574 = vmatpush1.xpose.msra.mxu0 %v3535
    %3575 = vmatprep.subr.mxu0 0.0
    %3576 = vmatpush2.xpose.msra.mxu0 0.0
    %3577 = vmatprep.subr.mxu0 0.0
    %3578 = vmatpush2.xpose.msra.mxu0 0.0
    %3579 = vmatprep.subr.mxu0 0.0
    %3580 = vmatpush2.xpose.msra.mxu0 0.0
    %3581 = vmatprep.subr.mxu0 0.0
    %3582 = vmatpush2.xpose.msra.mxu0 0.0
    %3583 = vmatprep.subr.mxu0 0.0
    %3584 = vmatpush2.xpose.msra.mxu0 0.0
    %3585 = vmatprep.subr.mxu0 0.0
    %3586 = vmatpush2.xpose.msra.mxu0 0.0
    %3587 = vmatprep.subr.mxu0 0.0
    %3588 = vmatpush2.xpose.msra.mxu0 0.0
    %3589 = vmatprep.subr.mxu0 0.0
    %3590 = vmatpush2.xpose.msra.mxu0 0.0
    %3591 = vmatprep.subr.mxu0 0.0
    %3592 = vmatpush2.xpose.msra.mxu0 0.0
    %3593 = vmatprep.subr.mxu0 0.0
    %3594 = vmatpush2.xpose.msra.mxu0 0.0
    %3595 = vmatprep.subr.mxu0 0.0
    %3596 = vmatpush2.xpose.msra.mxu0 0.0
    %3597 = vmatprep.subr.mxu0 0.0
    %3598 = vmatpush2.xpose.msra.mxu0 0.0
    %3599 = vmatprep.subr.mxu0 0.0
    %3600 = vmatpush2.xpose.msra.mxu0 0.0
    %3601 = vmatprep.subr.mxu0 0.0
    %3602 = vmatpush2.xpose.msra.mxu0 0.0
    %3603 = vmatprep.subr.mxu0 0.0
    %3604 = vmatpush2.xpose.msra.mxu0 0.0
    %3605 = vmatprep.subr.mxu0 0.0
    %3606 = vmatpush2.xpose.msra.mxu0 0.0
    %3607 = vmatprep.mubr.f32.mxu0 0.0
    %3608 = vmatmul.mubr.f32.gmra.mxu0 %v3527
    %v3609 = vpop.f32.mrf.mxu0
    %v3610 = vadd.f32 %v183, %v3609
    %v3611 = vpop.f32.mrf.mxu0
    %3612 = vmatprep.mubr.f32.mxu0 0.0
    %3613 = vmatmul.mubr.f32.gmra.mxu0 %v3529
    %v3614 = vpop.f32.mrf.mxu0
    %v3615 = vadd.f32 %v184, %v3614
    %v3616 = vpop.f32.mrf.mxu0
    %3617 = vmatprep.mubr.f32.mxu0 0.0
    %3618 = vmatmul.mubr.f32.gmra.mxu0 %v3531
    %v3619 = vpop.f32.mrf.mxu0
    %v3620 = vadd.f32 %v185, %v3619
    %v3621 = vpop.f32.mrf.mxu0
    %3622 = vmatprep.mubr.f32.mxu0 0.0
    %3623 = vmatmul.mubr.f32.gmra.mxu0 %v3533
    %v3624 = vpop.f32.mrf.mxu0
    %v3625 = vadd.f32 %v186, %v3624
    %v3626 = vpop.f32.mrf.mxu0
    %3627 = vdwg.mxu0
    %v3628 = vsel %vm867, %v3610, -inf
    %3629 = vmax.xlane.f32.xlu0 %v3628
    %v3630 = vpop.xlane.xlu0 %3629
    %v3631 = vsel %vm867, %v3615, -inf
    %3632 = vmax.xlane.f32.xlu0 %v3631
    %v3633 = vpop.xlane.xlu0 %3632
    %v3634 = vsel %vm867, %v3620, -inf
    %3635 = vmax.xlane.f32.xlu0 %v3634
    %v3636 = vpop.xlane.xlu0 %3635
    %v3637 = vsel %vm867, %v3625, -inf
    %3638 = vmax.xlane.f32.xlu0 %v3637
    %v3639 = vpop.xlane.xlu0 %3638
    %v3640 = vsub.f32 %v3610, %v3630
    %v3641 = vsub.f32 %v3615, %v3633
    %v3642 = vsub.f32 %v3620, %v3636
    %v3643 = vsub.f32 %v3625, %v3639
    %v3644 = vmul.f32 %v3640, 1.442695
    %v3645 = vpow.pop %v3644
    %v3646 = vmul.f32 %v3641, 1.442695
    %v3647 = vpow.pop %v3646
    %v3648 = vmul.f32 %v3642, 1.442695
    %v3649 = vpow.pop %v3648
    %v3650 = vmul.f32 %v3643, 1.442695
    %v3651 = vpow.pop %v3650
    %v3652 = vsel %vm867, %v3645, 0.0
    %3653 = vadd.xlane.f32.xlu0 %v3652
    %v3654 = vpop.xlane.xlu0 %3653
    %v3655 = vsel %vm867, %v3647, 0.0
    %3656 = vadd.xlane.f32.xlu0 %v3655
    %v3657 = vpop.xlane.xlu0 %3656
    %v3658 = vsel %vm867, %v3649, 0.0
    %3659 = vadd.xlane.f32.xlu0 %v3658
    %v3660 = vpop.xlane.xlu0 %3659
    %v3661 = vsel %vm867, %v3651, 0.0
    %3662 = vadd.xlane.f32.xlu0 %v3661
    %v3663 = vpop.xlane.xlu0 %3662
    %v3664 = vrcp.pop %v3654
    %v3665 = vrcp.pop %v3657
    %v3666 = vrcp.pop %v3660
    %v3667 = vrcp.pop %v3663
    %v3668 = vmul.f32 %v3645, %v3664
    %v3669 = vmul.f32 %v3647, %v3665
    %v3670 = vmul.f32 %v3649, %v3666
    %v3671 = vmul.f32 %v3651, %v3667
    %3672 = vrot.lane.b32.xlu0 %v2751, 96
    %v3673 = vpop.permute.xlu0 %3672
    %3674 = vrot.lane.b32.xlu0 %v2756, 96
    %v3675 = vpop.permute.xlu0 %3674
    %3676 = vrot.lane.b32.xlu0 %v2761, 96
    %v3677 = vpop.permute.xlu0 %3676
    %3678 = vrot.lane.b32.xlu0 %v2766, 96
    %v3679 = vpop.permute.xlu0 %3678
    %v3685 = vsel %vm867, %v3668, 0
    %v3688 = vsel %vm867, %v3669, 0
    %v3691 = vsel %vm867, %v3670, 0
    %v3694 = vsel %vm867, %v3671, 0
    %3696 = vmatprep.subr.mxu0 0.0
    %3697 = vmatpush1.msra.mxu0 0.0
    %3698 = vmatprep.subr.mxu0 0.0
    %3699 = vmatpush1.msra.mxu0 0.0
    %3700 = vmatprep.subr.mxu0 0.0
    %3701 = vmatpush1.msra.mxu0 0.0
    %3702 = vmatprep.subr.mxu0 0.0
    %3703 = vmatpush1.msra.mxu0 0.0
    %3704 = vmatprep.subr.mxu0 0.0
    %3705 = vmatpush1.msra.mxu0 0.0
    %3706 = vmatprep.subr.mxu0 0.0
    %3707 = vmatpush1.msra.mxu0 0.0
    %3708 = vmatprep.subr.mxu0 0.0
    %3709 = vmatpush1.msra.mxu0 0.0
    %3710 = vmatprep.subr.mxu0 0.0
    %3711 = vmatpush1.msra.mxu0 0.0
    %3712 = vmatprep.subr.mxu0 0.0
    %3713 = vmatpush1.msra.mxu0 0.0
    %3714 = vmatprep.subr.mxu0 0.0
    %3715 = vmatpush1.msra.mxu0 0.0
    %3716 = vmatprep.subr.mxu0 0.0
    %3717 = vmatpush1.msra.mxu0 0.0
    %3718 = vmatprep.subr.mxu0 0.0
    %3719 = vmatpush1.msra.mxu0 0.0
    %3720 = vmatprep.subr.mxu0 0.0
    %3721 = vmatpush1.msra.mxu0 %v3679
    %3722 = vmatprep.subr.mxu0 0.0
    %3723 = vmatpush1.msra.mxu0 %v3677
    %3724 = vmatprep.subr.mxu0 0.0
    %3725 = vmatpush1.msra.mxu0 %v3675
    %3726 = vmatprep.subr.mxu0 0.0
    %3727 = vmatpush1.msra.mxu0 %v3673
    %3728 = vmatprep.subr.mxu0 0.0
    %3729 = vmatpush2.msra.mxu0 0.0
    %3730 = vmatprep.subr.mxu0 0.0
    %3731 = vmatpush2.msra.mxu0 0.0
    %3732 = vmatprep.subr.mxu0 0.0
    %3733 = vmatpush2.msra.mxu0 0.0
    %3734 = vmatprep.subr.mxu0 0.0
    %3735 = vmatpush2.msra.mxu0 0.0
    %3736 = vmatprep.subr.mxu0 0.0
    %3737 = vmatpush2.msra.mxu0 0.0
    %3738 = vmatprep.subr.mxu0 0.0
    %3739 = vmatpush2.msra.mxu0 0.0
    %3740 = vmatprep.subr.mxu0 0.0
    %3741 = vmatpush2.msra.mxu0 0.0
    %3742 = vmatprep.subr.mxu0 0.0
    %3743 = vmatpush2.msra.mxu0 0.0
    %3744 = vmatprep.subr.mxu0 0.0
    %3745 = vmatpush2.msra.mxu0 0.0
    %3746 = vmatprep.subr.mxu0 0.0
    %3747 = vmatpush2.msra.mxu0 0.0
    %3748 = vmatprep.subr.mxu0 0.0
    %3749 = vmatpush2.msra.mxu0 0.0
    %3750 = vmatprep.subr.mxu0 0.0
    %3751 = vmatpush2.msra.mxu0 0.0
    %3752 = vmatprep.subr.mxu0 0.0
    %3753 = vmatpush2.msra.mxu0 0.0
    %3754 = vmatprep.subr.mxu0 0.0
    %3755 = vmatpush2.msra.mxu0 0.0
    %3756 = vmatprep.subr.mxu0 0.0
    %3757 = vmatpush2.msra.mxu0 0.0
    %3758 = vmatprep.subr.mxu0 0.0
    %3759 = vmatpush2.msra.mxu0 0.0
    %3760 = vmatprep.mubr.f32.mxu0 0.0
    %3761 = vmatmul.mubr.f32.gmra.mxu0 %v3685
    %v3762 = vpop.f32.mrf.mxu0
    %v3763 = vadd.f32 0.0, %v3762
    %v3764 = vpop.f32.mrf.mxu0
    %3765 = vmatprep.mubr.f32.mxu0 0.0
    %3766 = vmatmul.mubr.f32.gmra.mxu0 %v3688
    %v3767 = vpop.f32.mrf.mxu0
    %v3768 = vadd.f32 0.0, %v3767
    %v3769 = vpop.f32.mrf.mxu0
    %3770 = vmatprep.mubr.f32.mxu0 0.0
    %3771 = vmatmul.mubr.f32.gmra.mxu0 %v3691
    %v3772 = vpop.f32.mrf.mxu0
    %v3773 = vadd.f32 0.0, %v3772
    %v3774 = vpop.f32.mrf.mxu0
    %3775 = vmatprep.mubr.f32.mxu0 0.0
    %3776 = vmatmul.mubr.f32.gmra.mxu0 %v3694
    %v3777 = vpop.f32.mrf.mxu0
    %v3778 = vadd.f32 0.0, %v3777
    %v3779 = vpop.f32.mrf.mxu0
    %3780 = vdwg.mxu0
    %3781 = vrot.lane.b32.xlu0 %v2874, 80
    %v3782 = vpop.permute.xlu0 %3781
    %3783 = vrot.lane.b32.xlu0 %v2875, 80
    %v3784 = vpop.permute.xlu0 %3783
    %3785 = vrot.lane.b32.xlu0 %v2876, 80
    %v3786 = vpop.permute.xlu0 %3785
    %3787 = vrot.lane.b32.xlu0 %v2877, 80
    %v3788 = vpop.permute.xlu0 %3787
    %3789 = vrot.lane.b32.xlu0 %v2983, 80
    %v3790 = vpop.permute.xlu0 %3789
    %3791 = vrot.lane.b32.xlu0 %v2984, 80
    %v3792 = vpop.permute.xlu0 %3791
    %3793 = vrot.lane.b32.xlu0 %v2985, 80
    %v3794 = vpop.permute.xlu0 %3793
    %3795 = vrot.lane.b32.xlu0 %v2986, 80
    %v3796 = vpop.permute.xlu0 %3795
    %v3797 = vsel %vm757, %v3782, 0
    %v3799 = vsel %vm757, %v3784, 0
    %v3801 = vsel %vm757, %v3786, 0
    %v3803 = vsel %vm757, %v3788, 0
    %v3805 = vsel %vm757, %v3790, 0
    %v3807 = vsel %vm757, %v3792, 0
    %v3809 = vsel %vm757, %v3794, 0
    %v3811 = vsel %vm757, %v3796, 0
    %3813 = vmatprep.subr.mxu0 0.0
    %3814 = vmatpush1.xpose.msra.mxu0 0.0
    %3815 = vmatprep.subr.mxu0 0.0
    %3816 = vmatpush1.xpose.msra.mxu0 0.0
    %3817 = vmatprep.subr.mxu0 0.0
    %3818 = vmatpush1.xpose.msra.mxu0 0.0
    %3819 = vmatprep.subr.mxu0 0.0
    %3820 = vmatpush1.xpose.msra.mxu0 0.0
    %3821 = vmatprep.subr.mxu0 0.0
    %3822 = vmatpush1.xpose.msra.mxu0 0.0
    %3823 = vmatprep.subr.mxu0 0.0
    %3824 = vmatpush1.xpose.msra.mxu0 0.0
    %3825 = vmatprep.subr.mxu0 0.0
    %3826 = vmatpush1.xpose.msra.mxu0 0.0
    %3827 = vmatprep.subr.mxu0 0.0
    %3828 = vmatpush1.xpose.msra.mxu0 0.0
    %3829 = vmatprep.subr.mxu0 0.0
    %3830 = vmatpush1.xpose.msra.mxu0 0.0
    %3831 = vmatprep.subr.mxu0 0.0
    %3832 = vmatpush1.xpose.msra.mxu0 0.0
    %3833 = vmatprep.subr.mxu0 0.0
    %3834 = vmatpush1.xpose.msra.mxu0 0.0
    %3835 = vmatprep.subr.mxu0 0.0
    %3836 = vmatpush1.xpose.msra.mxu0 0.0
    %3837 = vmatprep.subr.mxu0 0.0
    %3838 = vmatpush1.xpose.msra.mxu0 %v3811
    %3839 = vmatprep.subr.mxu0 0.0
    %3840 = vmatpush1.xpose.msra.mxu0 %v3809
    %3841 = vmatprep.subr.mxu0 0.0
    %3842 = vmatpush1.xpose.msra.mxu0 %v3807
    %3843 = vmatprep.subr.mxu0 0.0
    %3844 = vmatpush1.xpose.msra.mxu0 %v3805
    %3845 = vmatprep.subr.mxu0 0.0
    %3846 = vmatpush2.xpose.msra.mxu0 0.0
    %3847 = vmatprep.subr.mxu0 0.0
    %3848 = vmatpush2.xpose.msra.mxu0 0.0
    %3849 = vmatprep.subr.mxu0 0.0
    %3850 = vmatpush2.xpose.msra.mxu0 0.0
    %3851 = vmatprep.subr.mxu0 0.0
    %3852 = vmatpush2.xpose.msra.mxu0 0.0
    %3853 = vmatprep.subr.mxu0 0.0
    %3854 = vmatpush2.xpose.msra.mxu0 0.0
    %3855 = vmatprep.subr.mxu0 0.0
    %3856 = vmatpush2.xpose.msra.mxu0 0.0
    %3857 = vmatprep.subr.mxu0 0.0
    %3858 = vmatpush2.xpose.msra.mxu0 0.0
    %3859 = vmatprep.subr.mxu0 0.0
    %3860 = vmatpush2.xpose.msra.mxu0 0.0
    %3861 = vmatprep.subr.mxu0 0.0
    %3862 = vmatpush2.xpose.msra.mxu0 0.0
    %3863 = vmatprep.subr.mxu0 0.0
    %3864 = vmatpush2.xpose.msra.mxu0 0.0
    %3865 = vmatprep.subr.mxu0 0.0
    %3866 = vmatpush2.xpose.msra.mxu0 0.0
    %3867 = vmatprep.subr.mxu0 0.0
    %3868 = vmatpush2.xpose.msra.mxu0 0.0
    %3869 = vmatprep.subr.mxu0 0.0
    %3870 = vmatpush2.xpose.msra.mxu0 0.0
    %3871 = vmatprep.subr.mxu0 0.0
    %3872 = vmatpush2.xpose.msra.mxu0 0.0
    %3873 = vmatprep.subr.mxu0 0.0
    %3874 = vmatpush2.xpose.msra.mxu0 0.0
    %3875 = vmatprep.subr.mxu0 0.0
    %3876 = vmatpush2.xpose.msra.mxu0 0.0
    %3877 = vmatprep.mubr.f32.mxu0 0.0
    %3878 = vmatmul.mubr.f32.gmra.mxu0 %v3797
    %v3879 = vpop.f32.mrf.mxu0
    %v3880 = vadd.f32 %v183, %v3879
    %v3881 = vpop.f32.mrf.mxu0
    %3882 = vmatprep.mubr.f32.mxu0 0.0
    %3883 = vmatmul.mubr.f32.gmra.mxu0 %v3799
    %v3884 = vpop.f32.mrf.mxu0
    %v3885 = vadd.f32 %v184, %v3884
    %v3886 = vpop.f32.mrf.mxu0
    %3887 = vmatprep.mubr.f32.mxu0 0.0
    %3888 = vmatmul.mubr.f32.gmra.mxu0 %v3801
    %v3889 = vpop.f32.mrf.mxu0
    %v3890 = vadd.f32 %v185, %v3889
    %v3891 = vpop.f32.mrf.mxu0
    %3892 = vmatprep.mubr.f32.mxu0 0.0
    %3893 = vmatmul.mubr.f32.gmra.mxu0 %v3803
    %v3894 = vpop.f32.mrf.mxu0
    %v3895 = vadd.f32 %v186, %v3894
    %v3896 = vpop.f32.mrf.mxu0
    %3897 = vdwg.mxu0
    %v3898 = vsel %vm867, %v3880, -inf
    %3899 = vmax.xlane.f32.xlu0 %v3898
    %v3900 = vpop.xlane.xlu0 %3899
    %v3901 = vsel %vm867, %v3885, -inf
    %3902 = vmax.xlane.f32.xlu0 %v3901
    %v3903 = vpop.xlane.xlu0 %3902
    %v3904 = vsel %vm867, %v3890, -inf
    %3905 = vmax.xlane.f32.xlu0 %v3904
    %v3906 = vpop.xlane.xlu0 %3905
    %v3907 = vsel %vm867, %v3895, -inf
    %3908 = vmax.xlane.f32.xlu0 %v3907
    %v3909 = vpop.xlane.xlu0 %3908
    %v3910 = vsub.f32 %v3880, %v3900
    %v3911 = vsub.f32 %v3885, %v3903
    %v3912 = vsub.f32 %v3890, %v3906
    %v3913 = vsub.f32 %v3895, %v3909
    %v3914 = vmul.f32 %v3910, 1.442695
    %v3915 = vpow.pop %v3914
    %v3916 = vmul.f32 %v3911, 1.442695
    %v3917 = vpow.pop %v3916
    %v3918 = vmul.f32 %v3912, 1.442695
    %v3919 = vpow.pop %v3918
    %v3920 = vmul.f32 %v3913, 1.442695
    %v3921 = vpow.pop %v3920
    %v3922 = vsel %vm867, %v3915, 0.0
    %3923 = vadd.xlane.f32.xlu0 %v3922
    %v3924 = vpop.xlane.xlu0 %3923
    %v3925 = vsel %vm867, %v3917, 0.0
    %3926 = vadd.xlane.f32.xlu0 %v3925
    %v3927 = vpop.xlane.xlu0 %3926
    %v3928 = vsel %vm867, %v3919, 0.0
    %3929 = vadd.xlane.f32.xlu0 %v3928
    %v3930 = vpop.xlane.xlu0 %3929
    %v3931 = vsel %vm867, %v3921, 0.0
    %3932 = vadd.xlane.f32.xlu0 %v3931
    %v3933 = vpop.xlane.xlu0 %3932
    %v3934 = vrcp.pop %v3924
    %v3935 = vrcp.pop %v3927
    %v3936 = vrcp.pop %v3930
    %v3937 = vrcp.pop %v3933
    %v3938 = vmul.f32 %v3915, %v3934
    %v3939 = vmul.f32 %v3917, %v3935
    %v3940 = vmul.f32 %v3919, %v3936
    %v3941 = vmul.f32 %v3921, %v3937
    %3942 = vrot.lane.b32.xlu0 %v2751, 80
    %v3943 = vpop.permute.xlu0 %3942
    %3944 = vrot.lane.b32.xlu0 %v2756, 80
    %v3945 = vpop.permute.xlu0 %3944
    %3946 = vrot.lane.b32.xlu0 %v2761, 80
    %v3947 = vpop.permute.xlu0 %3946
    %3948 = vrot.lane.b32.xlu0 %v2766, 80
    %v3949 = vpop.permute.xlu0 %3948
    %v3955 = vsel %vm867, %v3938, 0
    %v3958 = vsel %vm867, %v3939, 0
    %v3961 = vsel %vm867, %v3940, 0
    %v3964 = vsel %vm867, %v3941, 0
    %3966 = vmatprep.subr.mxu0 0.0
    %3967 = vmatpush1.msra.mxu0 0.0
    %3968 = vmatprep.subr.mxu0 0.0
    %3969 = vmatpush1.msra.mxu0 0.0
    %3970 = vmatprep.subr.mxu0 0.0
    %3971 = vmatpush1.msra.mxu0 0.0
    %3972 = vmatprep.subr.mxu0 0.0
    %3973 = vmatpush1.msra.mxu0 0.0
    %3974 = vmatprep.subr.mxu0 0.0
    %3975 = vmatpush1.msra.mxu0 0.0
    %3976 = vmatprep.subr.mxu0 0.0
    %3977 = vmatpush1.msra.mxu0 0.0
    %3978 = vmatprep.subr.mxu0 0.0
    %3979 = vmatpush1.msra.mxu0 0.0
    %3980 = vmatprep.subr.mxu0 0.0
    %3981 = vmatpush1.msra.mxu0 0.0
    %3982 = vmatprep.subr.mxu0 0.0
    %3983 = vmatpush1.msra.mxu0 0.0
    %3984 = vmatprep.subr.mxu0 0.0
    %3985 = vmatpush1.msra.mxu0 0.0
    %3986 = vmatprep.subr.mxu0 0.0
    %3987 = vmatpush1.msra.mxu0 0.0
    %3988 = vmatprep.subr.mxu0 0.0
    %3989 = vmatpush1.msra.mxu0 0.0
    %3990 = vmatprep.subr.mxu0 0.0
    %3991 = vmatpush1.msra.mxu0 %v3949
    %3992 = vmatprep.subr.mxu0 0.0
    %3993 = vmatpush1.msra.mxu0 %v3947
    %3994 = vmatprep.subr.mxu0 0.0
    %3995 = vmatpush1.msra.mxu0 %v3945
    %3996 = vmatprep.subr.mxu0 0.0
    %3997 = vmatpush1.msra.mxu0 %v3943
    %3998 = vmatprep.subr.mxu0 0.0
    %3999 = vmatpush2.msra.mxu0 0.0
    %4000 = vmatprep.subr.mxu0 0.0
    %4001 = vmatpush2.msra.mxu0 0.0
    %4002 = vmatprep.subr.mxu0 0.0
    %4003 = vmatpush2.msra.mxu0 0.0
    %4004 = vmatprep.subr.mxu0 0.0
    %4005 = vmatpush2.msra.mxu0 0.0
    %4006 = vmatprep.subr.mxu0 0.0
    %4007 = vmatpush2.msra.mxu0 0.0
    %4008 = vmatprep.subr.mxu0 0.0
    %4009 = vmatpush2.msra.mxu0 0.0
    %4010 = vmatprep.subr.mxu0 0.0
    %4011 = vmatpush2.msra.mxu0 0.0
    %4012 = vmatprep.subr.mxu0 0.0
    %4013 = vmatpush2.msra.mxu0 0.0
    %4014 = vmatprep.subr.mxu0 0.0
    %4015 = vmatpush2.msra.mxu0 0.0
    %4016 = vmatprep.subr.mxu0 0.0
    %4017 = vmatpush2.msra.mxu0 0.0
    %4018 = vmatprep.subr.mxu0 0.0
    %4019 = vmatpush2.msra.mxu0 0.0
    %4020 = vmatprep.subr.mxu0 0.0
    %4021 = vmatpush2.msra.mxu0 0.0
    %4022 = vmatprep.subr.mxu0 0.0
    %4023 = vmatpush2.msra.mxu0 0.0
    %4024 = vmatprep.subr.mxu0 0.0
    %4025 = vmatpush2.msra.mxu0 0.0
    %4026 = vmatprep.subr.mxu0 0.0
    %4027 = vmatpush2.msra.mxu0 0.0
    %4028 = vmatprep.subr.mxu0 0.0
    %4029 = vmatpush2.msra.mxu0 0.0
    %4030 = vmatprep.mubr.f32.mxu0 0.0
    %4031 = vmatmul.mubr.f32.gmra.mxu0 %v3955
    %v4032 = vpop.f32.mrf.mxu0
    %v4033 = vadd.f32 0.0, %v4032
    %v4034 = vpop.f32.mrf.mxu0
    %4035 = vmatprep.mubr.f32.mxu0 0.0
    %4036 = vmatmul.mubr.f32.gmra.mxu0 %v3958
    %v4037 = vpop.f32.mrf.mxu0
    %v4038 = vadd.f32 0.0, %v4037
    %v4039 = vpop.f32.mrf.mxu0
    %4040 = vmatprep.mubr.f32.mxu0 0.0
    %4041 = vmatmul.mubr.f32.gmra.mxu0 %v3961
    %v4042 = vpop.f32.mrf.mxu0
    %v4043 = vadd.f32 0.0, %v4042
    %v4044 = vpop.f32.mrf.mxu0
    %4045 = vmatprep.mubr.f32.mxu0 0.0
    %4046 = vmatmul.mubr.f32.gmra.mxu0 %v3964
    %v4047 = vpop.f32.mrf.mxu0
    %v4048 = vadd.f32 0.0, %v4047
    %v4049 = vpop.f32.mrf.mxu0
    %4050 = vdwg.mxu0
    %4055 = vrot.lane.b32.xlu0 %v3493, 16
    %v4056 = vpop.permute.xlu0 %4055
    %4057 = vrot.lane.b32.xlu0 %v3498, 16
    %v4058 = vpop.permute.xlu0 %4057
    %4059 = vrot.lane.b32.xlu0 %v3503, 16
    %v4060 = vpop.permute.xlu0 %4059
    %4061 = vrot.lane.b32.xlu0 %v3508, 16
    %v4062 = vpop.permute.xlu0 %4061
    %4071 = vrot.lane.b32.xlu0 %v3763, 32
    %v4072 = vpop.permute.xlu0 %4071
    %4073 = vrot.lane.b32.xlu0 %v3768, 32
    %v4074 = vpop.permute.xlu0 %4073
    %4075 = vrot.lane.b32.xlu0 %v3773, 32
    %v4076 = vpop.permute.xlu0 %4075
    %4077 = vrot.lane.b32.xlu0 %v3778, 32
    %v4078 = vpop.permute.xlu0 %4077
    %4087 = vrot.lane.b32.xlu0 %v4033, 48
    %v4088 = vpop.permute.xlu0 %4087
    %4089 = vrot.lane.b32.xlu0 %v4038, 48
    %v4090 = vpop.permute.xlu0 %4089
    %4091 = vrot.lane.b32.xlu0 %v4043, 48
    %v4092 = vpop.permute.xlu0 %4091
    %4093 = vrot.lane.b32.xlu0 %v4048, 48
    %v4094 = vpop.permute.xlu0 %4093
    %v4099 = vsel %vm757, %v3219, %v4056
    %v4100 = vsel %vm757, %v3224, %v4058
    %v4101 = vsel %vm757, %v3229, %v4060
    %v4102 = vsel %vm757, %v3234, %v4062
    %v4103 = vsel %vm867, %v4099, %v4072
    %v4104 = vsel %vm867, %v4100, %v4074
    %v4105 = vsel %vm867, %v4101, %v4076
    %v4106 = vsel %vm867, %v4102, %v4078
    %v4107 = vsel %vm1879, %v4103, %v4088
    %v4108 = vsel %vm1879, %v4104, %v4090
    %v4109 = vsel %vm1879, %v4105, %v4092
    %v4110 = vsel %vm1879, %v4106, %v4094
    %s4111 = scalar_lea.vmem [#allocation14], 64
    %v4112 = vld [vmem:[%s4111] sm:$0xff]
    %v4113 = vld [vmem:[%s4111 + $0x8] sm:$0xff]
    %v4114 = vld [vmem:[%s4111 + $0x10] sm:$0xff]
    %v4115 = vld [vmem:[%s4111 + $0x18] sm:$0xff]
    %v4116 = vld [vmem:[%s4111 + $0x20] sm:$0xff]
    %v4117 = vld [vmem:[%s4111 + $0x28] sm:$0xff]
    %v4118 = vld [vmem:[%s4111 + $0x30] sm:$0xff]
    %v4119 = vld [vmem:[%s4111 + $0x38] sm:$0xff]
    %v4121 = vsel %vm208, %v4107, 0
    %v4124 = vsel %vm208, %v4108, 0
    %v4127 = vsel %vm208, %v4109, 0
    %v4130 = vsel %vm208, %v4110, 0
    %4132 = vmatprep.subr.mxu0 0.0
    %4133 = vmatpush1.msra.mxu0 0.0
    %4134 = vmatprep.subr.mxu0 0.0
    %4135 = vmatpush1.msra.mxu0 0.0
    %4136 = vmatprep.subr.mxu0 0.0
    %4137 = vmatpush1.msra.mxu0 0.0
    %4138 = vmatprep.subr.mxu0 0.0
    %4139 = vmatpush1.msra.mxu0 0.0
    %4140 = vmatprep.subr.mxu0 0.0
    %4141 = vmatpush1.msra.mxu0 0.0
    %4142 = vmatprep.subr.mxu0 0.0
    %4143 = vmatpush1.msra.mxu0 0.0
    %4144 = vmatprep.subr.mxu0 0.0
    %4145 = vmatpush1.msra.mxu0 0.0
    %4146 = vmatprep.subr.mxu0 0.0
    %4147 = vmatpush1.msra.mxu0 0.0
    %4148 = vmatprep.subr.mxu0 0.0
    %4149 = vmatpush1.msra.mxu0 %v4119
    %4150 = vmatprep.subr.mxu0 0.0
    %4151 = vmatpush1.msra.mxu0 %v4118
    %4152 = vmatprep.subr.mxu0 0.0
    %4153 = vmatpush1.msra.mxu0 %v4117
    %4154 = vmatprep.subr.mxu0 0.0
    %4155 = vmatpush1.msra.mxu0 %v4116
    %4156 = vmatprep.subr.mxu0 0.0
    %4157 = vmatpush1.msra.mxu0 %v4115
    %4158 = vmatprep.subr.mxu0 0.0
    %4159 = vmatpush1.msra.mxu0 %v4114
    %4160 = vmatprep.subr.mxu0 0.0
    %4161 = vmatpush1.msra.mxu0 %v4113
    %4162 = vmatprep.subr.mxu0 0.0
    %4163 = vmatpush1.msra.mxu0 %v4112
    %4164 = vmatprep.subr.mxu0 0.0
    %4165 = vmatpush2.msra.mxu0 0.0
    %4166 = vmatprep.subr.mxu0 0.0
    %4167 = vmatpush2.msra.mxu0 0.0
    %4168 = vmatprep.subr.mxu0 0.0
    %4169 = vmatpush2.msra.mxu0 0.0
    %4170 = vmatprep.subr.mxu0 0.0
    %4171 = vmatpush2.msra.mxu0 0.0
    %4172 = vmatprep.subr.mxu0 0.0
    %4173 = vmatpush2.msra.mxu0 0.0
    %4174 = vmatprep.subr.mxu0 0.0
    %4175 = vmatpush2.msra.mxu0 0.0
    %4176 = vmatprep.subr.mxu0 0.0
    %4177 = vmatpush2.msra.mxu0 0.0
    %4178 = vmatprep.subr.mxu0 0.0
    %4179 = vmatpush2.msra.mxu0 0.0
    %4180 = vmatprep.subr.mxu0 0.0
    %4181 = vmatpush2.msra.mxu0 0.0
    %4182 = vmatprep.subr.mxu0 0.0
    %4183 = vmatpush2.msra.mxu0 0.0
    %4184 = vmatprep.subr.mxu0 0.0
    %4185 = vmatpush2.msra.mxu0 0.0
    %4186 = vmatprep.subr.mxu0 0.0
    %4187 = vmatpush2.msra.mxu0 0.0
    %4188 = vmatprep.subr.mxu0 0.0
    %4189 = vmatpush2.msra.mxu0 0.0
    %4190 = vmatprep.subr.mxu0 0.0
    %4191 = vmatpush2.msra.mxu0 0.0
    %4192 = vmatprep.subr.mxu0 0.0
    %4193 = vmatpush2.msra.mxu0 0.0
    %4194 = vmatprep.subr.mxu0 0.0
    %4195 = vmatpush2.msra.mxu0 0.0
    %4196 = vmatprep.mubr.f32.mxu0 0.0
    %4197 = vmatmul.mubr.f32.gmra.mxu0 %v4121
    %v4198 = vpop.f32.mrf.mxu0
    %v4199 = vadd.f32 0.0, %v4198
    %v4200 = vpop.f32.mrf.mxu0
    %4201 = vmatprep.mubr.f32.mxu0 0.0
    %4202 = vmatmul.mubr.f32.gmra.mxu0 %v4124
    %v4203 = vpop.f32.mrf.mxu0
    %v4204 = vadd.f32 0.0, %v4203
    %v4205 = vpop.f32.mrf.mxu0
    %4206 = vmatprep.mubr.f32.mxu0 0.0
    %4207 = vmatmul.mubr.f32.gmra.mxu0 %v4127
    %v4208 = vpop.f32.mrf.mxu0
    %v4209 = vadd.f32 0.0, %v4208
    %v4210 = vpop.f32.mrf.mxu0
    %4211 = vmatprep.mubr.f32.mxu0 0.0
    %4212 = vmatmul.mubr.f32.gmra.mxu0 %v4130
    %v4213 = vpop.f32.mrf.mxu0
    %v4214 = vadd.f32 0.0, %v4213
    %v4215 = vpop.f32.mrf.mxu0
    %4216 = vdwg.mxu0
    %v4217 = vadd.f32 %v2427, %v4199
    %v4218 = vadd.f32 %v2428, %v4204
    %v4219 = vadd.f32 %v2429, %v4209
    %v4220 = vadd.f32 %v2430, %v4214
    %s4221 = scalar_lea.vmem %s10, 1
    %v4222 = vld [vmem:[%s4221] sm:$0x1]
    %v4223 = vmul.f32 %v4217, %v4217
    %v4224 = vmul.f32 %v4218, %v4218
    %v4225 = vmul.f32 %v4219, %v4219
    %v4226 = vmul.f32 %v4220, %v4220
    %v4227 = vsel %vm208, %v4223, 0.0
    %4228 = vadd.xlane.f32.xlu0 %v4227
    %v4229 = vpop.xlane.xlu0 %4228
    %v4230 = vsel %vm208, %v4224, 0.0
    %4231 = vadd.xlane.f32.xlu0 %v4230
    %v4232 = vpop.xlane.xlu0 %4231
    %v4233 = vsel %vm208, %v4225, 0.0
    %4234 = vadd.xlane.f32.xlu0 %v4233
    %v4235 = vpop.xlane.xlu0 %4234
    %v4236 = vsel %vm208, %v4226, 0.0
    %4237 = vadd.xlane.f32.xlu0 %v4236
    %v4238 = vpop.xlane.xlu0 %4237
    %v4239 = vmul.f32 %v4229, %v221
    %v4240 = vmul.f32 %v4232, %v221
    %v4241 = vmul.f32 %v4235, %v221
    %v4242 = vmul.f32 %v4238, %v221
    %v4243 = vadd.f32 %v4239, 1e-05
    %v4244 = vadd.f32 %v4240, 1e-05
    %v4245 = vadd.f32 %v4241, 1e-05
    %v4246 = vadd.f32 %v4242, 1e-05
    %v4247 = vrsqrt.pop %v4243
    %v4248 = vrsqrt.pop %v4244
    %v4249 = vrsqrt.pop %v4245
    %v4250 = vrsqrt.pop %v4246
    %v4251 = vmul.f32 %v4217, %v4247
    %v4252 = vmul.f32 %v4218, %v4248
    %v4253 = vmul.f32 %v4219, %v4249
    %v4254 = vmul.f32 %v4220, %v4250
    %v4256 = vlaneseq
    %v4257 = vshrl.u32 %v4256, 7
    %v4258 = vsub.s32 0, %v4257
    %v4259 = vrot.slane %v4222, %v4258
    %v4261 = vmul.f32 %v4251, %v4259
    %v4262 = vmul.f32 %v4252, %v4259
    %v4263 = vmul.f32 %v4253, %v4259
    %v4264 = vmul.f32 %v4254, %v4259
    %s4265 = scalar_lea.vmem %s11, 128
    %v4266 = vld [vmem:[%s4265] sm:$0xff]
    %v4267 = vld [vmem:[%s4265 + $0x8] sm:$0xff]
    %v4268 = vld [vmem:[%s4265 + $0x10] sm:$0xff]
    %v4269 = vld [vmem:[%s4265 + $0x18] sm:$0xff]
    %v4270 = vld [vmem:[%s4265 + $0x20] sm:$0xff]
    %v4271 = vld [vmem:[%s4265 + $0x28] sm:$0xff]
    %v4272 = vld [vmem:[%s4265 + $0x30] sm:$0xff]
    %v4273 = vld [vmem:[%s4265 + $0x38] sm:$0xff]
    %v4274 = vld [vmem:[%s4265 + $0x40] sm:$0xff]
    %v4275 = vld [vmem:[%s4265 + $0x48] sm:$0xff]
    %v4276 = vld [vmem:[%s4265 + $0x50] sm:$0xff]
    %v4277 = vld [vmem:[%s4265 + $0x58] sm:$0xff]
    %v4278 = vld [vmem:[%s4265 + $0x60] sm:$0xff]
    %v4279 = vld [vmem:[%s4265 + $0x68] sm:$0xff]
    %v4280 = vld [vmem:[%s4265 + $0x70] sm:$0xff]
    %v4281 = vld [vmem:[%s4265 + $0x78] sm:$0xff]
    %v4283 = vsel %vm208, %v4261, 0
    %v4286 = vsel %vm208, %v4262, 0
    %v4289 = vsel %vm208, %v4263, 0
    %v4292 = vsel %vm208, %v4264, 0
    %4294 = vmatprep.subr.mxu0 0.0
    %4295 = vmatpush1.msra.mxu0 0.0
    %4296 = vmatprep.subr.mxu0 0.0
    %4297 = vmatpush1.msra.mxu0 0.0
    %4298 = vmatprep.subr.mxu0 0.0
    %4299 = vmatpush1.msra.mxu0 0.0
    %4300 = vmatprep.subr.mxu0 0.0
    %4301 = vmatpush1.msra.mxu0 0.0
    %4302 = vmatprep.subr.mxu0 0.0
    %4303 = vmatpush1.msra.mxu0 0.0
    %4304 = vmatprep.subr.mxu0 0.0
    %4305 = vmatpush1.msra.mxu0 0.0
    %4306 = vmatprep.subr.mxu0 0.0
    %4307 = vmatpush1.msra.mxu0 0.0
    %4308 = vmatprep.subr.mxu0 0.0
    %4309 = vmatpush1.msra.mxu0 0.0
    %4310 = vmatprep.subr.mxu0 %v4281
    %4311 = vmatpush1.msra.mxu0 %v4280
    %4312 = vmatprep.subr.mxu0 %v4279
    %4313 = vmatpush1.msra.mxu0 %v4278
    %4314 = vmatprep.subr.mxu0 %v4277
    %4315 = vmatpush1.msra.mxu0 %v4276
    %4316 = vmatprep.subr.mxu0 %v4275
    %4317 = vmatpush1.msra.mxu0 %v4274
    %4318 = vmatprep.subr.mxu0 %v4273
    %4319 = vmatpush1.msra.mxu0 %v4272
    %4320 = vmatprep.subr.mxu0 %v4271
    %4321 = vmatpush1.msra.mxu0 %v4270
    %4322 = vmatprep.subr.mxu0 %v4269
    %4323 = vmatpush1.msra.mxu0 %v4268
    %4324 = vmatprep.subr.mxu0 %v4267
    %4325 = vmatpush1.msra.mxu0 %v4266
    %4326 = vmatprep.subr.mxu0 0.0
    %4327 = vmatpush2.msra.mxu0 0.0
    %4328 = vmatprep.subr.mxu0 0.0
    %4329 = vmatpush2.msra.mxu0 0.0
    %4330 = vmatprep.subr.mxu0 0.0
    %4331 = vmatpush2.msra.mxu0 0.0
    %4332 = vmatprep.subr.mxu0 0.0
    %4333 = vmatpush2.msra.mxu0 0.0
    %4334 = vmatprep.subr.mxu0 0.0
    %4335 = vmatpush2.msra.mxu0 0.0
    %4336 = vmatprep.subr.mxu0 0.0
    %4337 = vmatpush2.msra.mxu0 0.0
    %4338 = vmatprep.subr.mxu0 0.0
    %4339 = vmatpush2.msra.mxu0 0.0
    %4340 = vmatprep.subr.mxu0 0.0
    %4341 = vmatpush2.msra.mxu0 0.0
    %4342 = vmatprep.subr.mxu0 0.0
    %4343 = vmatpush2.msra.mxu0 0.0
    %4344 = vmatprep.subr.mxu0 0.0
    %4345 = vmatpush2.msra.mxu0 0.0
    %4346 = vmatprep.subr.mxu0 0.0
    %4347 = vmatpush2.msra.mxu0 0.0
    %4348 = vmatprep.subr.mxu0 0.0
    %4349 = vmatpush2.msra.mxu0 0.0
    %4350 = vmatprep.subr.mxu0 0.0
    %4351 = vmatpush2.msra.mxu0 0.0
    %4352 = vmatprep.subr.mxu0 0.0
    %4353 = vmatpush2.msra.mxu0 0.0
    %4354 = vmatprep.subr.mxu0 0.0
    %4355 = vmatpush2.msra.mxu0 0.0
    %4356 = vmatprep.subr.mxu0 0.0
    %4357 = vmatpush2.msra.mxu0 0.0
    %4358 = vmatprep.mubr.f32.mxu0 0.0
    %4359 = vmatmul.mubr.f32.gmra.mxu0 %v4283
    %v4360 = vpop.f32.mrf.mxu0
    %v4361 = vadd.f32 0.0, %v4360
    %v4362 = vpop.f32.mrf.mxu0
    %v4363 = vadd.f32 0.0, %v4362
    %4364 = vmatprep.mubr.f32.mxu0 0.0
    %4365 = vmatmul.mubr.f32.gmra.mxu0 %v4286
    %v4366 = vpop.f32.mrf.mxu0
    %v4367 = vadd.f32 0.0, %v4366
    %v4368 = vpop.f32.mrf.mxu0
    %v4369 = vadd.f32 0.0, %v4368
    %4370 = vmatprep.mubr.f32.mxu0 0.0
    %4371 = vmatmul.mubr.f32.gmra.mxu0 %v4289
    %v4372 = vpop.f32.mrf.mxu0
    %v4373 = vadd.f32 0.0, %v4372
    %v4374 = vpop.f32.mrf.mxu0
    %v4375 = vadd.f32 0.0, %v4374
    %4376 = vmatprep.mubr.f32.mxu0 0.0
    %4377 = vmatmul.mubr.f32.gmra.mxu0 %v4292
    %v4378 = vpop.f32.mrf.mxu0
    %v4379 = vadd.f32 0.0, %v4378
    %v4380 = vpop.f32.mrf.mxu0
    %v4381 = vadd.f32 0.0, %v4380
    %4382 = vdwg.mxu0
    %s4383 = scalar_lea.vmem %s12, 128
    %v4384 = vld [vmem:[%s4383] sm:$0xff]
    %v4385 = vld [vmem:[%s4383 + $0x8] sm:$0xff]
    %v4386 = vld [vmem:[%s4383 + $0x10] sm:$0xff]
    %v4387 = vld [vmem:[%s4383 + $0x18] sm:$0xff]
    %v4388 = vld [vmem:[%s4383 + $0x20] sm:$0xff]
    %v4389 = vld [vmem:[%s4383 + $0x28] sm:$0xff]
    %v4390 = vld [vmem:[%s4383 + $0x30] sm:$0xff]
    %v4391 = vld [vmem:[%s4383 + $0x38] sm:$0xff]
    %v4392 = vld [vmem:[%s4383 + $0x40] sm:$0xff]
    %v4393 = vld [vmem:[%s4383 + $0x48] sm:$0xff]
    %v4394 = vld [vmem:[%s4383 + $0x50] sm:$0xff]
    %v4395 = vld [vmem:[%s4383 + $0x58] sm:$0xff]
    %v4396 = vld [vmem:[%s4383 + $0x60] sm:$0xff]
    %v4397 = vld [vmem:[%s4383 + $0x68] sm:$0xff]
    %v4398 = vld [vmem:[%s4383 + $0x70] sm:$0xff]
    %v4399 = vld [vmem:[%s4383 + $0x78] sm:$0xff]
    %4400 = vmatprep.subr.mxu0 0.0
    %4401 = vmatpush1.msra.mxu0 0.0
    %4402 = vmatprep.subr.mxu0 0.0
    %4403 = vmatpush1.msra.mxu0 0.0
    %4404 = vmatprep.subr.mxu0 0.0
    %4405 = vmatpush1.msra.mxu0 0.0
    %4406 = vmatprep.subr.mxu0 0.0
    %4407 = vmatpush1.msra.mxu0 0.0
    %4408 = vmatprep.subr.mxu0 0.0
    %4409 = vmatpush1.msra.mxu0 0.0
    %4410 = vmatprep.subr.mxu0 0.0
    %4411 = vmatpush1.msra.mxu0 0.0
    %4412 = vmatprep.subr.mxu0 0.0
    %4413 = vmatpush1.msra.mxu0 0.0
    %4414 = vmatprep.subr.mxu0 0.0
    %4415 = vmatpush1.msra.mxu0 0.0
    %4416 = vmatprep.subr.mxu0 %v4399
    %4417 = vmatpush1.msra.mxu0 %v4398
    %4418 = vmatprep.subr.mxu0 %v4397
    %4419 = vmatpush1.msra.mxu0 %v4396
    %4420 = vmatprep.subr.mxu0 %v4395
    %4421 = vmatpush1.msra.mxu0 %v4394
    %4422 = vmatprep.subr.mxu0 %v4393
    %4423 = vmatpush1.msra.mxu0 %v4392
    %4424 = vmatprep.subr.mxu0 %v4391
    %4425 = vmatpush1.msra.mxu0 %v4390
    %4426 = vmatprep.subr.mxu0 %v4389
    %4427 = vmatpush1.msra.mxu0 %v4388
    %4428 = vmatprep.subr.mxu0 %v4387
    %4429 = vmatpush1.msra.mxu0 %v4386
    %4430 = vmatprep.subr.mxu0 %v4385
    %4431 = vmatpush1.msra.mxu0 %v4384
    %4432 = vmatprep.subr.mxu0 0.0
    %4433 = vmatpush2.msra.mxu0 0.0
    %4434 = vmatprep.subr.mxu0 0.0
    %4435 = vmatpush2.msra.mxu0 0.0
    %4436 = vmatprep.subr.mxu0 0.0
    %4437 = vmatpush2.msra.mxu0 0.0
    %4438 = vmatprep.subr.mxu0 0.0
    %4439 = vmatpush2.msra.mxu0 0.0
    %4440 = vmatprep.subr.mxu0 0.0
    %4441 = vmatpush2.msra.mxu0 0.0
    %4442 = vmatprep.subr.mxu0 0.0
    %4443 = vmatpush2.msra.mxu0 0.0
    %4444 = vmatprep.subr.mxu0 0.0
    %4445 = vmatpush2.msra.mxu0 0.0
    %4446 = vmatprep.subr.mxu0 0.0
    %4447 = vmatpush2.msra.mxu0 0.0
    %4448 = vmatprep.subr.mxu0 0.0
    %4449 = vmatpush2.msra.mxu0 0.0
    %4450 = vmatprep.subr.mxu0 0.0
    %4451 = vmatpush2.msra.mxu0 0.0
    %4452 = vmatprep.subr.mxu0 0.0
    %4453 = vmatpush2.msra.mxu0 0.0
    %4454 = vmatprep.subr.mxu0 0.0
    %4455 = vmatpush2.msra.mxu0 0.0
    %4456 = vmatprep.subr.mxu0 0.0
    %4457 = vmatpush2.msra.mxu0 0.0
    %4458 = vmatprep.subr.mxu0 0.0
    %4459 = vmatpush2.msra.mxu0 0.0
    %4460 = vmatprep.subr.mxu0 0.0
    %4461 = vmatpush2.msra.mxu0 0.0
    %4462 = vmatprep.subr.mxu0 0.0
    %4463 = vmatpush2.msra.mxu0 0.0
    %4464 = vmatprep.mubr.f32.mxu0 0.0
    %4465 = vmatmul.mubr.f32.gmra.mxu0 %v4283
    %v4466 = vpop.f32.mrf.mxu0
    %v4467 = vadd.f32 0.0, %v4466
    %v4468 = vpop.f32.mrf.mxu0
    %v4469 = vadd.f32 0.0, %v4468
    %4470 = vmatprep.mubr.f32.mxu0 0.0
    %4471 = vmatmul.mubr.f32.gmra.mxu0 %v4286
    %v4472 = vpop.f32.mrf.mxu0
    %v4473 = vadd.f32 0.0, %v4472
    %v4474 = vpop.f32.mrf.mxu0
    %v4475 = vadd.f32 0.0, %v4474
    %4476 = vmatprep.mubr.f32.mxu0 0.0
    %4477 = vmatmul.mubr.f32.gmra.mxu0 %v4289
    %v4478 = vpop.f32.mrf.mxu0
    %v4479 = vadd.f32 0.0, %v4478
    %v4480 = vpop.f32.mrf.mxu0
    %v4481 = vadd.f32 0.0, %v4480
    %4482 = vmatprep.mubr.f32.mxu0 0.0
    %4483 = vmatmul.mubr.f32.gmra.mxu0 %v4292
    %v4484 = vpop.f32.mrf.mxu0
    %v4485 = vadd.f32 0.0, %v4484
    %v4486 = vpop.f32.mrf.mxu0
    %v4487 = vadd.f32 0.0, %v4486
    %4488 = vdwg.mxu0
    %v4489 = vmul.f32 %v4361, 0.5
    %v4490 = vmul.f32 %v4363, 0.5
    %v4491 = vmul.f32 %v4367, 0.5
    %v4492 = vmul.f32 %v4369, 0.5
    %v4493 = vmul.f32 %v4373, 0.5
    %v4494 = vmul.f32 %v4375, 0.5
    %v4495 = vmul.f32 %v4379, 0.5
    %v4496 = vmul.f32 %v4381, 0.5
    %v4497 = vtanh.pop %v4489
    %v4498 = vtanh.pop %v4490
    %v4499 = vtanh.pop %v4491
    %v4500 = vtanh.pop %v4492
    %v4501 = vtanh.pop %v4493
    %v4502 = vtanh.pop %v4494
    %v4503 = vtanh.pop %v4495
    %v4504 = vtanh.pop %v4496
    %v4505 = vmul.f32 %v4497, 0.5
    %v4506 = vmul.f32 %v4498, 0.5
    %v4507 = vmul.f32 %v4499, 0.5
    %v4508 = vmul.f32 %v4500, 0.5
    %v4509 = vmul.f32 %v4501, 0.5
    %v4510 = vmul.f32 %v4502, 0.5
    %v4511 = vmul.f32 %v4503, 0.5
    %v4512 = vmul.f32 %v4504, 0.5
    %v4513 = vadd.f32 %v4505, 0.5
    %v4514 = vadd.f32 %v4506, 0.5
    %v4515 = vadd.f32 %v4507, 0.5
    %v4516 = vadd.f32 %v4508, 0.5
    %v4517 = vadd.f32 %v4509, 0.5
    %v4518 = vadd.f32 %v4510, 0.5
    %v4519 = vadd.f32 %v4511, 0.5
    %v4520 = vadd.f32 %v4512, 0.5
    %v4521 = vmul.f32 %v4361, %v4513
    %v4522 = vmul.f32 %v4363, %v4514
    %v4523 = vmul.f32 %v4367, %v4515
    %v4524 = vmul.f32 %v4369, %v4516
    %v4525 = vmul.f32 %v4373, %v4517
    %v4526 = vmul.f32 %v4375, %v4518
    %v4527 = vmul.f32 %v4379, %v4519
    %v4528 = vmul.f32 %v4381, %v4520
    %v4529 = vmul.f32 %v4521, %v4467
    %v4530 = vmul.f32 %v4522, %v4469
    %v4531 = vmul.f32 %v4523, %v4473
    %v4532 = vmul.f32 %v4524, %v4475
    %v4533 = vmul.f32 %v4525, %v4479
    %v4534 = vmul.f32 %v4526, %v4481
    %v4535 = vmul.f32 %v4527, %v4485
    %v4536 = vmul.f32 %v4528, %v4487
    %s4537 = scalar_lea.vmem %s13, 192
    %v4538 = vld [vmem:[%s4537] sm:$0xff]
    %v4539 = vld [vmem:[%s4537 + $0x8] sm:$0xff]
    %v4540 = vld [vmem:[%s4537 + $0x10] sm:$0xff]
    %v4541 = vld [vmem:[%s4537 + $0x18] sm:$0xff]
    %v4542 = vld [vmem:[%s4537 + $0x20] sm:$0xff]
    %v4543 = vld [vmem:[%s4537 + $0x28] sm:$0xff]
    %v4544 = vld [vmem:[%s4537 + $0x30] sm:$0xff]
    %v4545 = vld [vmem:[%s4537 + $0x38] sm:$0xff]
    %v4546 = vld [vmem:[%s4537 + $0x40] sm:$0xff]
    %v4547 = vld [vmem:[%s4537 + $0x48] sm:$0xff]
    %v4548 = vld [vmem:[%s4537 + $0x50] sm:$0xff]
    %v4549 = vld [vmem:[%s4537 + $0x58] sm:$0xff]
    %v4550 = vld [vmem:[%s4537 + $0x60] sm:$0xff]
    %v4551 = vld [vmem:[%s4537 + $0x68] sm:$0xff]
    %v4552 = vld [vmem:[%s4537 + $0x70] sm:$0xff]
    %v4553 = vld [vmem:[%s4537 + $0x78] sm:$0xff]
    %v4554 = vld [vmem:[%s4537 + $0x80] sm:$0xff]
    %v4555 = vld [vmem:[%s4537 + $0x88] sm:$0xff]
    %v4556 = vld [vmem:[%s4537 + $0x90] sm:$0xff]
    %v4557 = vld [vmem:[%s4537 + $0x98] sm:$0xff]
    %v4558 = vld [vmem:[%s4537 + $0xa0] sm:$0xff]
    %v4559 = vld [vmem:[%s4537 + $0xa8] sm:$0xff]
    %v4560 = vld [vmem:[%s4537 + $0xb0] sm:$0xff]
    %v4561 = vld [vmem:[%s4537 + $0xb8] sm:$0xff]
    %v4563 = vsel %vm208, %v4530, 0
    %v4566 = vsel %vm208, %v4532, 0
    %v4569 = vsel %vm208, %v4534, 0
    %v4572 = vsel %vm208, %v4536, 0
    %4574 = vmatprep.subr.mxu0 0.0
    %4575 = vmatpush1.msra.mxu0 %v4553
    %4576 = vmatprep.subr.mxu0 0.0
    %4577 = vmatpush1.msra.mxu0 %v4552
    %4578 = vmatprep.subr.mxu0 0.0
    %4579 = vmatpush1.msra.mxu0 %v4551
    %4580 = vmatprep.subr.mxu0 0.0
    %4581 = vmatpush1.msra.mxu0 %v4550
    %4582 = vmatprep.subr.mxu0 0.0
    %4583 = vmatpush1.msra.mxu0 %v4549
    %4584 = vmatprep.subr.mxu0 0.0
    %4585 = vmatpush1.msra.mxu0 %v4548
    %4586 = vmatprep.subr.mxu0 0.0
    %4587 = vmatpush1.msra.mxu0 %v4547
    %4588 = vmatprep.subr.mxu0 0.0
    %4589 = vmatpush1.msra.mxu0 %v4546
    %4590 = vmatprep.subr.mxu0 0.0
    %4591 = vmatpush1.msra.mxu0 %v4545
    %4592 = vmatprep.subr.mxu0 0.0
    %4593 = vmatpush1.msra.mxu0 %v4544
    %4594 = vmatprep.subr.mxu0 0.0
    %4595 = vmatpush1.msra.mxu0 %v4543
    %4596 = vmatprep.subr.mxu0 0.0
    %4597 = vmatpush1.msra.mxu0 %v4542
    %4598 = vmatprep.subr.mxu0 0.0
    %4599 = vmatpush1.msra.mxu0 %v4541
    %4600 = vmatprep.subr.mxu0 0.0
    %4601 = vmatpush1.msra.mxu0 %v4540
    %4602 = vmatprep.subr.mxu0 0.0
    %4603 = vmatpush1.msra.mxu0 %v4539
    %4604 = vmatprep.subr.mxu0 0.0
    %4605 = vmatpush1.msra.mxu0 %v4538
    %4606 = vmatprep.subr.mxu0 0.0
    %4607 = vmatpush2.msra.mxu0 0.0
    %4608 = vmatprep.subr.mxu0 0.0
    %4609 = vmatpush2.msra.mxu0 0.0
    %4610 = vmatprep.subr.mxu0 0.0
    %4611 = vmatpush2.msra.mxu0 0.0
    %4612 = vmatprep.subr.mxu0 0.0
    %4613 = vmatpush2.msra.mxu0 0.0
    %4614 = vmatprep.subr.mxu0 0.0
    %4615 = vmatpush2.msra.mxu0 0.0
    %4616 = vmatprep.subr.mxu0 0.0
    %4617 = vmatpush2.msra.mxu0 0.0
    %4618 = vmatprep.subr.mxu0 0.0
    %4619 = vmatpush2.msra.mxu0 0.0
    %4620 = vmatprep.subr.mxu0 0.0
    %4621 = vmatpush2.msra.mxu0 0.0
    %4622 = vmatprep.subr.mxu0 0.0
    %4623 = vmatpush2.msra.mxu0 %v4561
    %4624 = vmatprep.subr.mxu0 0.0
    %4625 = vmatpush2.msra.mxu0 %v4560
    %4626 = vmatprep.subr.mxu0 0.0
    %4627 = vmatpush2.msra.mxu0 %v4559
    %4628 = vmatprep.subr.mxu0 0.0
    %4629 = vmatpush2.msra.mxu0 %v4558
    %4630 = vmatprep.subr.mxu0 0.0
    %4631 = vmatpush2.msra.mxu0 %v4557
    %4632 = vmatprep.subr.mxu0 0.0
    %4633 = vmatpush2.msra.mxu0 %v4556
    %4634 = vmatprep.subr.mxu0 0.0
    %4635 = vmatpush2.msra.mxu0 %v4555
    %4636 = vmatprep.subr.mxu0 0.0
    %4637 = vmatpush2.msra.mxu0 %v4554
    %4638 = vmatprep.mubr.f32.mxu0 %v4563
    %4639 = vmatmul.mubr.f32.gmra.mxu0 %v4529
    %v4640 = vpop.f32.mrf.mxu0
    %v4641 = vadd.f32 0.0, %v4640
    %v4642 = vpop.f32.mrf.mxu0
    %4643 = vmatprep.mubr.f32.mxu0 %v4566
    %4644 = vmatmul.mubr.f32.gmra.mxu0 %v4531
    %v4645 = vpop.f32.mrf.mxu0
    %v4646 = vadd.f32 0.0, %v4645
    %v4647 = vpop.f32.mrf.mxu0
    %4648 = vmatprep.mubr.f32.mxu0 %v4569
    %4649 = vmatmul.mubr.f32.gmra.mxu0 %v4533
    %v4650 = vpop.f32.mrf.mxu0
    %v4651 = vadd.f32 0.0, %v4650
    %v4652 = vpop.f32.mrf.mxu0
    %4653 = vmatprep.mubr.f32.mxu0 %v4572
    %4654 = vmatmul.mubr.f32.gmra.mxu0 %v4535
    %v4655 = vpop.f32.mrf.mxu0
    %v4656 = vadd.f32 0.0, %v4655
    %v4657 = vpop.f32.mrf.mxu0
    %4658 = vdwg.mxu0
    %v4659 = vadd.f32 %v4217, %v4641
    %v4660 = vadd.f32 %v4218, %v4646
    %v4661 = vadd.f32 %v4219, %v4651
    %v4662 = vadd.f32 %v4220, %v4656
    %v4663 = vld [vmem:[%s14] sm:$0x1]
    %v4664 = vmul.f32 %v4659, %v4659
    %v4665 = vmul.f32 %v4660, %v4660
    %v4666 = vmul.f32 %v4661, %v4661
    %v4667 = vmul.f32 %v4662, %v4662
    %v4668 = vsel %vm208, %v4664, 0.0
    %4669 = vadd.xlane.f32.xlu0 %v4668
    %v4670 = vpop.xlane.xlu0 %4669
    %v4671 = vsel %vm208, %v4665, 0.0
    %4672 = vadd.xlane.f32.xlu0 %v4671
    %v4673 = vpop.xlane.xlu0 %4672
    %v4674 = vsel %vm208, %v4666, 0.0
    %4675 = vadd.xlane.f32.xlu0 %v4674
    %v4676 = vpop.xlane.xlu0 %4675
    %v4677 = vsel %vm208, %v4667, 0.0
    %4678 = vadd.xlane.f32.xlu0 %v4677
    %v4679 = vpop.xlane.xlu0 %4678
    %v4680 = vmul.f32 %v4670, %v221
    %v4681 = vmul.f32 %v4673, %v221
    %v4682 = vmul.f32 %v4676, %v221
    %v4683 = vmul.f32 %v4679, %v221
    %v4684 = vadd.f32 %v4680, 1e-05
    %v4685 = vadd.f32 %v4681, 1e-05
    %v4686 = vadd.f32 %v4682, 1e-05
    %v4687 = vadd.f32 %v4683, 1e-05
    %v4688 = vrsqrt.pop %v4684
    %v4689 = vrsqrt.pop %v4685
    %v4690 = vrsqrt.pop %v4686
    %v4691 = vrsqrt.pop %v4687
    %v4692 = vmul.f32 %v4659, %v4688
    %v4693 = vmul.f32 %v4660, %v4689
    %v4694 = vmul.f32 %v4661, %v4690
    %v4695 = vmul.f32 %v4662, %v4691
    %v4697 = vlaneseq
    %v4698 = vshrl.u32 %v4697, 7
    %v4699 = vsub.s32 0, %v4698
    %v4700 = vrot.slane %v4663, %v4699
    %v4702 = vmul.f32 %v4692, %v4700
    %v4703 = vmul.f32 %v4693, %v4700
    %v4704 = vmul.f32 %v4694, %v4700
    %v4705 = vmul.f32 %v4695, %v4700
    %4706 = vst.msk [vmem:[#allocation17] sm:$0xff] %vm208, %v4702
    %4707 = vst.msk [vmem:[#allocation17 + $0x8] sm:$0xff] %vm208, %v4703
    %4708 = vst.msk [vmem:[#allocation17 + $0x10] sm:$0xff] %vm208, %v4704
    %4709 = vst.msk [vmem:[#allocation17 + $0x18] sm:$0xff] %vm208, %v4705
    %v4711 = vrot.slane %v4703, 7
    %v4714 = vrot.slane %v4705, 6
    %vm4716 = vcmask 1040384
    %v4717 = vsel %vm4716, %v4711, %v4714
    %v4718 = vld [vmem:[#allocation16] sm:$0xff]
    %v4719 = vld [vmem:[#allocation16 + $0x8] sm:$0xff]
    %v4720 = vld [vmem:[#allocation16 + $0x10] sm:$0xff]
    %v4721 = vld [vmem:[#allocation16 + $0x18] sm:$0xff]
    %v4722 = vld [vmem:[#allocation16 + $0x20] sm:$0xff]
    %v4723 = vld [vmem:[#allocation16 + $0x28] sm:$0xff]
    %v4724 = vld [vmem:[#allocation16 + $0x30] sm:$0xff]
    %v4725 = vld [vmem:[#allocation16 + $0x38] sm:$0xff]
    %v4727 = vsel %vm208, %v4717, 0
    %4729 = vmatprep.subr.mxu0 0.0
    %4730 = vmatpush1.msra.mxu0 0.0
    %4731 = vmatprep.subr.mxu0 0.0
    %4732 = vmatpush1.msra.mxu0 0.0
    %4733 = vmatprep.subr.mxu0 0.0
    %4734 = vmatpush1.msra.mxu0 0.0
    %4735 = vmatprep.subr.mxu0 0.0
    %4736 = vmatpush1.msra.mxu0 0.0
    %4737 = vmatprep.subr.mxu0 0.0
    %4738 = vmatpush1.msra.mxu0 0.0
    %4739 = vmatprep.subr.mxu0 0.0
    %4740 = vmatpush1.msra.mxu0 0.0
    %4741 = vmatprep.subr.mxu0 0.0
    %4742 = vmatpush1.msra.mxu0 0.0
    %4743 = vmatprep.subr.mxu0 0.0
    %4744 = vmatpush1.msra.mxu0 0.0
    %4745 = vmatprep.subr.mxu0 0.0
    %4746 = vmatpush1.msra.mxu0 %v4725
    %4747 = vmatprep.subr.mxu0 0.0
    %4748 = vmatpush1.msra.mxu0 %v4724
    %4749 = vmatprep.subr.mxu0 0.0
    %4750 = vmatpush1.msra.mxu0 %v4723
    %4751 = vmatprep.subr.mxu0 0.0
    %4752 = vmatpush1.msra.mxu0 %v4722
    %4753 = vmatprep.subr.mxu0 0.0
    %4754 = vmatpush1.msra.mxu0 %v4721
    %4755 = vmatprep.subr.mxu0 0.0
    %4756 = vmatpush1.msra.mxu0 %v4720
    %4757 = vmatprep.subr.mxu0 0.0
    %4758 = vmatpush1.msra.mxu0 %v4719
    %4759 = vmatprep.subr.mxu0 0.0
    %4760 = vmatpush1.msra.mxu0 %v4718
    %4761 = vmatprep.subr.mxu0 0.0
    %4762 = vmatpush2.msra.mxu0 0.0
    %4763 = vmatprep.subr.mxu0 0.0
    %4764 = vmatpush2.msra.mxu0 0.0
    %4765 = vmatprep.subr.mxu0 0.0
    %4766 = vmatpush2.msra.mxu0 0.0
    %4767 = vmatprep.subr.mxu0 0.0
    %4768 = vmatpush2.msra.mxu0 0.0
    %4769 = vmatprep.subr.mxu0 0.0
    %4770 = vmatpush2.msra.mxu0 0.0
    %4771 = vmatprep.subr.mxu0 0.0
    %4772 = vmatpush2.msra.mxu0 0.0
    %4773 = vmatprep.subr.mxu0 0.0
    %4774 = vmatpush2.msra.mxu0 0.0
    %4775 = vmatprep.subr.mxu0 0.0
    %4776 = vmatpush2.msra.mxu0 0.0
    %4777 = vmatprep.subr.mxu0 0.0
    %4778 = vmatpush2.msra.mxu0 0.0
    %4779 = vmatprep.subr.mxu0 0.0
    %4780 = vmatpush2.msra.mxu0 0.0
    %4781 = vmatprep.subr.mxu0 0.0
    %4782 = vmatpush2.msra.mxu0 0.0
    %4783 = vmatprep.subr.mxu0 0.0
    %4784 = vmatpush2.msra.mxu0 0.0
    %4785 = vmatprep.subr.mxu0 0.0
    %4786 = vmatpush2.msra.mxu0 0.0
    %4787 = vmatprep.subr.mxu0 0.0
    %4788 = vmatpush2.msra.mxu0 0.0
    %4789 = vmatprep.subr.mxu0 0.0
    %4790 = vmatpush2.msra.mxu0 0.0
    %4791 = vmatprep.subr.mxu0 0.0
    %4792 = vmatpush2.msra.mxu0 0.0
    %4793 = vmatprep.mubr.f32.mxu0 0.0
    %4794 = vmatmul.mubr.f32.gmra.mxu0 %v4727
    %v4795 = vpop.f32.mrf.mxu0
    %v4796 = vadd.f32 0.0, %v4795
    %v4797 = vpop.f32.mrf.mxu0
    %4798 = vdwg.mxu0
    %4799 = vst [vmem:[#allocation18] sm:$0x3] %v4796
    // Predicated region
    $region102: #{tpu_custom_call.1} parent=1 // pred_check
      _
    $region103: #{tpu_custom_call.1} parent=1 // pred_check_branch
      %4801 = sbr.rel (0) target = $region105
    $region104: #{tpu_custom_call.1} parent=1 // pred_region
      %s4803 = ssub.s32 512, 512
      %4804 = vsyncadd [#allocation4], %s4803
      %s4805 = sshll.u32 [#allocation17], 4
      %s4806 = int_to_ptr.vmem [resolvable:$true] %s4805
      %4811 = dma.vmem_to_hbm [thread:$0]  %s4806, 512, %s16, [#allocation4], 128, 128, 8
    $region105: #{tpu_custom_call.1} parent=1 // pred_fallthru
      _
    // Predicated region
    $region106: #{tpu_custom_call.1} parent=1 // pred_check
      _
    $region107: #{tpu_custom_call.1} parent=1 // pred_check_branch
      %4813 = sbr.rel (0) target = $region109
    $region108: #{tpu_custom_call.1} parent=1 // pred_region
      %s4815 = ssub.s32 32, 32
      %4816 = vsyncadd [#allocation19], %s4815
      %s4818 = sshll.u32 [#allocation18], 4
      %s4819 = int_to_ptr.vmem [resolvable:$true] %s4818
      %4821 = dma.vmem_to_hbm [thread:$0]  %s4819, 32, %s17, [#allocation19]
    $region109: #{tpu_custom_call.1} parent=1 // pred_fallthru
      _
    // Predicated region
    $region110: #{tpu_custom_call.1} parent=1 // pred_check
      _
    $region111: #{tpu_custom_call.1} parent=1 // pred_check_branch
      %4823 = sbr.rel (0) target = $region113
    $region112: #{tpu_custom_call.1} parent=1 // pred_region
      %4824 = dma.done [#allocation4], 512
    $region113: #{tpu_custom_call.1} parent=1 // pred_fallthru
      _
    // Predicated region
    $region114: #{tpu_custom_call.1} parent=1 // pred_check
      _
    $region115: #{tpu_custom_call.1} parent=1 // pred_check_branch
      %4826 = sbr.rel (0) target = $region117
    $region116: #{tpu_custom_call.1} parent=1 // pred_region
      %4827 = dma.done [#allocation19], 32
    $region117: #{tpu_custom_call.1} parent=1 // pred_fallthru
      _
    %4828 = vsyncpa [#allocation3], 1
    %4829 = vsyncpa [#allocation6], 1
    %4830 = vsyncpa [#allocation9], 1
    %4831 = vsyncpa [#allocation12], 1
    %4832 = vsyncpa [#allocation15], 1
    %4833 = vsyncpa [#allocation4], 1
    %4834 = vsyncpa [#allocation19], 1

</llo_original>
